<compile_context>
chip_gen: v7x
topology: tpu7x:2x2x1
jax: 0.10.0
libtpu: 0.0.40
codegen_flags: <defaults>
</compile_context>

<pallas_src>
import functools
import math

import jax
import jax.numpy as jnp
from jax.experimental import pallas as pl
from jax.experimental.pallas import tpu as pltpu


_VMEM_LIMIT = 48 * 1024 * 1024  # explicit scoped-VMEM budget (fits v7x 64 MiB phys)


# ----------------------------------------------------------------------------- #
# In-kernel helpers (traced inside the kernels)
# ----------------------------------------------------------------------------- #
def _layer_norm(y, gamma, beta, eps=1e-5):
    """Two-pass (centered) LayerNorm on the last axis, f32 math."""
    mean = jnp.mean(y, axis=-1, keepdims=True)
    c = y - mean
    var = jnp.mean(c * c, axis=-1, keepdims=True)
    return c * jax.lax.rsqrt(var + eps) * gamma + beta


def _mha_headsum(qp, kp, vp, wo, bo, num_heads):
    """Multi-head softmax attention with the output projection folded per head.

    qp:(Nq,Ci), kp/vp:(Nk,Ci) f32 (post bias add); wo:(Ci,C) bf16; bo:(1,C) f32.
    The 1/sqrt(d) attention scale is folded into the q projection at init.
    Per-head outputs are accumulated through wo (no lane-sparse scratch stores).
    Returns (Nq, C) f32.
    """
    Ci = wo.shape[0]
    d = Ci // num_heads
    # Cast once after the bias add; all per-head slices reuse the bf16 copies.
    qpb = qp.astype(jnp.bfloat16)
    kpb = kp.astype(jnp.bfloat16)
    vpb = vp.astype(jnp.bfloat16)
    contract_last = (((1,), (1,)), ((), ()))      # q @ k^T without explicit transpose
    acc = None
    for h in range(num_heads):                    # static, small head count
        sl = slice(h * d, (h + 1) * d)
        s = jax.lax.dot_general(qpb[:, sl], kpb[:, sl], contract_last,
                                preferred_element_type=jnp.float32)      # (Nq, Nk)
        m = jnp.max(s, axis=-1, keepdims=True)
        e = jnp.exp(s - m)
        denom = jnp.sum(e, axis=-1, keepdims=True)
        oh = jnp.dot(e.astype(jnp.bfloat16), vpb[:, sl],
                     preferred_element_type=jnp.float32)                 # (Nq, d)
        # Deferred softmax normalization on the small (Nq, d) result (EUP slot).
        oh = oh * pl.reciprocal(denom, approx=True)
        part = jnp.dot(oh.astype(jnp.bfloat16), wo[sl, :],
                       preferred_element_type=jnp.float32)               # (Nq, C)
        acc = part if acc is None else acc + part
    return acc + bo


# ----------------------------------------------------------------------------- #
# Kernels
# ----------------------------------------------------------------------------- #
def fused_query_path_kernel(
        q_ref, qpe_ref, k_ref, kpe_ref,
        wqkv_s_ref, bqkv_s_ref, wo_s_ref, bo_s_ref, g1_ref, be1_ref,
        wqkv_x_ref, bqkv_x_ref, wo_x_ref, bo_x_ref, g2_ref, be2_ref,
        w1_ref, b1_ref, w2_ref, b2_ref, g3_ref, be3_ref,
        out_ref, *, num_heads, skip_first_layer_pe):
    """One batch element: self-attn+LN1 -> cross t2i+LN2 -> MLP+LN3 (all fused)."""
    x = q_ref[0]                       # (Nq, C) bf16 (queries)
    qpe = qpe_ref[0]                   # (Nq, C) bf16
    keys = k_ref[0]                    # (Nk, C) bf16
    kpe = kpe_ref[0]                   # (Nk, C) bf16
    C = x.shape[-1]

    # ---- stage 1: self attention (+ residual) + norm1 ----
    wqkv_s = wqkv_s_ref[...]
    bqkv_s = bqkv_s_ref[...]
    if skip_first_layer_pe:
        # q = k = v = queries -> single (C, 3C) matmul, no residual.
        qkv = jnp.dot(x, wqkv_s, preferred_element_type=jnp.float32) + bqkv_s
        qp, kp, vp = qkv[:, :C], qkv[:, C:2 * C], qkv[:, 2 * C:]
    else:
        xq = x + qpe                   # q and k share the PE-added input
        qk = jnp.dot(xq, wqkv_s[:, :2 * C],
                     preferred_element_type=jnp.float32) + bqkv_s[:, :2 * C]
        qp, kp = qk[:, :C], qk[:, C:]
        vp = jnp.dot(x, wqkv_s[:, 2 * C:],
                     preferred_element_type=jnp.float32) + bqkv_s[:, 2 * C:]
    attn1 = _mha_headsum(qp, kp, vp, wo_s_ref[...], bo_s_ref[...], num_heads)
    y1 = attn1 if skip_first_layer_pe else attn1 + x.astype(jnp.float32)
    q1 = _layer_norm(y1, g1_ref[...], be1_ref[...])            # (Nq, C) f32

    # ---- stage 2: cross attention token -> image (+ residual) + norm2 ----
    Ci = wo_x_ref.shape[0]
    wqkv_x = wqkv_x_ref[...]
    bqkv_x = bqkv_x_ref[...]
    q_in = (q1 + qpe.astype(jnp.float32)).astype(jnp.bfloat16)
    k_in = keys + kpe                                           # bf16 add
    qp2 = jnp.dot(q_in, wqkv_x[:, :Ci],
                  preferred_element_type=jnp.float32) + bqkv_x[:, :Ci]
    kp2 = jnp.dot(k_in, wqkv_x[:, Ci:2 * Ci],
                  preferred_element_type=jnp.float32) + bqkv_x[:, Ci:2 * Ci]
    vp2 = jnp.dot(keys, wqkv_x[:, 2 * Ci:],
                  preferred_element_type=jnp.float32) + bqkv_x[:, 2 * Ci:]
    attn2 = _mha_headsum(qp2, kp2, vp2, wo_x_ref[...], bo_x_ref[...], num_heads)
    q2 = _layer_norm(attn2 + q1, g2_ref[...], be2_ref[...])    # (Nq, C) f32

    # ---- stage 3: MLP (ReLU) (+ residual) + norm3 ----
    h = jnp.dot(q2.astype(jnp.bfloat16), w1_ref[...],
                preferred_element_type=jnp.float32) + b1_ref[...]
    h = jnp.maximum(h, 0.0)
    mlp = jnp.dot(h.astype(jnp.bfloat16), w2_ref[...],
                  preferred_element_type=jnp.float32) + b2_ref[...]
    q3 = _layer_norm(mlp + q2, g3_ref[...], be3_ref[...])
    out_ref[0] = q3.astype(out_ref.dtype)


def fused_i2t_kernel(k_ref, kpe_ref, q_ref, qpe_ref,
                     wqkv_ref, bqkv_ref, wo_ref, bo_ref, g4_ref, be4_ref,
                     out_ref, *, num_heads):
    """Row tile of image tokens: LN4(keys + CrossAttn(q=keys+kpe, k=q+qpe, v=q))."""
    keys = k_ref[0]                    # (Tk, C) bf16 row tile of image tokens
    kpe = kpe_ref[0]                   # (Tk, C) bf16
    q = q_ref[0]                       # (Nq, C) bf16 (queries after norm3)
    qpe = qpe_ref[0]                   # (Nq, C) bf16

    Ci = wo_ref.shape[0]
    wqkv = wqkv_ref[...]
    bqkv = bqkv_ref[...]

    q_side = keys + kpe                # attention "q" input
    k_side = q + qpe                   # attention "k" input
    qp = jnp.dot(q_side, wqkv[:, :Ci],
                 preferred_element_type=jnp.float32) + bqkv[:, :Ci]
    kp = jnp.dot(k_side, wqkv[:, Ci:2 * Ci],
                 preferred_element_type=jnp.float32) + bqkv[:, Ci:2 * Ci]
    vp = jnp.dot(q, wqkv[:, 2 * Ci:],
                 preferred_element_type=jnp.float32) + bqkv[:, 2 * Ci:]
    attn = _mha_headsum(qp, kp, vp, wo_ref[...], bo_ref[...], num_heads)
    y = attn + keys.astype(jnp.float32)
    out_ref[0] = _layer_norm(y, g4_ref[...], be4_ref[...]).astype(out_ref.dtype)


# ----------------------------------------------------------------------------- #
# Pallas wrappers
# ----------------------------------------------------------------------------- #
def _const_spec(arr, ngrid):
    nd = arr.ndim
    if ngrid == 1:
        return pl.BlockSpec(arr.shape, lambda b, _nd=nd: (0,) * _nd)
    return pl.BlockSpec(arr.shape, lambda b, r, _nd=nd: (0,) * _nd)


def _choose_row_tile(n, target):
    """Largest multiple-of-8 divisor of n that is <= target (or n itself)."""
    if n <= target:
        return n
    t = min(target, n)
    t -= t % 8
    while t >= 8:
        if n % t == 0:
            return t
        t -= 8
    return n


def fused_query_path(queries, query_pe, keys, key_pe, params, *, num_heads,
                     skip_first_layer_pe, vmem_limit_bytes=_VMEM_LIMIT):
    B, Nq, C = queries.shape
    Nk = keys.shape[1]

    row_q = pl.BlockSpec((1, Nq, C), lambda b: (b, 0, 0))
    row_k = pl.BlockSpec((1, Nk, C), lambda b: (b, 0, 0))

    sa, ct, mlp = params["self_attn"], params["cross_t2i"], params["mlp"]
    n1, n2, n3 = params["norm1"], params["norm2"], params["norm3"]
    weight_args = [
        sa["wqkv"], sa["bqkv"], sa["wo"], sa["bo"], n1["gamma"], n1["beta"],
        ct["wqkv"], ct["bqkv"], ct["wo"], ct["bo"], n2["gamma"], n2["beta"],
        mlp["w1"], mlp["b1"], mlp["w2"], mlp["b2"], n3["gamma"], n3["beta"],
    ]
    inputs = [queries, query_pe, keys, key_pe] + weight_args
    in_specs = [row_q, row_q, row_k, row_k] + [_const_spec(a, 1) for a in weight_args]

    kern = functools.partial(fused_query_path_kernel, num_heads=num_heads,
                             skip_first_layer_pe=skip_first_layer_pe)
    # NOTE: at C=32 the stored last dim is lane-sparse (masked vst); lane-dense at
    # the real SAM config (C=256).
    return pl.pallas_call(
        kern,
        out_shape=jax.ShapeDtypeStruct((B, Nq, C), jnp.bfloat16),
        grid=(B,),
        in_specs=in_specs,
        out_specs=pl.BlockSpec((1, Nq, C), lambda b: (b, 0, 0)),
        compiler_params=pltpu.CompilerParams(
            dimension_semantics=("parallel",),
            vmem_limit_bytes=vmem_limit_bytes),
    )(*inputs)


def fused_image_path(keys, key_pe, queries, query_pe, attn_p, ln_p, *, num_heads,
                     row_tile=512, vmem_limit_bytes=_VMEM_LIMIT):
    B, Nk, C = keys.shape
    Nq = queries.shape[1]
    Tk = _choose_row_tile(Nk, row_tile)
    grid = (B, Nk // Tk)

    tile_k = pl.BlockSpec((1, Tk, C), lambda b, r: (b, r, 0))
    full_q = pl.BlockSpec((1, Nq, C), lambda b, r: (b, 0, 0))

    weight_args = [attn_p["wqkv"], attn_p["bqkv"], attn_p["wo"], attn_p["bo"],
                   ln_p["gamma"], ln_p["beta"]]
    inputs = [keys, key_pe, queries, query_pe] + weight_args
    in_specs = [tile_k, tile_k, full_q, full_q] + \
               [_const_spec(a, 2) for a in weight_args]

    kern = functools.partial(fused_i2t_kernel, num_heads=num_heads)
    return pl.pallas_call(
        kern,
        out_shape=jax.ShapeDtypeStruct((B, Nk, C), jnp.bfloat16),
        grid=grid,
        in_specs=in_specs,
        out_specs=pl.BlockSpec((1, Tk, C), lambda b, r: (b, r, 0)),
        compiler_params=pltpu.CompilerParams(
            dimension_semantics=("parallel", "parallel"),
            vmem_limit_bytes=vmem_limit_bytes),
    )(*inputs)


# ----------------------------------------------------------------------------- #
# Parameter init (deterministic, synthetic)
# ----------------------------------------------------------------------------- #
def _init_attention(key, embedding_dim, internal_dim, num_heads):
    ks = jax.random.split(key, 8)
    std = 0.02

    def w(k, din, dout):
        return jax.random.normal(k, (din, dout), jnp.float32) * std

    wq, wk, wv = (w(ks[i], embedding_dim, internal_dim) for i in range(3))
    wo = w(ks[3], internal_dim, embedding_dim)
    bq, bk, bv = (jax.random.normal(ks[4 + i], (internal_dim,), jnp.float32) * std
                  for i in range(3))
    bo = jax.random.normal(ks[7], (embedding_dim,), jnp.float32) * std

    # Fold the 1/sqrt(c_per_head) attention scale into the q projection.
    scale = 1.0 / math.sqrt(internal_dim // num_heads)
    wq = wq * scale
    bq = bq * scale

    wqkv = jnp.concatenate([wq, wk, wv], axis=1).astype(jnp.bfloat16)   # (C, 3*Ci)
    bqkv = jnp.concatenate([bq, bk, bv])[None, :].astype(jnp.float32)   # (1, 3*Ci)
    return dict(wqkv=wqkv, bqkv=bqkv,
                wo=wo.astype(jnp.bfloat16), bo=bo[None, :].astype(jnp.float32))


def _init_ln(embedding_dim):
    return dict(gamma=jnp.ones((1, embedding_dim), jnp.float32),
                beta=jnp.zeros((1, embedding_dim), jnp.float32))


def init_params(key, embedding_dim, num_heads, mlp_dim, downsample_rate):
    ks = jax.random.split(key, 7)
    internal = embedding_dim // downsample_rate
    std = 0.02
    return dict(
        self_attn=_init_attention(ks[0], embedding_dim, embedding_dim, num_heads),
        cross_t2i=_init_attention(ks[1], embedding_dim, internal, num_heads),
        cross_i2t=_init_attention(ks[2], embedding_dim, internal, num_heads),
        norm1=_init_ln(embedding_dim),
        norm2=_init_ln(embedding_dim),
        norm3=_init_ln(embedding_dim),
        norm4=_init_ln(embedding_dim),
        mlp=dict(
            w1=(jax.random.normal(ks[3], (embedding_dim, mlp_dim), jnp.float32)
                * std).astype(jnp.bfloat16),
            b1=(jax.random.normal(ks[5], (mlp_dim,), jnp.float32) * std)[None, :],
            w2=(jax.random.normal(ks[4], (mlp_dim, embedding_dim), jnp.float32)
                * std).astype(jnp.bfloat16),
            b2=(jax.random.normal(ks[6], (embedding_dim,), jnp.float32) * std)[None, :],
        ),
    )


# ----------------------------------------------------------------------------- #
# TwoWayAttentionBlock forward (2 fused pallas_calls)
# ----------------------------------------------------------------------------- #
def two_way_attention_block(queries, keys, query_pe, key_pe, params, num_heads,
                            skip_first_layer_pe=False, row_tile=512):
    orig_dtype = queries.dtype
    # bf16 carry between kernels (HBM-bound at SAM scale); stats stay f32 in-kernel.
    qb = queries.astype(jnp.bfloat16)
    kb = keys.astype(jnp.bfloat16)
    qpe = query_pe.astype(jnp.bfloat16)
    kpe = key_pe.astype(jnp.bfloat16)

    # 1-3) self-attn+norm1 -> cross t2i+norm2 -> MLP+norm3, one fused kernel.
    q_out = fused_query_path(qb, qpe, kb, kpe, params, num_heads=num_heads,
                             skip_first_layer_pe=skip_first_layer_pe)

    # 4) cross attention image->tokens + norm4, row-tiled over image tokens.
    k_out = fused_image_path(kb, kpe, q_out, qpe, params["cross_i2t"],
                             params["norm4"], num_heads=num_heads,
                             row_tile=row_tile)

    return q_out.astype(orig_dtype), k_out.astype(orig_dtype)


# ----------------------------------------------------------------------------- #
# Pure-JAX f32 reference (mirrors the kernel math; scale folded into wq)
# ----------------------------------------------------------------------------- #
def _ref_ln(y, p):
    mean = y.mean(-1, keepdims=True)
    var = ((y - mean) ** 2).mean(-1, keepdims=True)
    return (y - mean) / jnp.sqrt(var + 1e-5) * p["gamma"] + p["beta"]


def _ref_attention(q_in, k_in, v_in, p, num_heads):
    wqkv = p["wqkv"].astype(jnp.float32)
    bqkv = p["bqkv"]
    wo = p["wo"].astype(jnp.float32)
    bo = p["bo"]
    Ci = wo.shape[0]
    qp = q_in @ wqkv[:, :Ci] + bqkv[:, :Ci]
    kp = k_in @ wqkv[:, Ci:2 * Ci] + bqkv[:, Ci:2 * Ci]
    vp = v_in @ wqkv[:, 2 * Ci:] + bqkv[:, 2 * Ci:]

    def split(x):
        b, n, c = x.shape
        return x.reshape(b, n, num_heads, c // num_heads).transpose(0, 2, 1, 3)

    q, k, v = split(qp), split(kp), split(vp)
    s = jnp.einsum('bhqd,bhkd->bhqk', q, k)          # 1/sqrt(d) already in wq
    a = jax.nn.softmax(s, axis=-1)
    o = jnp.einsum('bhqk,bhkd->bhqd', a, v)
    b, h, n, d = o.shape
    o = o.transpose(0, 2, 1, 3).reshape(b, n, h * d)
    return o @ wo + bo


def two_way_attention_block_ref(queries, keys, query_pe, key_pe, params,
                                num_heads, skip_first_layer_pe=False):
    if skip_first_layer_pe:
        queries = _ref_attention(queries, queries, queries,
                                 params["self_attn"], num_heads)
    else:
        q = queries + query_pe
        queries = queries + _ref_attention(q, q, queries,
                                           params["self_attn"], num_heads)
    queries = _ref_ln(queries, params["norm1"])

    q = queries + query_pe
    k = keys + key_pe
    queries = queries + _ref_attention(q, k, keys, params["cross_t2i"], num_heads)
    queries = _ref_ln(queries, params["norm2"])

    mlp = params["mlp"]
    h = jnp.maximum(queries @ mlp["w1"].astype(jnp.float32) + mlp["b1"], 0.0)
    queries = queries + (h @ mlp["w2"].astype(jnp.float32) + mlp["b2"])
    queries = _ref_ln(queries, params["norm3"])

    q = queries + query_pe
    k = keys + key_pe
    keys = keys + _ref_attention(k, q, queries, params["cross_i2t"], num_heads)
    keys = _ref_ln(keys, params["norm4"])
    return queries, keys


# ----------------------------------------------------------------------------- #
# Main
# ----------------------------------------------------------------------------- #
if __name__ == "__main__":
    embedding_dim = 32
    num_heads = 2
    mlp_dim = 64
    downsample_rate = 2
    B, Nq, Nk = 2, 8, 16   # batch, sparse (prompt) tokens, image tokens

    root = jax.random.PRNGKey(0)
    k_param, k_q, k_k, k_qpe, k_kpe = jax.random.split(root, 5)

    params = init_params(k_param, embedding_dim, num_heads, mlp_dim, downsample_rate)

    queries = jax.random.normal(k_q, (B, Nq, embedding_dim), jnp.float32)
    keys = jax.random.normal(k_k, (B, Nk, embedding_dim), jnp.float32)
    query_pe = jax.random.normal(k_qpe, (B, Nq, embedding_dim), jnp.float32)
    key_pe = jax.random.normal(k_kpe, (B, Nk, embedding_dim), jnp.float32)

    # row_tile=8 exercises the (B, Nk//8) row-tiled grid of the i2t kernel.
    for skip in (False, True):
        fwd = jax.jit(functools.partial(two_way_attention_block,
                                        num_heads=num_heads,
                                        skip_first_layer_pe=skip,
                                        row_tile=8))
        q_out, k_out = fwd(queries, keys, query_pe, key_pe, params)
        jax.block_until_ready((q_out, k_out))
        assert q_out.shape == (B, Nq, embedding_dim)
        assert k_out.shape == (B, Nk, embedding_dim)
        assert bool(jnp.all(jnp.isfinite(q_out))) and bool(jnp.all(jnp.isfinite(k_out)))

        # Tolerance check vs f32 reference (bf16 carry + approx reciprocal).
        q_ref, k_ref = two_way_attention_block_ref(
            queries, keys, query_pe, key_pe, params, num_heads, skip)
        assert float(jnp.max(jnp.abs(q_out - q_ref))) < 0.15
        assert float(jnp.max(jnp.abs(k_out - k_ref))) < 0.15

    print("KERNEL_OK")
</pallas_src>

<mosaic_0001>
module attributes {stable_mosaic.version = 11 : i64} {
  func.func @fused_query_path_kernel(%arg0: i32, %arg1: memref<1x8x32xbf16, #tpu.memory_space<vmem>>, %arg2: memref<1x8x32xbf16, #tpu.memory_space<vmem>>, %arg3: memref<1x16x32xbf16, #tpu.memory_space<vmem>>, %arg4: memref<1x16x32xbf16, #tpu.memory_space<vmem>>, %arg5: memref<32x96xbf16, #tpu.memory_space<vmem>>, %arg6: memref<1x96xf32, #tpu.memory_space<vmem>>, %arg7: memref<32x32xbf16, #tpu.memory_space<vmem>>, %arg8: memref<1x32xf32, #tpu.memory_space<vmem>>, %arg9: memref<1x32xf32, #tpu.memory_space<vmem>>, %arg10: memref<1x32xf32, #tpu.memory_space<vmem>>, %arg11: memref<32x48xbf16, #tpu.memory_space<vmem>>, %arg12: memref<1x48xf32, #tpu.memory_space<vmem>>, %arg13: memref<16x32xbf16, #tpu.memory_space<vmem>>, %arg14: memref<1x32xf32, #tpu.memory_space<vmem>>, %arg15: memref<1x32xf32, #tpu.memory_space<vmem>>, %arg16: memref<1x32xf32, #tpu.memory_space<vmem>>, %arg17: memref<32x64xbf16, #tpu.memory_space<vmem>>, %arg18: memref<1x64xf32, #tpu.memory_space<vmem>>, %arg19: memref<64x32xbf16, #tpu.memory_space<vmem>>, %arg20: memref<1x32xf32, #tpu.memory_space<vmem>>, %arg21: memref<1x32xf32, #tpu.memory_space<vmem>>, %arg22: memref<1x32xf32, #tpu.memory_space<vmem>>, %arg23: memref<1x8x32xbf16, #tpu.memory_space<vmem>>) attributes {dimension_semantics = [#tpu.dimension_semantics<parallel>], iteration_bounds = array<i64: 2>, scalar_prefetch = 0 : i64, scratch_operands = 0 : i64, tpu.core_type = #tpu.core_type<tc>, window_params = [{transform_indices = @transform_0, window_bounds = array<i64: 1, 8, 32>}, {transform_indices = @transform_1, window_bounds = array<i64: 1, 8, 32>}, {transform_indices = @transform_2, window_bounds = array<i64: 1, 16, 32>}, {transform_indices = @transform_3, window_bounds = array<i64: 1, 16, 32>}, {pipeline_mode = #tpu.pipeline_mode<synchronous>, transform_indices = @transform_4, window_bounds = array<i64: 32, 96>}, {pipeline_mode = #tpu.pipeline_mode<synchronous>, transform_indices = @transform_5, window_bounds = array<i64: 1, 96>}, {pipeline_mode = #tpu.pipeline_mode<synchronous>, transform_indices = @transform_6, window_bounds = array<i64: 32, 32>}, {pipeline_mode = #tpu.pipeline_mode<synchronous>, transform_indices = @transform_7, window_bounds = array<i64: 1, 32>}, {pipeline_mode = #tpu.pipeline_mode<synchronous>, transform_indices = @transform_8, window_bounds = array<i64: 1, 32>}, {pipeline_mode = #tpu.pipeline_mode<synchronous>, transform_indices = @transform_9, window_bounds = array<i64: 1, 32>}, {pipeline_mode = #tpu.pipeline_mode<synchronous>, transform_indices = @transform_10, window_bounds = array<i64: 32, 48>}, {pipeline_mode = #tpu.pipeline_mode<synchronous>, transform_indices = @transform_11, window_bounds = array<i64: 1, 48>}, {pipeline_mode = #tpu.pipeline_mode<synchronous>, transform_indices = @transform_12, window_bounds = array<i64: 16, 32>}, {pipeline_mode = #tpu.pipeline_mode<synchronous>, transform_indices = @transform_13, window_bounds = array<i64: 1, 32>}, {pipeline_mode = #tpu.pipeline_mode<synchronous>, transform_indices = @transform_14, window_bounds = array<i64: 1, 32>}, {pipeline_mode = #tpu.pipeline_mode<synchronous>, transform_indices = @transform_15, window_bounds = array<i64: 1, 32>}, {pipeline_mode = #tpu.pipeline_mode<synchronous>, transform_indices = @transform_16, window_bounds = array<i64: 32, 64>}, {pipeline_mode = #tpu.pipeline_mode<synchronous>, transform_indices = @transform_17, window_bounds = array<i64: 1, 64>}, {pipeline_mode = #tpu.pipeline_mode<synchronous>, transform_indices = @transform_18, window_bounds = array<i64: 64, 32>}, {pipeline_mode = #tpu.pipeline_mode<synchronous>, transform_indices = @transform_19, window_bounds = array<i64: 1, 32>}, {pipeline_mode = #tpu.pipeline_mode<synchronous>, transform_indices = @transform_20, window_bounds = array<i64: 1, 32>}, {pipeline_mode = #tpu.pipeline_mode<synchronous>, transform_indices = @transform_21, window_bounds = array<i64: 1, 32>}, {transform_indices = @transform_22, window_bounds = array<i64: 1, 8, 32>}]} {
    %c0 = arith.constant 0 : index
    %c0_0 = arith.constant 0 : index
    %c0_1 = arith.constant 0 : index
    %0 = vector.load %arg1[%c0, %c0_0, %c0_1] : memref<1x8x32xbf16, #tpu.memory_space<vmem>>, vector<1x8x32xbf16>
    %1 = vector.shape_cast %0 : vector<1x8x32xbf16> to vector<8x32xbf16>
    %c0_2 = arith.constant 0 : index
    %c0_3 = arith.constant 0 : index
    %c0_4 = arith.constant 0 : index
    %2 = vector.load %arg2[%c0_2, %c0_3, %c0_4] : memref<1x8x32xbf16, #tpu.memory_space<vmem>>, vector<1x8x32xbf16>
    %3 = vector.shape_cast %2 : vector<1x8x32xbf16> to vector<8x32xbf16>
    %c0_5 = arith.constant 0 : index
    %c0_6 = arith.constant 0 : index
    %c0_7 = arith.constant 0 : index
    %4 = vector.load %arg3[%c0_5, %c0_6, %c0_7] : memref<1x16x32xbf16, #tpu.memory_space<vmem>>, vector<1x16x32xbf16>
    %5 = vector.shape_cast %4 : vector<1x16x32xbf16> to vector<16x32xbf16>
    %c0_8 = arith.constant 0 : index
    %c0_9 = arith.constant 0 : index
    %c0_10 = arith.constant 0 : index
    %6 = vector.load %arg4[%c0_8, %c0_9, %c0_10] : memref<1x16x32xbf16, #tpu.memory_space<vmem>>, vector<1x16x32xbf16>
    %7 = vector.shape_cast %6 : vector<1x16x32xbf16> to vector<16x32xbf16>
    %c0_11 = arith.constant 0 : index
    %c0_12 = arith.constant 0 : index
    %8 = vector.load %arg5[%c0_11, %c0_12] : memref<32x96xbf16, #tpu.memory_space<vmem>>, vector<32x96xbf16>
    %c0_13 = arith.constant 0 : index
    %c0_14 = arith.constant 0 : index
    %9 = vector.load %arg6[%c0_13, %c0_14] : memref<1x96xf32, #tpu.memory_space<vmem>>, vector<1x96xf32>
    %10 = arith.addf %1, %3 : vector<8x32xbf16>
    %11 = vector.extract_strided_slice %8 {offsets = [0, 0], sizes = [32, 64], strides = [1, 1]} : vector<32x96xbf16> to vector<32x64xbf16>
    %cst = arith.constant dense<0.000000e+00> : vector<8x64xf32>
    %12 = tpu.matmul %10, %11, %cst {dimension_numbers = #tpu.dot_dimension_numbers<[1], [0], [0], [1], [0, 0, 1, 1], [], []>} : vector<8x32xbf16>, vector<32x64xbf16>, vector<8x64xf32> -> vector<8x64xf32>
    %13 = vector.extract_strided_slice %9 {offsets = [0, 0], sizes = [1, 64], strides = [1, 1]} : vector<1x96xf32> to vector<1x64xf32>
    %14 = vector.broadcast %13 : vector<1x64xf32> to vector<8x64xf32>
    %15 = arith.addf %12, %14 : vector<8x64xf32>
    %16 = vector.extract_strided_slice %15 {offsets = [0, 0], sizes = [8, 32], strides = [1, 1]} : vector<8x64xf32> to vector<8x32xf32>
    %17 = vector.extract_strided_slice %15 {offsets = [0, 32], sizes = [8, 32], strides = [1, 1]} : vector<8x64xf32> to vector<8x32xf32>
    %18 = vector.extract_strided_slice %8 {offsets = [0, 64], sizes = [32, 32], strides = [1, 1]} : vector<32x96xbf16> to vector<32x32xbf16>
    %cst_15 = arith.constant dense<0.000000e+00> : vector<8x32xf32>
    %19 = tpu.matmul %1, %18, %cst_15 {dimension_numbers = #tpu.dot_dimension_numbers<[1], [0], [0], [1], [0, 0, 1, 1], [], []>} : vector<8x32xbf16>, vector<32x32xbf16>, vector<8x32xf32> -> vector<8x32xf32>
    %20 = vector.extract_strided_slice %9 {offsets = [0, 64], sizes = [1, 32], strides = [1, 1]} : vector<1x96xf32> to vector<1x32xf32>
    %21 = vector.broadcast %20 : vector<1x32xf32> to vector<8x32xf32>
    %22 = arith.addf %19, %21 : vector<8x32xf32>
    %c0_16 = arith.constant 0 : index
    %c0_17 = arith.constant 0 : index
    %23 = vector.load %arg7[%c0_16, %c0_17] : memref<32x32xbf16, #tpu.memory_space<vmem>>, vector<32x32xbf16>
    %c0_18 = arith.constant 0 : index
    %c0_19 = arith.constant 0 : index
    %24 = vector.load %arg8[%c0_18, %c0_19] : memref<1x32xf32, #tpu.memory_space<vmem>>, vector<1x32xf32>
    %25 = arith.truncf %16 : vector<8x32xf32> to vector<8x32xbf16>
    %26 = arith.truncf %17 : vector<8x32xf32> to vector<8x32xbf16>
    %27 = arith.truncf %22 : vector<8x32xf32> to vector<8x32xbf16>
    %28 = vector.extract_strided_slice %25 {offsets = [0, 0], sizes = [8, 16], strides = [1, 1]} : vector<8x32xbf16> to vector<8x16xbf16>
    %29 = vector.extract_strided_slice %26 {offsets = [0, 0], sizes = [8, 16], strides = [1, 1]} : vector<8x32xbf16> to vector<8x16xbf16>
    %cst_20 = arith.constant dense<0.000000e+00> : vector<8x8xf32>
    %30 = tpu.matmul %28, %29, %cst_20 {dimension_numbers = #tpu.dot_dimension_numbers<[1], [1], [0], [0], [0, 0, 1, 0], [], []>} : vector<8x16xbf16>, vector<8x16xbf16>, vector<8x8xf32> -> vector<8x8xf32>
    %cst_21 = arith.constant dense<0xFF800000> : vector<8xf32>
    %31 = vector.multi_reduction <maximumf>, %30, %cst_21 [1] : vector<8x8xf32> to vector<8xf32>
    %32 = vector.shape_cast %31 : vector<8xf32> to vector<8x1xf32>
    %33 = vector.broadcast %32 : vector<8x1xf32> to vector<8x8xf32>
    %34 = arith.subf %30, %33 : vector<8x8xf32>
    %35 = math.exp %34 : vector<8x8xf32>
    %cst_22 = arith.constant dense<0.000000e+00> : vector<8xf32>
    %36 = vector.multi_reduction <add>, %35, %cst_22 [1] : vector<8x8xf32> to vector<8xf32>
    %37 = vector.shape_cast %36 : vector<8xf32> to vector<8x1xf32>
    %38 = arith.truncf %35 : vector<8x8xf32> to vector<8x8xbf16>
    %39 = vector.extract_strided_slice %27 {offsets = [0, 0], sizes = [8, 16], strides = [1, 1]} : vector<8x32xbf16> to vector<8x16xbf16>
    %cst_23 = arith.constant dense<0.000000e+00> : vector<8x16xf32>
    %40 = tpu.matmul %38, %39, %cst_23 {dimension_numbers = #tpu.dot_dimension_numbers<[1], [0], [0], [1], [0, 0, 1, 1], [], []>} : vector<8x8xbf16>, vector<8x16xbf16>, vector<8x16xf32> -> vector<8x16xf32>
    %41 = tpu.reciprocal %37 {approx = true} : vector<8x1xf32> -> vector<8x1xf32>
    %42 = vector.broadcast %41 : vector<8x1xf32> to vector<8x16xf32>
    %43 = arith.mulf %40, %42 : vector<8x16xf32>
    %44 = arith.truncf %43 : vector<8x16xf32> to vector<8x16xbf16>
    %45 = vector.extract_strided_slice %23 {offsets = [0, 0], sizes = [16, 32], strides = [1, 1]} : vector<32x32xbf16> to vector<16x32xbf16>
    %cst_24 = arith.constant dense<0.000000e+00> : vector<8x32xf32>
    %46 = tpu.matmul %44, %45, %cst_24 {dimension_numbers = #tpu.dot_dimension_numbers<[1], [0], [0], [1], [0, 0, 1, 1], [], []>} : vector<8x16xbf16>, vector<16x32xbf16>, vector<8x32xf32> -> vector<8x32xf32>
    %47 = vector.extract_strided_slice %25 {offsets = [0, 16], sizes = [8, 16], strides = [1, 1]} : vector<8x32xbf16> to vector<8x16xbf16>
    %48 = vector.extract_strided_slice %26 {offsets = [0, 16], sizes = [8, 16], strides = [1, 1]} : vector<8x32xbf16> to vector<8x16xbf16>
    %cst_25 = arith.constant dense<0.000000e+00> : vector<8x8xf32>
    %49 = tpu.matmul %47, %48, %cst_25 {dimension_numbers = #tpu.dot_dimension_numbers<[1], [1], [0], [0], [0, 0, 1, 0], [], []>} : vector<8x16xbf16>, vector<8x16xbf16>, vector<8x8xf32> -> vector<8x8xf32>
    %cst_26 = arith.constant dense<0xFF800000> : vector<8xf32>
    %50 = vector.multi_reduction <maximumf>, %49, %cst_26 [1] : vector<8x8xf32> to vector<8xf32>
    %51 = vector.shape_cast %50 : vector<8xf32> to vector<8x1xf32>
    %52 = vector.broadcast %51 : vector<8x1xf32> to vector<8x8xf32>
    %53 = arith.subf %49, %52 : vector<8x8xf32>
    %54 = math.exp %53 : vector<8x8xf32>
    %cst_27 = arith.constant dense<0.000000e+00> : vector<8xf32>
    %55 = vector.multi_reduction <add>, %54, %cst_27 [1] : vector<8x8xf32> to vector<8xf32>
    %56 = vector.shape_cast %55 : vector<8xf32> to vector<8x1xf32>
    %57 = arith.truncf %54 : vector<8x8xf32> to vector<8x8xbf16>
    %58 = vector.extract_strided_slice %27 {offsets = [0, 16], sizes = [8, 16], strides = [1, 1]} : vector<8x32xbf16> to vector<8x16xbf16>
    %cst_28 = arith.constant dense<0.000000e+00> : vector<8x16xf32>
    %59 = tpu.matmul %57, %58, %cst_28 {dimension_numbers = #tpu.dot_dimension_numbers<[1], [0], [0], [1], [0, 0, 1, 1], [], []>} : vector<8x8xbf16>, vector<8x16xbf16>, vector<8x16xf32> -> vector<8x16xf32>
    %60 = tpu.reciprocal %56 {approx = true} : vector<8x1xf32> -> vector<8x1xf32>
    %61 = vector.broadcast %60 : vector<8x1xf32> to vector<8x16xf32>
    %62 = arith.mulf %59, %61 : vector<8x16xf32>
    %63 = arith.truncf %62 : vector<8x16xf32> to vector<8x16xbf16>
    %64 = vector.extract_strided_slice %23 {offsets = [16, 0], sizes = [16, 32], strides = [1, 1]} : vector<32x32xbf16> to vector<16x32xbf16>
    %cst_29 = arith.constant dense<0.000000e+00> : vector<8x32xf32>
    %65 = tpu.matmul %63, %64, %cst_29 {dimension_numbers = #tpu.dot_dimension_numbers<[1], [0], [0], [1], [0, 0, 1, 1], [], []>} : vector<8x16xbf16>, vector<16x32xbf16>, vector<8x32xf32> -> vector<8x32xf32>
    %66 = arith.addf %46, %65 : vector<8x32xf32>
    %67 = vector.broadcast %24 : vector<1x32xf32> to vector<8x32xf32>
    %68 = arith.addf %66, %67 : vector<8x32xf32>
    %69 = arith.extf %1 : vector<8x32xbf16> to vector<8x32xf32>
    %70 = arith.addf %68, %69 : vector<8x32xf32>
    %c0_30 = arith.constant 0 : index
    %c0_31 = arith.constant 0 : index
    %71 = vector.load %arg9[%c0_30, %c0_31] : memref<1x32xf32, #tpu.memory_space<vmem>>, vector<1x32xf32>
    %c0_32 = arith.constant 0 : index
    %c0_33 = arith.constant 0 : index
    %72 = vector.load %arg10[%c0_32, %c0_33] : memref<1x32xf32, #tpu.memory_space<vmem>>, vector<1x32xf32>
    %cst_34 = arith.constant dense<0.000000e+00> : vector<8xf32>
    %73 = vector.multi_reduction <add>, %70, %cst_34 [1] : vector<8x32xf32> to vector<8xf32>
    %74 = vector.shape_cast %73 : vector<8xf32> to vector<8x1xf32>
    %cst_35 = arith.constant 3.200000e+01 : f32
    %75 = vector.broadcast %cst_35 : f32 to vector<8x1xf32>
    %76 = arith.divf %74, %75 : vector<8x1xf32>
    %77 = vector.broadcast %76 : vector<8x1xf32> to vector<8x32xf32>
    %78 = arith.subf %70, %77 : vector<8x32xf32>
    %79 = arith.mulf %78, %78 : vector<8x32xf32>
    %cst_36 = arith.constant dense<0.000000e+00> : vector<8xf32>
    %80 = vector.multi_reduction <add>, %79, %cst_36 [1] : vector<8x32xf32> to vector<8xf32>
    %81 = vector.shape_cast %80 : vector<8xf32> to vector<8x1xf32>
    %cst_37 = arith.constant 3.200000e+01 : f32
    %82 = vector.broadcast %cst_37 : f32 to vector<8x1xf32>
    %83 = arith.divf %81, %82 : vector<8x1xf32>
    %cst_38 = arith.constant 9.99999974E-6 : f32
    %84 = vector.broadcast %cst_38 : f32 to vector<8x1xf32>
    %85 = arith.addf %83, %84 : vector<8x1xf32>
    %86 = math.rsqrt %85 : vector<8x1xf32>
    %87 = vector.broadcast %86 : vector<8x1xf32> to vector<8x32xf32>
    %88 = arith.mulf %78, %87 : vector<8x32xf32>
    %89 = vector.broadcast %71 : vector<1x32xf32> to vector<8x32xf32>
    %90 = arith.mulf %88, %89 : vector<8x32xf32>
    %91 = vector.broadcast %72 : vector<1x32xf32> to vector<8x32xf32>
    %92 = arith.addf %90, %91 : vector<8x32xf32>
    %c0_39 = arith.constant 0 : index
    %c0_40 = arith.constant 0 : index
    %93 = vector.load %arg11[%c0_39, %c0_40] : memref<32x48xbf16, #tpu.memory_space<vmem>>, vector<32x48xbf16>
    %c0_41 = arith.constant 0 : index
    %c0_42 = arith.constant 0 : index
    %94 = vector.load %arg12[%c0_41, %c0_42] : memref<1x48xf32, #tpu.memory_space<vmem>>, vector<1x48xf32>
    %95 = arith.extf %3 : vector<8x32xbf16> to vector<8x32xf32>
    %96 = arith.addf %92, %95 : vector<8x32xf32>
    %97 = arith.truncf %96 : vector<8x32xf32> to vector<8x32xbf16>
    %98 = arith.addf %5, %7 : vector<16x32xbf16>
    %99 = vector.extract_strided_slice %93 {offsets = [0, 0], sizes = [32, 16], strides = [1, 1]} : vector<32x48xbf16> to vector<32x16xbf16>
    %cst_43 = arith.constant dense<0.000000e+00> : vector<8x16xf32>
    %100 = tpu.matmul %97, %99, %cst_43 {dimension_numbers = #tpu.dot_dimension_numbers<[1], [0], [0], [1], [0, 0, 1, 1], [], []>} : vector<8x32xbf16>, vector<32x16xbf16>, vector<8x16xf32> -> vector<8x16xf32>
    %101 = vector.extract_strided_slice %94 {offsets = [0, 0], sizes = [1, 16], strides = [1, 1]} : vector<1x48xf32> to vector<1x16xf32>
    %102 = vector.broadcast %101 : vector<1x16xf32> to vector<8x16xf32>
    %103 = arith.addf %100, %102 : vector<8x16xf32>
    %104 = vector.extract_strided_slice %93 {offsets = [0, 16], sizes = [32, 16], strides = [1, 1]} : vector<32x48xbf16> to vector<32x16xbf16>
    %cst_44 = arith.constant dense<0.000000e+00> : vector<16x16xf32>
    %105 = tpu.matmul %98, %104, %cst_44 {dimension_numbers = #tpu.dot_dimension_numbers<[1], [0], [0], [1], [0, 0, 1, 1], [], []>} : vector<16x32xbf16>, vector<32x16xbf16>, vector<16x16xf32> -> vector<16x16xf32>
    %106 = vector.extract_strided_slice %94 {offsets = [0, 16], sizes = [1, 16], strides = [1, 1]} : vector<1x48xf32> to vector<1x16xf32>
    %107 = vector.broadcast %106 : vector<1x16xf32> to vector<16x16xf32>
    %108 = arith.addf %105, %107 : vector<16x16xf32>
    %109 = vector.extract_strided_slice %93 {offsets = [0, 32], sizes = [32, 16], strides = [1, 1]} : vector<32x48xbf16> to vector<32x16xbf16>
    %cst_45 = arith.constant dense<0.000000e+00> : vector<16x16xf32>
    %110 = tpu.matmul %5, %109, %cst_45 {dimension_numbers = #tpu.dot_dimension_numbers<[1], [0], [0], [1], [0, 0, 1, 1], [], []>} : vector<16x32xbf16>, vector<32x16xbf16>, vector<16x16xf32> -> vector<16x16xf32>
    %111 = vector.extract_strided_slice %94 {offsets = [0, 32], sizes = [1, 16], strides = [1, 1]} : vector<1x48xf32> to vector<1x16xf32>
    %112 = vector.broadcast %111 : vector<1x16xf32> to vector<16x16xf32>
    %113 = arith.addf %110, %112 : vector<16x16xf32>
    %c0_46 = arith.constant 0 : index
    %c0_47 = arith.constant 0 : index
    %114 = vector.load %arg13[%c0_46, %c0_47] : memref<16x32xbf16, #tpu.memory_space<vmem>>, vector<16x32xbf16>
    %c0_48 = arith.constant 0 : index
    %c0_49 = arith.constant 0 : index
    %115 = vector.load %arg14[%c0_48, %c0_49] : memref<1x32xf32, #tpu.memory_space<vmem>>, vector<1x32xf32>
    %116 = arith.truncf %103 : vector<8x16xf32> to vector<8x16xbf16>
    %117 = arith.truncf %108 : vector<16x16xf32> to vector<16x16xbf16>
    %118 = arith.truncf %113 : vector<16x16xf32> to vector<16x16xbf16>
    %119 = vector.extract_strided_slice %116 {offsets = [0, 0], sizes = [8, 8], strides = [1, 1]} : vector<8x16xbf16> to vector<8x8xbf16>
    %120 = vector.extract_strided_slice %117 {offsets = [0, 0], sizes = [16, 8], strides = [1, 1]} : vector<16x16xbf16> to vector<16x8xbf16>
    %cst_50 = arith.constant dense<0.000000e+00> : vector<8x16xf32>
    %121 = tpu.matmul %119, %120, %cst_50 {dimension_numbers = #tpu.dot_dimension_numbers<[1], [1], [0], [0], [0, 0, 1, 0], [], []>} : vector<8x8xbf16>, vector<16x8xbf16>, vector<8x16xf32> -> vector<8x16xf32>
    %cst_51 = arith.constant dense<0xFF800000> : vector<8xf32>
    %122 = vector.multi_reduction <maximumf>, %121, %cst_51 [1] : vector<8x16xf32> to vector<8xf32>
    %123 = vector.shape_cast %122 : vector<8xf32> to vector<8x1xf32>
    %124 = vector.broadcast %123 : vector<8x1xf32> to vector<8x16xf32>
    %125 = arith.subf %121, %124 : vector<8x16xf32>
    %126 = math.exp %125 : vector<8x16xf32>
    %cst_52 = arith.constant dense<0.000000e+00> : vector<8xf32>
    %127 = vector.multi_reduction <add>, %126, %cst_52 [1] : vector<8x16xf32> to vector<8xf32>
    %128 = vector.shape_cast %127 : vector<8xf32> to vector<8x1xf32>
    %129 = arith.truncf %126 : vector<8x16xf32> to vector<8x16xbf16>
    %130 = vector.extract_strided_slice %118 {offsets = [0, 0], sizes = [16, 8], strides = [1, 1]} : vector<16x16xbf16> to vector<16x8xbf16>
    %cst_53 = arith.constant dense<0.000000e+00> : vector<8x8xf32>
    %131 = tpu.matmul %129, %130, %cst_53 {dimension_numbers = #tpu.dot_dimension_numbers<[1], [0], [0], [1], [0, 0, 1, 1], [], []>} : vector<8x16xbf16>, vector<16x8xbf16>, vector<8x8xf32> -> vector<8x8xf32>
    %132 = tpu.reciprocal %128 {approx = true} : vector<8x1xf32> -> vector<8x1xf32>
    %133 = vector.broadcast %132 : vector<8x1xf32> to vector<8x8xf32>
    %134 = arith.mulf %131, %133 : vector<8x8xf32>
    %135 = arith.truncf %134 : vector<8x8xf32> to vector<8x8xbf16>
    %136 = vector.extract_strided_slice %114 {offsets = [0, 0], sizes = [8, 32], strides = [1, 1]} : vector<16x32xbf16> to vector<8x32xbf16>
    %cst_54 = arith.constant dense<0.000000e+00> : vector<8x32xf32>
    %137 = tpu.matmul %135, %136, %cst_54 {dimension_numbers = #tpu.dot_dimension_numbers<[1], [0], [0], [1], [0, 0, 1, 1], [], []>} : vector<8x8xbf16>, vector<8x32xbf16>, vector<8x32xf32> -> vector<8x32xf32>
    %138 = vector.extract_strided_slice %116 {offsets = [0, 8], sizes = [8, 8], strides = [1, 1]} : vector<8x16xbf16> to vector<8x8xbf16>
    %139 = vector.extract_strided_slice %117 {offsets = [0, 8], sizes = [16, 8], strides = [1, 1]} : vector<16x16xbf16> to vector<16x8xbf16>
    %cst_55 = arith.constant dense<0.000000e+00> : vector<8x16xf32>
    %140 = tpu.matmul %138, %139, %cst_55 {dimension_numbers = #tpu.dot_dimension_numbers<[1], [1], [0], [0], [0, 0, 1, 0], [], []>} : vector<8x8xbf16>, vector<16x8xbf16>, vector<8x16xf32> -> vector<8x16xf32>
    %cst_56 = arith.constant dense<0xFF800000> : vector<8xf32>
    %141 = vector.multi_reduction <maximumf>, %140, %cst_56 [1] : vector<8x16xf32> to vector<8xf32>
    %142 = vector.shape_cast %141 : vector<8xf32> to vector<8x1xf32>
    %143 = vector.broadcast %142 : vector<8x1xf32> to vector<8x16xf32>
    %144 = arith.subf %140, %143 : vector<8x16xf32>
    %145 = math.exp %144 : vector<8x16xf32>
    %cst_57 = arith.constant dense<0.000000e+00> : vector<8xf32>
    %146 = vector.multi_reduction <add>, %145, %cst_57 [1] : vector<8x16xf32> to vector<8xf32>
    %147 = vector.shape_cast %146 : vector<8xf32> to vector<8x1xf32>
    %148 = arith.truncf %145 : vector<8x16xf32> to vector<8x16xbf16>
    %149 = vector.extract_strided_slice %118 {offsets = [0, 8], sizes = [16, 8], strides = [1, 1]} : vector<16x16xbf16> to vector<16x8xbf16>
    %cst_58 = arith.constant dense<0.000000e+00> : vector<8x8xf32>
    %150 = tpu.matmul %148, %149, %cst_58 {dimension_numbers = #tpu.dot_dimension_numbers<[1], [0], [0], [1], [0, 0, 1, 1], [], []>} : vector<8x16xbf16>, vector<16x8xbf16>, vector<8x8xf32> -> vector<8x8xf32>
    %151 = tpu.reciprocal %147 {approx = true} : vector<8x1xf32> -> vector<8x1xf32>
    %152 = vector.broadcast %151 : vector<8x1xf32> to vector<8x8xf32>
    %153 = arith.mulf %150, %152 : vector<8x8xf32>
    %154 = arith.truncf %153 : vector<8x8xf32> to vector<8x8xbf16>
    %155 = vector.extract_strided_slice %114 {offsets = [8, 0], sizes = [8, 32], strides = [1, 1]} : vector<16x32xbf16> to vector<8x32xbf16>
    %cst_59 = arith.constant dense<0.000000e+00> : vector<8x32xf32>
    %156 = tpu.matmul %154, %155, %cst_59 {dimension_numbers = #tpu.dot_dimension_numbers<[1], [0], [0], [1], [0, 0, 1, 1], [], []>} : vector<8x8xbf16>, vector<8x32xbf16>, vector<8x32xf32> -> vector<8x32xf32>
    %157 = arith.addf %137, %156 : vector<8x32xf32>
    %158 = vector.broadcast %115 : vector<1x32xf32> to vector<8x32xf32>
    %159 = arith.addf %157, %158 : vector<8x32xf32>
    %160 = arith.addf %159, %92 : vector<8x32xf32>
    %c0_60 = arith.constant 0 : index
    %c0_61 = arith.constant 0 : index
    %161 = vector.load %arg15[%c0_60, %c0_61] : memref<1x32xf32, #tpu.memory_space<vmem>>, vector<1x32xf32>
    %c0_62 = arith.constant 0 : index
    %c0_63 = arith.constant 0 : index
    %162 = vector.load %arg16[%c0_62, %c0_63] : memref<1x32xf32, #tpu.memory_space<vmem>>, vector<1x32xf32>
    %cst_64 = arith.constant dense<0.000000e+00> : vector<8xf32>
    %163 = vector.multi_reduction <add>, %160, %cst_64 [1] : vector<8x32xf32> to vector<8xf32>
    %164 = vector.shape_cast %163 : vector<8xf32> to vector<8x1xf32>
    %cst_65 = arith.constant 3.200000e+01 : f32
    %165 = vector.broadcast %cst_65 : f32 to vector<8x1xf32>
    %166 = arith.divf %164, %165 : vector<8x1xf32>
    %167 = vector.broadcast %166 : vector<8x1xf32> to vector<8x32xf32>
    %168 = arith.subf %160, %167 : vector<8x32xf32>
    %169 = arith.mulf %168, %168 : vector<8x32xf32>
    %cst_66 = arith.constant dense<0.000000e+00> : vector<8xf32>
    %170 = vector.multi_reduction <add>, %169, %cst_66 [1] : vector<8x32xf32> to vector<8xf32>
    %171 = vector.shape_cast %170 : vector<8xf32> to vector<8x1xf32>
    %cst_67 = arith.constant 3.200000e+01 : f32
    %172 = vector.broadcast %cst_67 : f32 to vector<8x1xf32>
    %173 = arith.divf %171, %172 : vector<8x1xf32>
    %cst_68 = arith.constant 9.99999974E-6 : f32
    %174 = vector.broadcast %cst_68 : f32 to vector<8x1xf32>
    %175 = arith.addf %173, %174 : vector<8x1xf32>
    %176 = math.rsqrt %175 : vector<8x1xf32>
    %177 = vector.broadcast %176 : vector<8x1xf32> to vector<8x32xf32>
    %178 = arith.mulf %168, %177 : vector<8x32xf32>
    %179 = vector.broadcast %161 : vector<1x32xf32> to vector<8x32xf32>
    %180 = arith.mulf %178, %179 : vector<8x32xf32>
    %181 = vector.broadcast %162 : vector<1x32xf32> to vector<8x32xf32>
    %182 = arith.addf %180, %181 : vector<8x32xf32>
    %183 = arith.truncf %182 : vector<8x32xf32> to vector<8x32xbf16>
    %c0_69 = arith.constant 0 : index
    %c0_70 = arith.constant 0 : index
    %184 = vector.load %arg17[%c0_69, %c0_70] : memref<32x64xbf16, #tpu.memory_space<vmem>>, vector<32x64xbf16>
    %cst_71 = arith.constant dense<0.000000e+00> : vector<8x64xf32>
    %185 = tpu.matmul %183, %184, %cst_71 {dimension_numbers = #tpu.dot_dimension_numbers<[1], [0], [0], [1], [0, 0, 1, 1], [], []>} : vector<8x32xbf16>, vector<32x64xbf16>, vector<8x64xf32> -> vector<8x64xf32>
    %c0_72 = arith.constant 0 : index
    %c0_73 = arith.constant 0 : index
    %186 = vector.load %arg18[%c0_72, %c0_73] : memref<1x64xf32, #tpu.memory_space<vmem>>, vector<1x64xf32>
    %187 = vector.broadcast %186 : vector<1x64xf32> to vector<8x64xf32>
    %188 = arith.addf %185, %187 : vector<8x64xf32>
    %cst_74 = arith.constant 0.000000e+00 : f32
    %189 = vector.broadcast %cst_74 : f32 to vector<8x64xf32>
    %190 = arith.maximumf %188, %189 : vector<8x64xf32>
    %191 = arith.truncf %190 : vector<8x64xf32> to vector<8x64xbf16>
    %c0_75 = arith.constant 0 : index
    %c0_76 = arith.constant 0 : index
    %192 = vector.load %arg19[%c0_75, %c0_76] : memref<64x32xbf16, #tpu.memory_space<vmem>>, vector<64x32xbf16>
    %cst_77 = arith.constant dense<0.000000e+00> : vector<8x32xf32>
    %193 = tpu.matmul %191, %192, %cst_77 {dimension_numbers = #tpu.dot_dimension_numbers<[1], [0], [0], [1], [0, 0, 1, 1], [], []>} : vector<8x64xbf16>, vector<64x32xbf16>, vector<8x32xf32> -> vector<8x32xf32>
    %c0_78 = arith.constant 0 : index
    %c0_79 = arith.constant 0 : index
    %194 = vector.load %arg20[%c0_78, %c0_79] : memref<1x32xf32, #tpu.memory_space<vmem>>, vector<1x32xf32>
    %195 = vector.broadcast %194 : vector<1x32xf32> to vector<8x32xf32>
    %196 = arith.addf %193, %195 : vector<8x32xf32>
    %197 = arith.addf %196, %182 : vector<8x32xf32>
    %c0_80 = arith.constant 0 : index
    %c0_81 = arith.constant 0 : index
    %198 = vector.load %arg21[%c0_80, %c0_81] : memref<1x32xf32, #tpu.memory_space<vmem>>, vector<1x32xf32>
    %c0_82 = arith.constant 0 : index
    %c0_83 = arith.constant 0 : index
    %199 = vector.load %arg22[%c0_82, %c0_83] : memref<1x32xf32, #tpu.memory_space<vmem>>, vector<1x32xf32>
    %cst_84 = arith.constant dense<0.000000e+00> : vector<8xf32>
    %200 = vector.multi_reduction <add>, %197, %cst_84 [1] : vector<8x32xf32> to vector<8xf32>
    %201 = vector.shape_cast %200 : vector<8xf32> to vector<8x1xf32>
    %cst_85 = arith.constant 3.200000e+01 : f32
    %202 = vector.broadcast %cst_85 : f32 to vector<8x1xf32>
    %203 = arith.divf %201, %202 : vector<8x1xf32>
    %204 = vector.broadcast %203 : vector<8x1xf32> to vector<8x32xf32>
    %205 = arith.subf %197, %204 : vector<8x32xf32>
    %206 = arith.mulf %205, %205 : vector<8x32xf32>
    %cst_86 = arith.constant dense<0.000000e+00> : vector<8xf32>
    %207 = vector.multi_reduction <add>, %206, %cst_86 [1] : vector<8x32xf32> to vector<8xf32>
    %208 = vector.shape_cast %207 : vector<8xf32> to vector<8x1xf32>
    %cst_87 = arith.constant 3.200000e+01 : f32
    %209 = vector.broadcast %cst_87 : f32 to vector<8x1xf32>
    %210 = arith.divf %208, %209 : vector<8x1xf32>
    %cst_88 = arith.constant 9.99999974E-6 : f32
    %211 = vector.broadcast %cst_88 : f32 to vector<8x1xf32>
    %212 = arith.addf %210, %211 : vector<8x1xf32>
    %213 = math.rsqrt %212 : vector<8x1xf32>
    %214 = vector.broadcast %213 : vector<8x1xf32> to vector<8x32xf32>
    %215 = arith.mulf %205, %214 : vector<8x32xf32>
    %216 = vector.broadcast %198 : vector<1x32xf32> to vector<8x32xf32>
    %217 = arith.mulf %215, %216 : vector<8x32xf32>
    %218 = vector.broadcast %199 : vector<1x32xf32> to vector<8x32xf32>
    %219 = arith.addf %217, %218 : vector<8x32xf32>
    %220 = arith.truncf %219 : vector<8x32xf32> to vector<8x32xbf16>
    %c0_89 = arith.constant 0 : index
    %c0_90 = arith.constant 0 : index
    %c0_91 = arith.constant 0 : index
    %221 = vector.load %arg23[%c0_89, %c0_90, %c0_91] : memref<1x8x32xbf16, #tpu.memory_space<vmem>>, vector<1x8x32xbf16>
    %222 = vector.shape_cast %221 : vector<1x8x32xbf16> to vector<8x32xbf16>
    %223 = vector.shape_cast %220 : vector<8x32xbf16> to vector<1x8x32xbf16>
    tpu.vector_store %arg23[%c0_89, %c0_90, %c0_91], %223 {strides = array<i32>} : memref<1x8x32xbf16, #tpu.memory_space<vmem>>, vector<1x8x32xbf16>,
    return
  }
  func.func @transform_0(%arg0: i32) -> (i32, i32, i32) {
    %c0_i32 = arith.constant 0 : i32
    %c0_i32_0 = arith.constant 0 : i32
    %c0_i32_1 = arith.constant 0 : i32
    return %arg0, %c0_i32, %c0_i32_0 : i32, i32, i32
  }
  func.func @transform_1(%arg0: i32) -> (i32, i32, i32) {
    %c0_i32 = arith.constant 0 : i32
    %c0_i32_0 = arith.constant 0 : i32
    %c0_i32_1 = arith.constant 0 : i32
    return %arg0, %c0_i32, %c0_i32_0 : i32, i32, i32
  }
  func.func @transform_2(%arg0: i32) -> (i32, i32, i32) {
    %c0_i32 = arith.constant 0 : i32
    %c0_i32_0 = arith.constant 0 : i32
    %c0_i32_1 = arith.constant 0 : i32
    return %arg0, %c0_i32, %c0_i32_0 : i32, i32, i32
  }
  func.func @transform_3(%arg0: i32) -> (i32, i32, i32) {
    %c0_i32 = arith.constant 0 : i32
    %c0_i32_0 = arith.constant 0 : i32
    %c0_i32_1 = arith.constant 0 : i32
    return %arg0, %c0_i32, %c0_i32_0 : i32, i32, i32
  }
  func.func @transform_4(%arg0: i32) -> (i32, i32) {
    %c0_i32 = arith.constant 0 : i32
    %c0_i32_0 = arith.constant 0 : i32
    %c0_i32_1 = arith.constant 0 : i32
    return %c0_i32, %c0_i32_0 : i32, i32
  }
  func.func @transform_5(%arg0: i32) -> (i32, i32) {
    %c0_i32 = arith.constant 0 : i32
    %c0_i32_0 = arith.constant 0 : i32
    %c0_i32_1 = arith.constant 0 : i32
    return %c0_i32, %c0_i32_0 : i32, i32
  }
  func.func @transform_6(%arg0: i32) -> (i32, i32) {
    %c0_i32 = arith.constant 0 : i32
    %c0_i32_0 = arith.constant 0 : i32
    %c0_i32_1 = arith.constant 0 : i32
    return %c0_i32, %c0_i32_0 : i32, i32
  }
  func.func @transform_7(%arg0: i32) -> (i32, i32) {
    %c0_i32 = arith.constant 0 : i32
    %c0_i32_0 = arith.constant 0 : i32
    %c0_i32_1 = arith.constant 0 : i32
    return %c0_i32, %c0_i32_0 : i32, i32
  }
  func.func @transform_8(%arg0: i32) -> (i32, i32) {
    %c0_i32 = arith.constant 0 : i32
    %c0_i32_0 = arith.constant 0 : i32
    %c0_i32_1 = arith.constant 0 : i32
    return %c0_i32, %c0_i32_0 : i32, i32
  }
  func.func @transform_9(%arg0: i32) -> (i32, i32) {
    %c0_i32 = arith.constant 0 : i32
    %c0_i32_0 = arith.constant 0 : i32
    %c0_i32_1 = arith.constant 0 : i32
    return %c0_i32, %c0_i32_0 : i32, i32
  }
  func.func @transform_10(%arg0: i32) -> (i32, i32) {
    %c0_i32 = arith.constant 0 : i32
    %c0_i32_0 = arith.constant 0 : i32
    %c0_i32_1 = arith.constant 0 : i32
    return %c0_i32, %c0_i32_0 : i32, i32
  }
  func.func @transform_11(%arg0: i32) -> (i32, i32) {
    %c0_i32 = arith.constant 0 : i32
    %c0_i32_0 = arith.constant 0 : i32
    %c0_i32_1 = arith.constant 0 : i32
    return %c0_i32, %c0_i32_0 : i32, i32
  }
  func.func @transform_12(%arg0: i32) -> (i32, i32) {
    %c0_i32 = arith.constant 0 : i32
    %c0_i32_0 = arith.constant 0 : i32
    %c0_i32_1 = arith.constant 0 : i32
    return %c0_i32, %c0_i32_0 : i32, i32
  }
  func.func @transform_13(%arg0: i32) -> (i32, i32) {
    %c0_i32 = arith.constant 0 : i32
    %c0_i32_0 = arith.constant 0 : i32
    %c0_i32_1 = arith.constant 0 : i32
    return %c0_i32, %c0_i32_0 : i32, i32
  }
  func.func @transform_14(%arg0: i32) -> (i32, i32) {
    %c0_i32 = arith.constant 0 : i32
    %c0_i32_0 = arith.constant 0 : i32
    %c0_i32_1 = arith.constant 0 : i32
    return %c0_i32, %c0_i32_0 : i32, i32
  }
  func.func @transform_15(%arg0: i32) -> (i32, i32) {
    %c0_i32 = arith.constant 0 : i32
    %c0_i32_0 = arith.constant 0 : i32
    %c0_i32_1 = arith.constant 0 : i32
    return %c0_i32, %c0_i32_0 : i32, i32
  }
  func.func @transform_16(%arg0: i32) -> (i32, i32) {
    %c0_i32 = arith.constant 0 : i32
    %c0_i32_0 = arith.constant 0 : i32
    %c0_i32_1 = arith.constant 0 : i32
    return %c0_i32, %c0_i32_0 : i32, i32
  }
  func.func @transform_17(%arg0: i32) -> (i32, i32) {
    %c0_i32 = arith.constant 0 : i32
    %c0_i32_0 = arith.constant 0 : i32
    %c0_i32_1 = arith.constant 0 : i32
    return %c0_i32, %c0_i32_0 : i32, i32
  }
  func.func @transform_18(%arg0: i32) -> (i32, i32) {
    %c0_i32 = arith.constant 0 : i32
    %c0_i32_0 = arith.constant 0 : i32
    %c0_i32_1 = arith.constant 0 : i32
    return %c0_i32, %c0_i32_0 : i32, i32
  }
  func.func @transform_19(%arg0: i32) -> (i32, i32) {
    %c0_i32 = arith.constant 0 : i32
    %c0_i32_0 = arith.constant 0 : i32
    %c0_i32_1 = arith.constant 0 : i32
    return %c0_i32, %c0_i32_0 : i32, i32
  }
  func.func @transform_20(%arg0: i32) -> (i32, i32) {
    %c0_i32 = arith.constant 0 : i32
    %c0_i32_0 = arith.constant 0 : i32
    %c0_i32_1 = arith.constant 0 : i32
    return %c0_i32, %c0_i32_0 : i32, i32
  }
  func.func @transform_21(%arg0: i32) -> (i32, i32) {
    %c0_i32 = arith.constant 0 : i32
    %c0_i32_0 = arith.constant 0 : i32
    %c0_i32_1 = arith.constant 0 : i32
    return %c0_i32, %c0_i32_0 : i32, i32
  }
  func.func @transform_22(%arg0: i32) -> (i32, i32, i32) {
    %c0_i32 = arith.constant 0 : i32
    %c0_i32_0 = arith.constant 0 : i32
    %c0_i32_1 = arith.constant 0 : i32
    return %arg0, %c0_i32, %c0_i32_0 : i32, i32, i32
  }
}

module attributes {stable_mosaic.version = 11 : i64} {
  func.func @fused_i2t_kernel(%arg0: i32, %arg1: i32, %arg2: memref<1x8x32xbf16, #tpu.memory_space<vmem>>, %arg3: memref<1x8x32xbf16, #tpu.memory_space<vmem>>, %arg4: memref<1x8x32xbf16, #tpu.memory_space<vmem>>, %arg5: memref<1x8x32xbf16, #tpu.memory_space<vmem>>, %arg6: memref<32x48xbf16, #tpu.memory_space<vmem>>, %arg7: memref<1x48xf32, #tpu.memory_space<vmem>>, %arg8: memref<16x32xbf16, #tpu.memory_space<vmem>>, %arg9: memref<1x32xf32, #tpu.memory_space<vmem>>, %arg10: memref<1x32xf32, #tpu.memory_space<vmem>>, %arg11: memref<1x32xf32, #tpu.memory_space<vmem>>, %arg12: memref<1x8x32xbf16, #tpu.memory_space<vmem>>) attributes {dimension_semantics = [#tpu.dimension_semantics<parallel>, #tpu.dimension_semantics<parallel>], iteration_bounds = array<i64: 2, 2>, scalar_prefetch = 0 : i64, scratch_operands = 0 : i64, tpu.core_type = #tpu.core_type<tc>, window_params = [{transform_indices = @transform_0, window_bounds = array<i64: 1, 8, 32>}, {transform_indices = @transform_1, window_bounds = array<i64: 1, 8, 32>}, {transform_indices = @transform_2, window_bounds = array<i64: 1, 8, 32>}, {transform_indices = @transform_3, window_bounds = array<i64: 1, 8, 32>}, {pipeline_mode = #tpu.pipeline_mode<synchronous>, transform_indices = @transform_4, window_bounds = array<i64: 32, 48>}, {pipeline_mode = #tpu.pipeline_mode<synchronous>, transform_indices = @transform_5, window_bounds = array<i64: 1, 48>}, {pipeline_mode = #tpu.pipeline_mode<synchronous>, transform_indices = @transform_6, window_bounds = array<i64: 16, 32>}, {pipeline_mode = #tpu.pipeline_mode<synchronous>, transform_indices = @transform_7, window_bounds = array<i64: 1, 32>}, {pipeline_mode = #tpu.pipeline_mode<synchronous>, transform_indices = @transform_8, window_bounds = array<i64: 1, 32>}, {pipeline_mode = #tpu.pipeline_mode<synchronous>, transform_indices = @transform_9, window_bounds = array<i64: 1, 32>}, {transform_indices = @transform_10, window_bounds = array<i64: 1, 8, 32>}]} {
    %c0 = arith.constant 0 : index
    %c0_0 = arith.constant 0 : index
    %c0_1 = arith.constant 0 : index
    %0 = vector.load %arg2[%c0, %c0_0, %c0_1] : memref<1x8x32xbf16, #tpu.memory_space<vmem>>, vector<1x8x32xbf16>
    %1 = vector.shape_cast %0 : vector<1x8x32xbf16> to vector<8x32xbf16>
    %c0_2 = arith.constant 0 : index
    %c0_3 = arith.constant 0 : index
    %c0_4 = arith.constant 0 : index
    %2 = vector.load %arg3[%c0_2, %c0_3, %c0_4] : memref<1x8x32xbf16, #tpu.memory_space<vmem>>, vector<1x8x32xbf16>
    %3 = vector.shape_cast %2 : vector<1x8x32xbf16> to vector<8x32xbf16>
    %c0_5 = arith.constant 0 : index
    %c0_6 = arith.constant 0 : index
    %c0_7 = arith.constant 0 : index
    %4 = vector.load %arg4[%c0_5, %c0_6, %c0_7] : memref<1x8x32xbf16, #tpu.memory_space<vmem>>, vector<1x8x32xbf16>
    %5 = vector.shape_cast %4 : vector<1x8x32xbf16> to vector<8x32xbf16>
    %c0_8 = arith.constant 0 : index
    %c0_9 = arith.constant 0 : index
    %c0_10 = arith.constant 0 : index
    %6 = vector.load %arg5[%c0_8, %c0_9, %c0_10] : memref<1x8x32xbf16, #tpu.memory_space<vmem>>, vector<1x8x32xbf16>
    %7 = vector.shape_cast %6 : vector<1x8x32xbf16> to vector<8x32xbf16>
    %c0_11 = arith.constant 0 : index
    %c0_12 = arith.constant 0 : index
    %8 = vector.load %arg6[%c0_11, %c0_12] : memref<32x48xbf16, #tpu.memory_space<vmem>>, vector<32x48xbf16>
    %c0_13 = arith.constant 0 : index
    %c0_14 = arith.constant 0 : index
    %9 = vector.load %arg7[%c0_13, %c0_14] : memref<1x48xf32, #tpu.memory_space<vmem>>, vector<1x48xf32>
    %10 = arith.addf %1, %3 : vector<8x32xbf16>
    %11 = arith.addf %5, %7 : vector<8x32xbf16>
    %12 = vector.extract_strided_slice %8 {offsets = [0, 0], sizes = [32, 16], strides = [1, 1]} : vector<32x48xbf16> to vector<32x16xbf16>
    %cst = arith.constant dense<0.000000e+00> : vector<8x16xf32>
    %13 = tpu.matmul %10, %12, %cst {dimension_numbers = #tpu.dot_dimension_numbers<[1], [0], [0], [1], [0, 0, 1, 1], [], []>} : vector<8x32xbf16>, vector<32x16xbf16>, vector<8x16xf32> -> vector<8x16xf32>
    %14 = vector.extract_strided_slice %9 {offsets = [0, 0], sizes = [1, 16], strides = [1, 1]} : vector<1x48xf32> to vector<1x16xf32>
    %15 = vector.broadcast %14 : vector<1x16xf32> to vector<8x16xf32>
    %16 = arith.addf %13, %15 : vector<8x16xf32>
    %17 = vector.extract_strided_slice %8 {offsets = [0, 16], sizes = [32, 16], strides = [1, 1]} : vector<32x48xbf16> to vector<32x16xbf16>
    %cst_15 = arith.constant dense<0.000000e+00> : vector<8x16xf32>
    %18 = tpu.matmul %11, %17, %cst_15 {dimension_numbers = #tpu.dot_dimension_numbers<[1], [0], [0], [1], [0, 0, 1, 1], [], []>} : vector<8x32xbf16>, vector<32x16xbf16>, vector<8x16xf32> -> vector<8x16xf32>
    %19 = vector.extract_strided_slice %9 {offsets = [0, 16], sizes = [1, 16], strides = [1, 1]} : vector<1x48xf32> to vector<1x16xf32>
    %20 = vector.broadcast %19 : vector<1x16xf32> to vector<8x16xf32>
    %21 = arith.addf %18, %20 : vector<8x16xf32>
    %22 = vector.extract_strided_slice %8 {offsets = [0, 32], sizes = [32, 16], strides = [1, 1]} : vector<32x48xbf16> to vector<32x16xbf16>
    %cst_16 = arith.constant dense<0.000000e+00> : vector<8x16xf32>
    %23 = tpu.matmul %5, %22, %cst_16 {dimension_numbers = #tpu.dot_dimension_numbers<[1], [0], [0], [1], [0, 0, 1, 1], [], []>} : vector<8x32xbf16>, vector<32x16xbf16>, vector<8x16xf32> -> vector<8x16xf32>
    %24 = vector.extract_strided_slice %9 {offsets = [0, 32], sizes = [1, 16], strides = [1, 1]} : vector<1x48xf32> to vector<1x16xf32>
    %25 = vector.broadcast %24 : vector<1x16xf32> to vector<8x16xf32>
    %26 = arith.addf %23, %25 : vector<8x16xf32>
    %c0_17 = arith.constant 0 : index
    %c0_18 = arith.constant 0 : index
    %27 = vector.load %arg8[%c0_17, %c0_18] : memref<16x32xbf16, #tpu.memory_space<vmem>>, vector<16x32xbf16>
    %c0_19 = arith.constant 0 : index
    %c0_20 = arith.constant 0 : index
    %28 = vector.load %arg9[%c0_19, %c0_20] : memref<1x32xf32, #tpu.memory_space<vmem>>, vector<1x32xf32>
    %29 = arith.truncf %16 : vector<8x16xf32> to vector<8x16xbf16>
    %30 = arith.truncf %21 : vector<8x16xf32> to vector<8x16xbf16>
    %31 = arith.truncf %26 : vector<8x16xf32> to vector<8x16xbf16>
    %32 = vector.extract_strided_slice %29 {offsets = [0, 0], sizes = [8, 8], strides = [1, 1]} : vector<8x16xbf16> to vector<8x8xbf16>
    %33 = vector.extract_strided_slice %30 {offsets = [0, 0], sizes = [8, 8], strides = [1, 1]} : vector<8x16xbf16> to vector<8x8xbf16>
    %cst_21 = arith.constant dense<0.000000e+00> : vector<8x8xf32>
    %34 = tpu.matmul %32, %33, %cst_21 {dimension_numbers = #tpu.dot_dimension_numbers<[1], [1], [0], [0], [0, 0, 1, 0], [], []>} : vector<8x8xbf16>, vector<8x8xbf16>, vector<8x8xf32> -> vector<8x8xf32>
    %cst_22 = arith.constant dense<0xFF800000> : vector<8xf32>
    %35 = vector.multi_reduction <maximumf>, %34, %cst_22 [1] : vector<8x8xf32> to vector<8xf32>
    %36 = vector.shape_cast %35 : vector<8xf32> to vector<8x1xf32>
    %37 = vector.broadcast %36 : vector<8x1xf32> to vector<8x8xf32>
    %38 = arith.subf %34, %37 : vector<8x8xf32>
    %39 = math.exp %38 : vector<8x8xf32>
    %cst_23 = arith.constant dense<0.000000e+00> : vector<8xf32>
    %40 = vector.multi_reduction <add>, %39, %cst_23 [1] : vector<8x8xf32> to vector<8xf32>
    %41 = vector.shape_cast %40 : vector<8xf32> to vector<8x1xf32>
    %42 = arith.truncf %39 : vector<8x8xf32> to vector<8x8xbf16>
    %43 = vector.extract_strided_slice %31 {offsets = [0, 0], sizes = [8, 8], strides = [1, 1]} : vector<8x16xbf16> to vector<8x8xbf16>
    %cst_24 = arith.constant dense<0.000000e+00> : vector<8x8xf32>
    %44 = tpu.matmul %42, %43, %cst_24 {dimension_numbers = #tpu.dot_dimension_numbers<[1], [0], [0], [1], [0, 0, 1, 1], [], []>} : vector<8x8xbf16>, vector<8x8xbf16>, vector<8x8xf32> -> vector<8x8xf32>
    %45 = tpu.reciprocal %41 {approx = true} : vector<8x1xf32> -> vector<8x1xf32>
    %46 = vector.broadcast %45 : vector<8x1xf32> to vector<8x8xf32>
    %47 = arith.mulf %44, %46 : vector<8x8xf32>
    %48 = arith.truncf %47 : vector<8x8xf32> to vector<8x8xbf16>
    %49 = vector.extract_strided_slice %27 {offsets = [0, 0], sizes = [8, 32], strides = [1, 1]} : vector<16x32xbf16> to vector<8x32xbf16>
    %cst_25 = arith.constant dense<0.000000e+00> : vector<8x32xf32>
    %50 = tpu.matmul %48, %49, %cst_25 {dimension_numbers = #tpu.dot_dimension_numbers<[1], [0], [0], [1], [0, 0, 1, 1], [], []>} : vector<8x8xbf16>, vector<8x32xbf16>, vector<8x32xf32> -> vector<8x32xf32>
    %51 = vector.extract_strided_slice %29 {offsets = [0, 8], sizes = [8, 8], strides = [1, 1]} : vector<8x16xbf16> to vector<8x8xbf16>
    %52 = vector.extract_strided_slice %30 {offsets = [0, 8], sizes = [8, 8], strides = [1, 1]} : vector<8x16xbf16> to vector<8x8xbf16>
    %cst_26 = arith.constant dense<0.000000e+00> : vector<8x8xf32>
    %53 = tpu.matmul %51, %52, %cst_26 {dimension_numbers = #tpu.dot_dimension_numbers<[1], [1], [0], [0], [0, 0, 1, 0], [], []>} : vector<8x8xbf16>, vector<8x8xbf16>, vector<8x8xf32> -> vector<8x8xf32>
    %cst_27 = arith.constant dense<0xFF800000> : vector<8xf32>
    %54 = vector.multi_reduction <maximumf>, %53, %cst_27 [1] : vector<8x8xf32> to vector<8xf32>
    %55 = vector.shape_cast %54 : vector<8xf32> to vector<8x1xf32>
    %56 = vector.broadcast %55 : vector<8x1xf32> to vector<8x8xf32>
    %57 = arith.subf %53, %56 : vector<8x8xf32>
    %58 = math.exp %57 : vector<8x8xf32>
    %cst_28 = arith.constant dense<0.000000e+00> : vector<8xf32>
    %59 = vector.multi_reduction <add>, %58, %cst_28 [1] : vector<8x8xf32> to vector<8xf32>
    %60 = vector.shape_cast %59 : vector<8xf32> to vector<8x1xf32>
    %61 = arith.truncf %58 : vector<8x8xf32> to vector<8x8xbf16>
    %62 = vector.extract_strided_slice %31 {offsets = [0, 8], sizes = [8, 8], strides = [1, 1]} : vector<8x16xbf16> to vector<8x8xbf16>
    %cst_29 = arith.constant dense<0.000000e+00> : vector<8x8xf32>
    %63 = tpu.matmul %61, %62, %cst_29 {dimension_numbers = #tpu.dot_dimension_numbers<[1], [0], [0], [1], [0, 0, 1, 1], [], []>} : vector<8x8xbf16>, vector<8x8xbf16>, vector<8x8xf32> -> vector<8x8xf32>
    %64 = tpu.reciprocal %60 {approx = true} : vector<8x1xf32> -> vector<8x1xf32>
    %65 = vector.broadcast %64 : vector<8x1xf32> to vector<8x8xf32>
    %66 = arith.mulf %63, %65 : vector<8x8xf32>
    %67 = arith.truncf %66 : vector<8x8xf32> to vector<8x8xbf16>
    %68 = vector.extract_strided_slice %27 {offsets = [8, 0], sizes = [8, 32], strides = [1, 1]} : vector<16x32xbf16> to vector<8x32xbf16>
    %cst_30 = arith.constant dense<0.000000e+00> : vector<8x32xf32>
    %69 = tpu.matmul %67, %68, %cst_30 {dimension_numbers = #tpu.dot_dimension_numbers<[1], [0], [0], [1], [0, 0, 1, 1], [], []>} : vector<8x8xbf16>, vector<8x32xbf16>, vector<8x32xf32> -> vector<8x32xf32>
    %70 = arith.addf %50, %69 : vector<8x32xf32>
    %71 = vector.broadcast %28 : vector<1x32xf32> to vector<8x32xf32>
    %72 = arith.addf %70, %71 : vector<8x32xf32>
    %73 = arith.extf %1 : vector<8x32xbf16> to vector<8x32xf32>
    %74 = arith.addf %72, %73 : vector<8x32xf32>
    %c0_31 = arith.constant 0 : index
    %c0_32 = arith.constant 0 : index
    %75 = vector.load %arg10[%c0_31, %c0_32] : memref<1x32xf32, #tpu.memory_space<vmem>>, vector<1x32xf32>
    %c0_33 = arith.constant 0 : index
    %c0_34 = arith.constant 0 : index
    %76 = vector.load %arg11[%c0_33, %c0_34] : memref<1x32xf32, #tpu.memory_space<vmem>>, vector<1x32xf32>
    %cst_35 = arith.constant dense<0.000000e+00> : vector<8xf32>
    %77 = vector.multi_reduction <add>, %74, %cst_35 [1] : vector<8x32xf32> to vector<8xf32>
    %78 = vector.shape_cast %77 : vector<8xf32> to vector<8x1xf32>
    %cst_36 = arith.constant 3.200000e+01 : f32
    %79 = vector.broadcast %cst_36 : f32 to vector<8x1xf32>
    %80 = arith.divf %78, %79 : vector<8x1xf32>
    %81 = vector.broadcast %80 : vector<8x1xf32> to vector<8x32xf32>
    %82 = arith.subf %74, %81 : vector<8x32xf32>
    %83 = arith.mulf %82, %82 : vector<8x32xf32>
    %cst_37 = arith.constant dense<0.000000e+00> : vector<8xf32>
    %84 = vector.multi_reduction <add>, %83, %cst_37 [1] : vector<8x32xf32> to vector<8xf32>
    %85 = vector.shape_cast %84 : vector<8xf32> to vector<8x1xf32>
    %cst_38 = arith.constant 3.200000e+01 : f32
    %86 = vector.broadcast %cst_38 : f32 to vector<8x1xf32>
    %87 = arith.divf %85, %86 : vector<8x1xf32>
    %cst_39 = arith.constant 9.99999974E-6 : f32
    %88 = vector.broadcast %cst_39 : f32 to vector<8x1xf32>
    %89 = arith.addf %87, %88 : vector<8x1xf32>
    %90 = math.rsqrt %89 : vector<8x1xf32>
    %91 = vector.broadcast %90 : vector<8x1xf32> to vector<8x32xf32>
    %92 = arith.mulf %82, %91 : vector<8x32xf32>
    %93 = vector.broadcast %75 : vector<1x32xf32> to vector<8x32xf32>
    %94 = arith.mulf %92, %93 : vector<8x32xf32>
    %95 = vector.broadcast %76 : vector<1x32xf32> to vector<8x32xf32>
    %96 = arith.addf %94, %95 : vector<8x32xf32>
    %97 = arith.truncf %96 : vector<8x32xf32> to vector<8x32xbf16>
    %c0_40 = arith.constant 0 : index
    %c0_41 = arith.constant 0 : index
    %c0_42 = arith.constant 0 : index
    %98 = vector.load %arg12[%c0_40, %c0_41, %c0_42] : memref<1x8x32xbf16, #tpu.memory_space<vmem>>, vector<1x8x32xbf16>
    %99 = vector.shape_cast %98 : vector<1x8x32xbf16> to vector<8x32xbf16>
    %100 = vector.shape_cast %97 : vector<8x32xbf16> to vector<1x8x32xbf16>
    tpu.vector_store %arg12[%c0_40, %c0_41, %c0_42], %100 {strides = array<i32>} : memref<1x8x32xbf16, #tpu.memory_space<vmem>>, vector<1x8x32xbf16>,
    return
  }
  func.func @transform_0(%arg0: i32, %arg1: i32) -> (i32, i32, i32) {
    %c0_i32 = arith.constant 0 : i32
    %c0_i32_0 = arith.constant 0 : i32
    return %arg0, %arg1, %c0_i32 : i32, i32, i32
  }
  func.func @transform_1(%arg0: i32, %arg1: i32) -> (i32, i32, i32) {
    %c0_i32 = arith.constant 0 : i32
    %c0_i32_0 = arith.constant 0 : i32
    return %arg0, %arg1, %c0_i32 : i32, i32, i32
  }
  func.func @transform_2(%arg0: i32, %arg1: i32) -> (i32, i32, i32) {
    %c0_i32 = arith.constant 0 : i32
    %c0_i32_0 = arith.constant 0 : i32
    %c0_i32_1 = arith.constant 0 : i32
    return %arg0, %c0_i32, %c0_i32_0 : i32, i32, i32
  }
  func.func @transform_3(%arg0: i32, %arg1: i32) -> (i32, i32, i32) {
    %c0_i32 = arith.constant 0 : i32
    %c0_i32_0 = arith.constant 0 : i32
    %c0_i32_1 = arith.constant 0 : i32
    return %arg0, %c0_i32, %c0_i32_0 : i32, i32, i32
  }
  func.func @transform_4(%arg0: i32, %arg1: i32) -> (i32, i32) {
    %c0_i32 = arith.constant 0 : i32
    %c0_i32_0 = arith.constant 0 : i32
    %c0_i32_1 = arith.constant 0 : i32
    return %c0_i32, %c0_i32_0 : i32, i32
  }
  func.func @transform_5(%arg0: i32, %arg1: i32) -> (i32, i32) {
    %c0_i32 = arith.constant 0 : i32
    %c0_i32_0 = arith.constant 0 : i32
    %c0_i32_1 = arith.constant 0 : i32
    return %c0_i32, %c0_i32_0 : i32, i32
  }
  func.func @transform_6(%arg0: i32, %arg1: i32) -> (i32, i32) {
    %c0_i32 = arith.constant 0 : i32
    %c0_i32_0 = arith.constant 0 : i32
    %c0_i32_1 = arith.constant 0 : i32
    return %c0_i32, %c0_i32_0 : i32, i32
  }
  func.func @transform_7(%arg0: i32, %arg1: i32) -> (i32, i32) {
    %c0_i32 = arith.constant 0 : i32
    %c0_i32_0 = arith.constant 0 : i32
    %c0_i32_1 = arith.constant 0 : i32
    return %c0_i32, %c0_i32_0 : i32, i32
  }
  func.func @transform_8(%arg0: i32, %arg1: i32) -> (i32, i32) {
    %c0_i32 = arith.constant 0 : i32
    %c0_i32_0 = arith.constant 0 : i32
    %c0_i32_1 = arith.constant 0 : i32
    return %c0_i32, %c0_i32_0 : i32, i32
  }
  func.func @transform_9(%arg0: i32, %arg1: i32) -> (i32, i32) {
    %c0_i32 = arith.constant 0 : i32
    %c0_i32_0 = arith.constant 0 : i32
    %c0_i32_1 = arith.constant 0 : i32
    return %c0_i32, %c0_i32_0 : i32, i32
  }
  func.func @transform_10(%arg0: i32, %arg1: i32) -> (i32, i32, i32) {
    %c0_i32 = arith.constant 0 : i32
    %c0_i32_0 = arith.constant 0 : i32
    return %arg0, %arg1, %c0_i32 : i32, i32, i32
  }
}

</mosaic_0001>

<llo_original>
// kernel: two_way_attention_block.3
$region0: #{two_way_attention_block.3}
  #allocation0 [shape = 'u32[]', space=smem, size = 0x4, offset = 0x4, fixed_abs, tag = 'smem constant byte address 0x4 - core index']
  #allocation1 [shape = 'u32[144,128]{1,0:T(1,128)}', space=vmem, size = 0x12000, scoped, tag = 'internal scratch']
  %s0 = inlined_call_operand.vmem [shape: bf16[2,16,32], index: 0, kind: input, shape index: {}]
  %s1 = inlined_call_operand.vmem [shape: bf16[2,16,32], index: 1, kind: input, shape index: {}]
  %s2 = inlined_call_operand.vmem [shape: bf16[2,8,32], index: 2, kind: input, shape index: {}]
  %s3 = inlined_call_operand.vmem [shape: bf16[2,8,32], index: 3, kind: input, shape index: {}]
  %s4 = inlined_call_operand.vmem [shape: bf16[32,48], index: 4, kind: input, shape index: {}]
  %s5 = inlined_call_operand.vmem [shape: f32[1,48], index: 5, kind: input, shape index: {}]
  %s6 = inlined_call_operand.vmem [shape: bf16[16,32], index: 6, kind: input, shape index: {}]
  %s7 = inlined_call_operand.vmem [shape: f32[1,32], index: 7, kind: input, shape index: {}]
  %s8 = inlined_call_operand.vmem [shape: f32[1,32], index: 8, kind: input, shape index: {}]
  %s9 = inlined_call_operand.vmem [shape: f32[1,32], index: 9, kind: input, shape index: {}]
  %s10 = inlined_call_operand.vmem [shape: bf16[2,16,32], index: 10, kind: output, shape index: {}]
  %s11 = sld [smem:[#allocation0]]
  $region73: #{two_way_attention_block.3} parent=0
    _
  %s13 = ssub.s32 1, %s11
  %s14 = scalar_select 0, %s13, %s11
  loop: start=0, step=1, limit=6
  $region2: #{two_way_attention_block.3} parent=0 // loop_pre_header
    _
  $region3: #{two_way_attention_block.3} parent=0 // loop_header
    %s16 = sphi 0, %s20
    %p17 = scmp.ge.s32.totalorder %s16, 6
    %s23 = sphi 0, %s35
    %s24 = sphi 0, %s31
    %s25 = sphi 0, %s23
    %s26 = sphi 0, %s24
    %s27 = sphi 0, %s25
    %s28 = sphi 0, %s26
    %s40 = sphi 0, %s42
    %s43 = sphi 0, %s40
    %s44 = sphi 0, %s43
    %s60 = sphi 0, %s44
    %s68 = sphi 0, %s70
    %s71 = sphi 0, %s68
    %s72 = sphi 0, %s71
    %s88 = sphi 0, %s72
    %s94 = sphi 0, %s96
    %s97 = sphi 0, %s94
    %s98 = sphi 0, %s97
    %s114 = sphi 0, %s98
    %s120 = sphi 0, %s122
    %s123 = sphi 0, %s120
    %s124 = sphi 0, %s123
    %s140 = sphi 0, %s124
    %s144 = sphi 0, %s144
    %s146 = sphi 0, %s144
    %s147 = sphi 0, %s146
    %s161 = sphi 0, %s147
    %s165 = sphi 0, %s165
    %s167 = sphi 0, %s165
    %s168 = sphi 0, %s167
    %s182 = sphi 0, %s168
    %s186 = sphi 0, %s186
    %s188 = sphi 0, %s186
    %s189 = sphi 0, %s188
    %s203 = sphi 0, %s189
    %s207 = sphi 0, %s207
    %s209 = sphi 0, %s207
    %s210 = sphi 0, %s209
    %s224 = sphi 0, %s210
    %s228 = sphi 0, %s228
    %s230 = sphi 0, %s228
    %s231 = sphi 0, %s230
    %s245 = sphi 0, %s231
    %s249 = sphi 0, %s249
    %s251 = sphi 0, %s249
    %s252 = sphi 0, %s251
    %s266 = sphi 0, %s252
    %s274 = sphi 0, %s276
    %s277 = sphi 0, %s274
    %s278 = sphi 0, %s277
    %s294 = sphi 0, %s278
  $region4: #{two_way_attention_block.3} parent=0 // loop_header_branch
    %19 = sbr.rel (%p17) target = $region8
  $region5: #{two_way_attention_block.3} parent=0 // loop_body
    %s21 = ssub.s32 %s16, 1
    %s22 = ssub.s32 %s16, 2
    %s29 = sadd.s32 1, %s24
    %p30 = scmp.ge.s32.totalorder %s29, 2
    %s31 = scalar_select %p30, 0, %s29
    %s32 = sadd.s32 1, %s23
    %s33 = scalar_select %p30, %s32, %s23
    %p34 = scmp.ge.s32.totalorder %s33, 2
    %s35 = scalar_select %p34, 0, %s33
    %s36 = ssub.s32 %s23, %s35
    %s37 = ssub.s32 %s24, %s31
    %s38 = sor.u32 %s36, %s37
    %p39 = scmp.eq.s32.totalorder %s38, 0
    %s41 = sadd.s32 %s40, 1
    %s42 = scalar_select %p39, %s40, %s41
    %p45 = pneg %p39
    %p46 = scmp.eq.s32.totalorder %s16, 3
    %p47 = por %p45, %p46
    %p48 = scmp.ne.s32.totalorder %s40, %s43
    %p49 = scmp.eq.s32.totalorder %s16, 0
    %p50 = por %p48, %p49
    %p51 = scmp.ne.s32.totalorder %s40, %s43
    %p52 = scmp.eq.s32.totalorder %s21, 3
    %p53 = por %p51, %p52
    %p54 = scmp.ne.s32.totalorder %s43, %s44
    %p55 = scmp.eq.s32.totalorder %s21, 0
    %p56 = por %p54, %p55
    %p57 = scmp.ne.s32.totalorder %s43, %s44
    %p58 = scmp.eq.s32.totalorder %s22, 3
    %p59 = por %p57, %p58
    %p61 = scmp.ne.s32.totalorder %s44, %s60
    %p62 = scmp.eq.s32.totalorder %s22, 0
    %p63 = por %p61, %p62
    %s64 = ssub.s32 %s23, %s35
    %s65 = ssub.s32 %s24, %s31
    %s66 = sor.u32 %s64, %s65
    %p67 = scmp.eq.s32.totalorder %s66, 0
    %s69 = sadd.s32 %s68, 1
    %s70 = scalar_select %p67, %s68, %s69
    %p73 = pneg %p67
    %p74 = scmp.eq.s32.totalorder %s16, 3
    %p75 = por %p73, %p74
    %p76 = scmp.ne.s32.totalorder %s68, %s71
    %p77 = scmp.eq.s32.totalorder %s16, 0
    %p78 = por %p76, %p77
    %p79 = scmp.ne.s32.totalorder %s68, %s71
    %p80 = scmp.eq.s32.totalorder %s21, 3
    %p81 = por %p79, %p80
    %p82 = scmp.ne.s32.totalorder %s71, %s72
    %p83 = scmp.eq.s32.totalorder %s21, 0
    %p84 = por %p82, %p83
    %p85 = scmp.ne.s32.totalorder %s71, %s72
    %p86 = scmp.eq.s32.totalorder %s22, 3
    %p87 = por %p85, %p86
    %p89 = scmp.ne.s32.totalorder %s72, %s88
    %p90 = scmp.eq.s32.totalorder %s22, 0
    %p91 = por %p89, %p90
    %s92 = ssub.s32 %s23, %s35
    %p93 = scmp.eq.s32.totalorder %s92, 0
    %s95 = sadd.s32 %s94, 1
    %s96 = scalar_select %p93, %s94, %s95
    %p99 = pneg %p93
    %p100 = scmp.eq.s32.totalorder %s16, 3
    %p101 = por %p99, %p100
    %p102 = scmp.ne.s32.totalorder %s94, %s97
    %p103 = scmp.eq.s32.totalorder %s16, 0
    %p104 = por %p102, %p103
    %p105 = scmp.ne.s32.totalorder %s94, %s97
    %p106 = scmp.eq.s32.totalorder %s21, 3
    %p107 = por %p105, %p106
    %p108 = scmp.ne.s32.totalorder %s97, %s98
    %p109 = scmp.eq.s32.totalorder %s21, 0
    %p110 = por %p108, %p109
    %p111 = scmp.ne.s32.totalorder %s97, %s98
    %p112 = scmp.eq.s32.totalorder %s22, 3
    %p113 = por %p111, %p112
    %p115 = scmp.ne.s32.totalorder %s98, %s114
    %p116 = scmp.eq.s32.totalorder %s22, 0
    %p117 = por %p115, %p116
    %s118 = ssub.s32 %s23, %s35
    %p119 = scmp.eq.s32.totalorder %s118, 0
    %s121 = sadd.s32 %s120, 1
    %s122 = scalar_select %p119, %s120, %s121
    %p125 = pneg %p119
    %p126 = scmp.eq.s32.totalorder %s16, 3
    %p127 = por %p125, %p126
    %p128 = scmp.ne.s32.totalorder %s120, %s123
    %p129 = scmp.eq.s32.totalorder %s16, 0
    %p130 = por %p128, %p129
    %p131 = scmp.ne.s32.totalorder %s120, %s123
    %p132 = scmp.eq.s32.totalorder %s21, 3
    %p133 = por %p131, %p132
    %p134 = scmp.ne.s32.totalorder %s123, %s124
    %p135 = scmp.eq.s32.totalorder %s21, 0
    %p136 = por %p134, %p135
    %p137 = scmp.ne.s32.totalorder %s123, %s124
    %p138 = scmp.eq.s32.totalorder %s22, 3
    %p139 = por %p137, %p138
    %p141 = scmp.ne.s32.totalorder %s124, %s140
    %p142 = scmp.eq.s32.totalorder %s22, 0
    %p143 = por %p141, %p142
    %s145 = sadd.s32 %s144, 1
    %p148 = scmp.eq.s32.totalorder %s16, 3
    %p149 = scmp.ne.s32.totalorder %s144, %s146
    %p150 = scmp.eq.s32.totalorder %s16, 0
    %p151 = por %p149, %p150
    %p152 = scmp.ne.s32.totalorder %s144, %s146
    %p153 = scmp.eq.s32.totalorder %s21, 3
    %p154 = por %p152, %p153
    %p155 = scmp.ne.s32.totalorder %s146, %s147
    %p156 = scmp.eq.s32.totalorder %s21, 0
    %p157 = por %p155, %p156
    %p158 = scmp.ne.s32.totalorder %s146, %s147
    %p159 = scmp.eq.s32.totalorder %s22, 3
    %p160 = por %p158, %p159
    %p162 = scmp.ne.s32.totalorder %s147, %s161
    %p163 = scmp.eq.s32.totalorder %s22, 0
    %p164 = por %p162, %p163
    %s166 = sadd.s32 %s165, 1
    %p169 = scmp.eq.s32.totalorder %s16, 3
    %p170 = scmp.ne.s32.totalorder %s165, %s167
    %p171 = scmp.eq.s32.totalorder %s16, 0
    %p172 = por %p170, %p171
    %p173 = scmp.ne.s32.totalorder %s165, %s167
    %p174 = scmp.eq.s32.totalorder %s21, 3
    %p175 = por %p173, %p174
    %p176 = scmp.ne.s32.totalorder %s167, %s168
    %p177 = scmp.eq.s32.totalorder %s21, 0
    %p178 = por %p176, %p177
    %p179 = scmp.ne.s32.totalorder %s167, %s168
    %p180 = scmp.eq.s32.totalorder %s22, 3
    %p181 = por %p179, %p180
    %p183 = scmp.ne.s32.totalorder %s168, %s182
    %p184 = scmp.eq.s32.totalorder %s22, 0
    %p185 = por %p183, %p184
    %s187 = sadd.s32 %s186, 1
    %p190 = scmp.eq.s32.totalorder %s16, 3
    %p191 = scmp.ne.s32.totalorder %s186, %s188
    %p192 = scmp.eq.s32.totalorder %s16, 0
    %p193 = por %p191, %p192
    %p194 = scmp.ne.s32.totalorder %s186, %s188
    %p195 = scmp.eq.s32.totalorder %s21, 3
    %p196 = por %p194, %p195
    %p197 = scmp.ne.s32.totalorder %s188, %s189
    %p198 = scmp.eq.s32.totalorder %s21, 0
    %p199 = por %p197, %p198
    %p200 = scmp.ne.s32.totalorder %s188, %s189
    %p201 = scmp.eq.s32.totalorder %s22, 3
    %p202 = por %p200, %p201
    %p204 = scmp.ne.s32.totalorder %s189, %s203
    %p205 = scmp.eq.s32.totalorder %s22, 0
    %p206 = por %p204, %p205
    %s208 = sadd.s32 %s207, 1
    %p211 = scmp.eq.s32.totalorder %s16, 3
    %p212 = scmp.ne.s32.totalorder %s207, %s209
    %p213 = scmp.eq.s32.totalorder %s16, 0
    %p214 = por %p212, %p213
    %p215 = scmp.ne.s32.totalorder %s207, %s209
    %p216 = scmp.eq.s32.totalorder %s21, 3
    %p217 = por %p215, %p216
    %p218 = scmp.ne.s32.totalorder %s209, %s210
    %p219 = scmp.eq.s32.totalorder %s21, 0
    %p220 = por %p218, %p219
    %p221 = scmp.ne.s32.totalorder %s209, %s210
    %p222 = scmp.eq.s32.totalorder %s22, 3
    %p223 = por %p221, %p222
    %p225 = scmp.ne.s32.totalorder %s210, %s224
    %p226 = scmp.eq.s32.totalorder %s22, 0
    %p227 = por %p225, %p226
    %s229 = sadd.s32 %s228, 1
    %p232 = scmp.eq.s32.totalorder %s16, 3
    %p233 = scmp.ne.s32.totalorder %s228, %s230
    %p234 = scmp.eq.s32.totalorder %s16, 0
    %p235 = por %p233, %p234
    %p236 = scmp.ne.s32.totalorder %s228, %s230
    %p237 = scmp.eq.s32.totalorder %s21, 3
    %p238 = por %p236, %p237
    %p239 = scmp.ne.s32.totalorder %s230, %s231
    %p240 = scmp.eq.s32.totalorder %s21, 0
    %p241 = por %p239, %p240
    %p242 = scmp.ne.s32.totalorder %s230, %s231
    %p243 = scmp.eq.s32.totalorder %s22, 3
    %p244 = por %p242, %p243
    %p246 = scmp.ne.s32.totalorder %s231, %s245
    %p247 = scmp.eq.s32.totalorder %s22, 0
    %p248 = por %p246, %p247
    %s250 = sadd.s32 %s249, 1
    %p253 = scmp.eq.s32.totalorder %s16, 3
    %p254 = scmp.ne.s32.totalorder %s249, %s251
    %p255 = scmp.eq.s32.totalorder %s16, 0
    %p256 = por %p254, %p255
    %p257 = scmp.ne.s32.totalorder %s249, %s251
    %p258 = scmp.eq.s32.totalorder %s21, 3
    %p259 = por %p257, %p258
    %p260 = scmp.ne.s32.totalorder %s251, %s252
    %p261 = scmp.eq.s32.totalorder %s21, 0
    %p262 = por %p260, %p261
    %p263 = scmp.ne.s32.totalorder %s251, %s252
    %p264 = scmp.eq.s32.totalorder %s22, 3
    %p265 = por %p263, %p264
    %p267 = scmp.ne.s32.totalorder %s252, %s266
    %p268 = scmp.eq.s32.totalorder %s22, 0
    %p269 = por %p267, %p268
    %s270 = ssub.s32 %s23, %s35
    %s271 = ssub.s32 %s24, %s31
    %s272 = sor.u32 %s270, %s271
    %p273 = scmp.eq.s32.totalorder %s272, 0
    %s275 = sadd.s32 %s274, 1
    %s276 = scalar_select %p273, %s274, %s275
    %p279 = pneg %p273
    %p280 = scmp.eq.s32.totalorder %s16, 3
    %p281 = por %p279, %p280
    %p282 = scmp.ne.s32.totalorder %s274, %s277
    %p283 = scmp.eq.s32.totalorder %s16, 0
    %p284 = por %p282, %p283
    %p285 = scmp.ne.s32.totalorder %s274, %s277
    %p286 = scmp.eq.s32.totalorder %s21, 3
    %p287 = por %p285, %p286
    %p288 = scmp.ne.s32.totalorder %s277, %s278
    %p289 = scmp.eq.s32.totalorder %s21, 0
    %p290 = por %p288, %p289
    %p291 = scmp.ne.s32.totalorder %s277, %s278
    %p292 = scmp.eq.s32.totalorder %s22, 3
    %p293 = por %p291, %p292
    %p295 = scmp.ne.s32.totalorder %s278, %s294
    %p296 = scmp.eq.s32.totalorder %s22, 0
    %p297 = por %p295, %p296
    %p298 = scmp.le.s32.totalorder 1, %s16
    %p299 = scmp.lt.s32.totalorder %s16, 5
    %p300 = pnand %p298, %p299
    %p301 = pneg %p300
    // Predicated region
    $region9: #{two_way_attention_block.3} parent=5 // pred_check
      _
    $region10: #{two_way_attention_block.3} parent=5 // pred_check_branch
      %303 = sbr.rel (%p300) target = $region12
    $region11: #{two_way_attention_block.3} parent=5 // pred_region
      %s304 = ssub.s32 %s16, 1
      // Predicated region
      $region13: #{two_way_attention_block.3} parent=11 // pred_check
        %p305 = pneg %p157
      $region14: #{two_way_attention_block.3} parent=11 // pred_check_branch
        %307 = sbr.rel (%p305) target = $region16
      $region15: #{two_way_attention_block.3} parent=11 // pred_region
        _
      $region16: #{two_way_attention_block.3} parent=11 // pred_fallthru
        _
      // Predicated region
      $region17: #{two_way_attention_block.3} parent=11 // pred_check
        %p308 = pneg %p178
      $region18: #{two_way_attention_block.3} parent=11 // pred_check_branch
        %310 = sbr.rel (%p308) target = $region20
      $region19: #{two_way_attention_block.3} parent=11 // pred_region
        _
      $region20: #{two_way_attention_block.3} parent=11 // pred_fallthru
        _
      // Predicated region
      $region21: #{two_way_attention_block.3} parent=11 // pred_check
        %p311 = pneg %p199
      $region22: #{two_way_attention_block.3} parent=11 // pred_check_branch
        %313 = sbr.rel (%p311) target = $region24
      $region23: #{two_way_attention_block.3} parent=11 // pred_region
        _
      $region24: #{two_way_attention_block.3} parent=11 // pred_fallthru
        _
      // Predicated region
      $region25: #{two_way_attention_block.3} parent=11 // pred_check
        %p314 = pneg %p220
      $region26: #{two_way_attention_block.3} parent=11 // pred_check_branch
        %316 = sbr.rel (%p314) target = $region28
      $region27: #{two_way_attention_block.3} parent=11 // pred_region
        _
      $region28: #{two_way_attention_block.3} parent=11 // pred_fallthru
        _
      // Predicated region
      $region29: #{two_way_attention_block.3} parent=11 // pred_check
        %p317 = pneg %p241
      $region30: #{two_way_attention_block.3} parent=11 // pred_check_branch
        %319 = sbr.rel (%p317) target = $region32
      $region31: #{two_way_attention_block.3} parent=11 // pred_region
        _
      $region32: #{two_way_attention_block.3} parent=11 // pred_fallthru
        _
      // Predicated region
      $region33: #{two_way_attention_block.3} parent=11 // pred_check
        %p320 = pneg %p262
      $region34: #{two_way_attention_block.3} parent=11 // pred_check_branch
        %322 = sbr.rel (%p320) target = $region36
      $region35: #{two_way_attention_block.3} parent=11 // pred_region
        _
      $region36: #{two_way_attention_block.3} parent=11 // pred_fallthru
        _
    $region12: #{two_way_attention_block.3} parent=5 // pred_fallthru
      _
    %p323 = scmp.lt.s32.totalorder %s16, 4
    // Predicated region
    $region37: #{two_way_attention_block.3} parent=5 // pred_check
      %p324 = pneg %p323
    $region38: #{two_way_attention_block.3} parent=5 // pred_check_branch
      %326 = sbr.rel (%p324) target = $region40
    $region39: #{two_way_attention_block.3} parent=5 // pred_region
      // Predicated region
      $region41: #{two_way_attention_block.3} parent=39 // pred_check
        %p327 = pneg %p50
      $region42: #{two_way_attention_block.3} parent=39 // pred_check_branch
        %329 = sbr.rel (%p327) target = $region44
      $region43: #{two_way_attention_block.3} parent=39 // pred_region
        %p330 = scmp.lt.s32.totalorder %s23, 1
        %s331 = scalar_select %p330, %s23, 1
        %p332 = scmp.lt.s32.totalorder %s24, 1
        %s333 = scalar_select %p332, %s24, 1
        %s334 = smul.addr %s331, 2
        %s335 = sadd.s32 %s333, %s334
        %s336 = smul.addr %s335, 4
        %s337 = scalar_lea.vmem %s0, %s336
      $region44: #{two_way_attention_block.3} parent=39 // pred_fallthru
        _
      // Predicated region
      $region45: #{two_way_attention_block.3} parent=39 // pred_check
        %p338 = pneg %p78
      $region46: #{two_way_attention_block.3} parent=39 // pred_check_branch
        %340 = sbr.rel (%p338) target = $region48
      $region47: #{two_way_attention_block.3} parent=39 // pred_region
        %p341 = scmp.lt.s32.totalorder %s23, 1
        %s342 = scalar_select %p341, %s23, 1
        %p343 = scmp.lt.s32.totalorder %s24, 1
        %s344 = scalar_select %p343, %s24, 1
        %s345 = smul.addr %s342, 2
        %s346 = sadd.s32 %s344, %s345
        %s347 = smul.addr %s346, 4
        %s348 = scalar_lea.vmem %s1, %s347
      $region48: #{two_way_attention_block.3} parent=39 // pred_fallthru
        _
      // Predicated region
      $region49: #{two_way_attention_block.3} parent=39 // pred_check
        %p349 = pneg %p104
      $region50: #{two_way_attention_block.3} parent=39 // pred_check_branch
        %351 = sbr.rel (%p349) target = $region52
      $region51: #{two_way_attention_block.3} parent=39 // pred_region
        %p352 = scmp.lt.s32.totalorder %s23, 1
        %s353 = scalar_select %p352, %s23, 1
        %s354 = smul.addr %s353, 4
        %s355 = scalar_lea.vmem %s2, %s354
      $region52: #{two_way_attention_block.3} parent=39 // pred_fallthru
        _
      // Predicated region
      $region53: #{two_way_attention_block.3} parent=39 // pred_check
        %p356 = pneg %p130
      $region54: #{two_way_attention_block.3} parent=39 // pred_check_branch
        %358 = sbr.rel (%p356) target = $region56
      $region55: #{two_way_attention_block.3} parent=39 // pred_region
        %p359 = scmp.lt.s32.totalorder %s23, 1
        %s360 = scalar_select %p359, %s23, 1
        %s361 = smul.addr %s360, 4
        %s362 = scalar_lea.vmem %s3, %s361
      $region56: #{two_way_attention_block.3} parent=39 // pred_fallthru
        _
    $region40: #{two_way_attention_block.3} parent=5 // pred_fallthru
      _
    %p363 = scmp.le.s32.totalorder 1, %s16
    %p364 = scmp.lt.s32.totalorder %s16, 5
    %p365 = pnand %p363, %p364
    %p366 = pneg %p365
    // Predicated region
    $region57: #{two_way_attention_block.3} parent=5 // pred_check
      _
    $region58: #{two_way_attention_block.3} parent=5 // pred_check_branch
      %368 = sbr.rel (%p365) target = $region60
    $region59: #{two_way_attention_block.3} parent=5 // pred_region
      %s369 = ssub.s32 %s16, 1
      %p370 = scmp.lt.s32.totalorder %s25, 1
      %s371 = scalar_select %p370, %s25, 1
      %p372 = scmp.lt.s32.totalorder %s26, 1
      %s373 = scalar_select %p372, %s26, 1
      %s374 = smul.addr %s371, 2
      %s375 = sadd.s32 %s373, %s374
      %s376 = smul.addr %s375, 4
      %s377 = scalar_lea.vmem %s0, %s376
      %p378 = pneg %p56
      %p379 = pneg %p53
      %p380 = scmp.lt.s32.totalorder %s25, 1
      %s381 = scalar_select %p380, %s25, 1
      %p382 = scmp.lt.s32.totalorder %s26, 1
      %s383 = scalar_select %p382, %s26, 1
      %s384 = smul.addr %s381, 2
      %s385 = sadd.s32 %s383, %s384
      %s386 = smul.addr %s385, 4
      %s387 = scalar_lea.vmem %s1, %s386
      %p388 = pneg %p84
      %p389 = pneg %p81
      %p390 = scmp.lt.s32.totalorder %s25, 1
      %s391 = scalar_select %p390, %s25, 1
      %s392 = smul.addr %s391, 4
      %s393 = scalar_lea.vmem %s2, %s392
      %p394 = pneg %p110
      %p395 = pneg %p107
      %p396 = scmp.lt.s32.totalorder %s25, 1
      %s397 = scalar_select %p396, %s25, 1
      %s398 = smul.addr %s397, 4
      %s399 = scalar_lea.vmem %s3, %s398
      %p400 = pneg %p136
      %p401 = pneg %p133
      %p402 = pneg %p157
      %p403 = pneg %p154
      %p404 = pneg %p178
      %p405 = pneg %p175
      %p406 = pneg %p199
      %p407 = pneg %p196
      %p408 = pneg %p220
      %p409 = pneg %p217
      %p410 = pneg %p241
      %p411 = pneg %p238
      %p412 = pneg %p262
      %p413 = pneg %p259
      %p414 = pneg %p290
      %p415 = pneg %p287
      %p416 = scmp.lt.s32.totalorder %s25, 1
      %s417 = scalar_select %p416, %s25, 1
      %p418 = scmp.lt.s32.totalorder %s26, 1
      %s419 = scalar_select %p418, %s26, 1
      %s420 = smul.addr %s417, 2
      %s421 = sadd.s32 %s419, %s420
      %s422 = smul.addr %s421, 4
      %s423 = scalar_lea.vmem %s10, %s422
      %p424 = scmp.lt.s32.totalorder %s25, 1
      %s425 = scalar_select %p424, %s25, 1
      %p426 = scmp.lt.s32.totalorder %s26, 1
      %s427 = scalar_select %p426, %s26, 1
      %s428 = smul.addr %s425, 2
      %s429 = sadd.s32 %s427, %s428
      %s430 = smul.addr %s429, 4
      %s431 = scalar_lea.vmem %s0, %s430
      %p432 = scmp.lt.s32.totalorder %s25, 1
      %s433 = scalar_select %p432, %s25, 1
      %p434 = scmp.lt.s32.totalorder %s26, 1
      %s435 = scalar_select %p434, %s26, 1
      %s436 = smul.addr %s433, 2
      %s437 = sadd.s32 %s435, %s436
      %s438 = smul.addr %s437, 4
      %s439 = scalar_lea.vmem %s1, %s438
      %p440 = scmp.lt.s32.totalorder %s25, 1
      %s441 = scalar_select %p440, %s25, 1
      %s442 = smul.addr %s441, 4
      %s443 = scalar_lea.vmem %s2, %s442
      %p444 = scmp.lt.s32.totalorder %s25, 1
      %s445 = scalar_select %p444, %s25, 1
      %s446 = smul.addr %s445, 4
      %s447 = scalar_lea.vmem %s3, %s446
      %p448 = scmp.lt.s32.totalorder %s25, 1
      %s449 = scalar_select %p448, %s25, 1
      %p450 = scmp.lt.s32.totalorder %s26, 1
      %s451 = scalar_select %p450, %s26, 1
      %s452 = smul.addr %s449, 2
      %s453 = sadd.s32 %s451, %s452
      %s454 = smul.addr %s453, 4
      %s455 = scalar_lea.vmem %s10, %s454
      %v457 = vld [vmem:[%s431] sm:$0xf]
      %v458 = vld [vmem:[%s439] sm:$0xf]
      %v459 = vld [vmem:[%s443] sm:$0xf]
      %v460 = vld [vmem:[%s447] sm:$0xf]
      %v461 = vld [vmem:[%s4] sm:$0xf]
      %v462 = vld [vmem:[%s4 + $0x4] sm:$0xf]
      %v463 = vld [vmem:[%s4 + $0x8] sm:$0xf]
      %v464 = vld [vmem:[%s4 + $0xc] sm:$0xf]
      %v465 = vld [vmem:[%s5] sm:$0x1]
      %v466 = vadd.bf16 %v457, %v458
      %v467 = vadd.bf16 %v459, %v460
      %v469 = vlaneseq
      %v470 = vshrl.u32 %v469, 7
      %v471 = vsub.s32 0, %v470
      %v472 = vrot.slane %v465, %v471
      %v478 = vunpack.c.l.b16 %v461
      %v479 = vunpack.c.l.b16 %v462
      %v480 = vunpack.c.l.b16 %v463
      %v481 = vunpack.c.l.b16 %v464
      %v482 = vpack.c.b16 %v479, %v478
      %v483 = vpack.c.b16 %v481, %v480
      %vm486 = vcmask 261120
      %v488 = vsel %vm486, %v466, 0
      %490 = vmatprep.subr.bf16.mxu0 0
      %491 = vmatpush1.bf16.msra.mxu0 %v482
      %492 = vmatprep.subr.bf16.mxu0 0
      %493 = vmatpush1.bf16.msra.mxu0 %v483
      %494 = vmatprep.subr.bf16.mxu0 0
      %495 = vmatpush1.bf16.msra.mxu0 0
      %496 = vmatprep.subr.bf16.mxu0 0
      %497 = vmatpush1.bf16.msra.mxu0 0
      %498 = vmatprep.subr.bf16.mxu0 0
      %499 = vmatpush1.bf16.msra.mxu0 0
      %500 = vmatprep.subr.bf16.mxu0 0
      %501 = vmatpush1.bf16.msra.mxu0 0
      %502 = vmatprep.subr.bf16.mxu0 0
      %503 = vmatpush1.bf16.msra.mxu0 0
      %504 = vmatprep.subr.bf16.mxu0 0
      %505 = vmatpush1.bf16.msra.mxu0 0
      %506 = vmatprep.subr.bf16.mxu0 0
      %507 = vmatpush1.bf16.msra.mxu0 0
      %508 = vmatprep.subr.bf16.mxu0 0
      %509 = vmatpush1.bf16.msra.mxu0 0
      %510 = vmatprep.subr.bf16.mxu0 0
      %511 = vmatpush1.bf16.msra.mxu0 0
      %512 = vmatprep.subr.bf16.mxu0 0
      %513 = vmatpush1.bf16.msra.mxu0 0
      %514 = vmatprep.subr.bf16.mxu0 0
      %515 = vmatpush1.bf16.msra.mxu0 0
      %516 = vmatprep.subr.bf16.mxu0 0
      %517 = vmatpush1.bf16.msra.mxu0 0
      %518 = vmatprep.subr.bf16.mxu0 0
      %519 = vmatpush1.bf16.msra.mxu0 0
      %520 = vmatprep.subr.bf16.mxu0 0
      %521 = vmatpush1.bf16.msra.mxu0 0
      %522 = vmatprep.mubr.bf16.mxu0 0
      %523 = vmatmul.mubr.bf16.gmra.mrb[0].mxu0 %v488
      %v524 = vpop.f32.mrb[0].mxu0
      %v525 = vadd.f32 %v472, %v524
      %v526 = vpop.f32.mrb[0].mxu0
      %v527 = vpop.f32.mrb[0].mxu0
      %v528 = vpop.f32.mrb[0].mxu0
      %529 = vdwg.mxu0
      %530 = vrot.lane.b32.xlu0 %v482, 112
      %v531 = vpop.permute.xlu0 %530
      %532 = vrot.lane.b32.xlu0 %v483, 112
      %v533 = vpop.permute.xlu0 %532
      %536 = vrot.lane.b32.xlu0 %v472, 112
      %v537 = vpop.permute.xlu0 %536
      %v540 = vsel %vm486, %v467, 0
      %542 = vmatprep.subr.bf16.mxu0 0
      %543 = vmatpush1.bf16.msra.mxu0 %v531
      %544 = vmatprep.subr.bf16.mxu0 0
      %545 = vmatpush1.bf16.msra.mxu0 %v533
      %546 = vmatprep.subr.bf16.mxu0 0
      %547 = vmatpush1.bf16.msra.mxu0 0
      %548 = vmatprep.subr.bf16.mxu0 0
      %549 = vmatpush1.bf16.msra.mxu0 0
      %550 = vmatprep.subr.bf16.mxu0 0
      %551 = vmatpush1.bf16.msra.mxu0 0
      %552 = vmatprep.subr.bf16.mxu0 0
      %553 = vmatpush1.bf16.msra.mxu0 0
      %554 = vmatprep.subr.bf16.mxu0 0
      %555 = vmatpush1.bf16.msra.mxu0 0
      %556 = vmatprep.subr.bf16.mxu0 0
      %557 = vmatpush1.bf16.msra.mxu0 0
      %558 = vmatprep.subr.bf16.mxu0 0
      %559 = vmatpush1.bf16.msra.mxu0 0
      %560 = vmatprep.subr.bf16.mxu0 0
      %561 = vmatpush1.bf16.msra.mxu0 0
      %562 = vmatprep.subr.bf16.mxu0 0
      %563 = vmatpush1.bf16.msra.mxu0 0
      %564 = vmatprep.subr.bf16.mxu0 0
      %565 = vmatpush1.bf16.msra.mxu0 0
      %566 = vmatprep.subr.bf16.mxu0 0
      %567 = vmatpush1.bf16.msra.mxu0 0
      %568 = vmatprep.subr.bf16.mxu0 0
      %569 = vmatpush1.bf16.msra.mxu0 0
      %570 = vmatprep.subr.bf16.mxu0 0
      %571 = vmatpush1.bf16.msra.mxu0 0
      %572 = vmatprep.subr.bf16.mxu0 0
      %573 = vmatpush1.bf16.msra.mxu0 0
      %574 = vmatprep.mubr.bf16.mxu0 0
      %575 = vmatmul.mubr.bf16.gmra.mrb[0].mxu0 %v540
      %v576 = vpop.f32.mrb[0].mxu0
      %v577 = vadd.f32 %v537, %v576
      %v578 = vpop.f32.mrb[0].mxu0
      %v579 = vpop.f32.mrb[0].mxu0
      %v580 = vpop.f32.mrb[0].mxu0
      %581 = vdwg.mxu0
      %582 = vrot.lane.b32.xlu0 %v482, 96
      %v583 = vpop.permute.xlu0 %582
      %584 = vrot.lane.b32.xlu0 %v483, 96
      %v585 = vpop.permute.xlu0 %584
      %588 = vrot.lane.b32.xlu0 %v472, 96
      %v589 = vpop.permute.xlu0 %588
      %v592 = vsel %vm486, %v459, 0
      %594 = vmatprep.subr.bf16.mxu0 0
      %595 = vmatpush1.bf16.msra.mxu0 %v583
      %596 = vmatprep.subr.bf16.mxu0 0
      %597 = vmatpush1.bf16.msra.mxu0 %v585
      %598 = vmatprep.subr.bf16.mxu0 0
      %599 = vmatpush1.bf16.msra.mxu0 0
      %600 = vmatprep.subr.bf16.mxu0 0
      %601 = vmatpush1.bf16.msra.mxu0 0
      %602 = vmatprep.subr.bf16.mxu0 0
      %603 = vmatpush1.bf16.msra.mxu0 0
      %604 = vmatprep.subr.bf16.mxu0 0
      %605 = vmatpush1.bf16.msra.mxu0 0
      %606 = vmatprep.subr.bf16.mxu0 0
      %607 = vmatpush1.bf16.msra.mxu0 0
      %608 = vmatprep.subr.bf16.mxu0 0
      %609 = vmatpush1.bf16.msra.mxu0 0
      %610 = vmatprep.subr.bf16.mxu0 0
      %611 = vmatpush1.bf16.msra.mxu0 0
      %612 = vmatprep.subr.bf16.mxu0 0
      %613 = vmatpush1.bf16.msra.mxu0 0
      %614 = vmatprep.subr.bf16.mxu0 0
      %615 = vmatpush1.bf16.msra.mxu0 0
      %616 = vmatprep.subr.bf16.mxu0 0
      %617 = vmatpush1.bf16.msra.mxu0 0
      %618 = vmatprep.subr.bf16.mxu0 0
      %619 = vmatpush1.bf16.msra.mxu0 0
      %620 = vmatprep.subr.bf16.mxu0 0
      %621 = vmatpush1.bf16.msra.mxu0 0
      %622 = vmatprep.subr.bf16.mxu0 0
      %623 = vmatpush1.bf16.msra.mxu0 0
      %624 = vmatprep.subr.bf16.mxu0 0
      %625 = vmatpush1.bf16.msra.mxu0 0
      %626 = vmatprep.mubr.bf16.mxu0 0
      %627 = vmatmul.mubr.bf16.gmra.mrb[0].mxu0 %v592
      %v628 = vpop.f32.mrb[0].mxu0
      %v629 = vadd.f32 %v589, %v628
      %v630 = vpop.f32.mrb[0].mxu0
      %v631 = vpop.f32.mrb[0].mxu0
      %v632 = vpop.f32.mrb[0].mxu0
      %633 = vdwg.mxu0
      %v634 = vld [vmem:[%s6] sm:$0xf]
      %v635 = vld [vmem:[%s6 + $0x4] sm:$0xf]
      %v636 = vld [vmem:[%s7] sm:$0x1]
      %v637 = vpack.c.bf16 %v525, %v525
      %v638 = vpack.c.bf16 %v577, %v577
      %v639 = vpack.c.bf16 %v629, %v629
      %vm640 = vcmask 64512
      %v642 = vsel %vm640, %v637, 0
      %v645 = vsel %vm640, %v638, 0
      %647 = vmatprep.subr.bf16.mxu0 0
      %648 = vmatpush1.bf16.xpose.msra.mxu0 %v645
      %649 = vmatprep.subr.bf16.mxu0 0
      %650 = vmatpush1.bf16.xpose.msra.mxu0 0
      %651 = vmatprep.subr.bf16.mxu0 0
      %652 = vmatpush1.bf16.xpose.msra.mxu0 0
      %653 = vmatprep.subr.bf16.mxu0 0
      %654 = vmatpush1.bf16.xpose.msra.mxu0 0
      %655 = vmatprep.subr.bf16.mxu0 0
      %656 = vmatpush1.bf16.xpose.msra.mxu0 0
      %657 = vmatprep.subr.bf16.mxu0 0
      %658 = vmatpush1.bf16.xpose.msra.mxu0 0
      %659 = vmatprep.subr.bf16.mxu0 0
      %660 = vmatpush1.bf16.xpose.msra.mxu0 0
      %661 = vmatprep.subr.bf16.mxu0 0
      %662 = vmatpush1.bf16.xpose.msra.mxu0 0
      %663 = vmatprep.subr.bf16.mxu0 0
      %664 = vmatpush1.bf16.xpose.msra.mxu0 0
      %665 = vmatprep.subr.bf16.mxu0 0
      %666 = vmatpush1.bf16.xpose.msra.mxu0 0
      %667 = vmatprep.subr.bf16.mxu0 0
      %668 = vmatpush1.bf16.xpose.msra.mxu0 0
      %669 = vmatprep.subr.bf16.mxu0 0
      %670 = vmatpush1.bf16.xpose.msra.mxu0 0
      %671 = vmatprep.subr.bf16.mxu0 0
      %672 = vmatpush1.bf16.xpose.msra.mxu0 0
      %673 = vmatprep.subr.bf16.mxu0 0
      %674 = vmatpush1.bf16.xpose.msra.mxu0 0
      %675 = vmatprep.subr.bf16.mxu0 0
      %676 = vmatpush1.bf16.xpose.msra.mxu0 0
      %677 = vmatprep.subr.bf16.mxu0 0
      %678 = vmatpush1.bf16.xpose.msra.mxu0 0
      %679 = vmatprep.mubr.bf16.mxu0 0
      %680 = vmatmul.mubr.bf16.gmra.mrb[0].mxu0 %v642
      %v681 = vpop.f32.mrb[0].mxu0
      %v682 = vadd.f32 0.0, %v681
      %v683 = vpop.f32.mrb[0].mxu0
      %v684 = vpop.f32.mrb[0].mxu0
      %v685 = vpop.f32.mrb[0].mxu0
      %686 = vdwg.mxu0
      %v687 = vsel %vm640, %v682, -inf
      %688 = vmax.xlane.f32.xlu0 %v687
      %v689 = vpop.xlane.xlu0 %688
      %v690 = vsub.f32 %v682, %v689
      %v691 = vmul.f32 %v690, 1.442695
      %v692 = vpow.pop %v691
      %v693 = vsel %vm640, %v692, 0.0
      %694 = vadd.xlane.f32.xlu0 %v693
      %v695 = vpop.xlane.xlu0 %694
      %v696 = vpack.c.bf16 %v692, %v692
      %v698 = vsel %vm640, %v696, 0
      %vm700 = vcmask 1043456
      %v702 = vsel %vm700, %v639, 0
      %704 = vmatprep.subr.bf16.mxu0 0
      %705 = vmatpush1.bf16.msra.mxu0 %v702
      %706 = vmatprep.subr.bf16.mxu0 0
      %707 = vmatpush1.bf16.msra.mxu0 0
      %708 = vmatprep.subr.bf16.mxu0 0
      %709 = vmatpush1.bf16.msra.mxu0 0
      %710 = vmatprep.subr.bf16.mxu0 0
      %711 = vmatpush1.bf16.msra.mxu0 0
      %712 = vmatprep.subr.bf16.mxu0 0
      %713 = vmatpush1.bf16.msra.mxu0 0
      %714 = vmatprep.subr.bf16.mxu0 0
      %715 = vmatpush1.bf16.msra.mxu0 0
      %716 = vmatprep.subr.bf16.mxu0 0
      %717 = vmatpush1.bf16.msra.mxu0 0
      %718 = vmatprep.subr.bf16.mxu0 0
      %719 = vmatpush1.bf16.msra.mxu0 0
      %720 = vmatprep.subr.bf16.mxu0 0
      %721 = vmatpush1.bf16.msra.mxu0 0
      %722 = vmatprep.subr.bf16.mxu0 0
      %723 = vmatpush1.bf16.msra.mxu0 0
      %724 = vmatprep.subr.bf16.mxu0 0
      %725 = vmatpush1.bf16.msra.mxu0 0
      %726 = vmatprep.subr.bf16.mxu0 0
      %727 = vmatpush1.bf16.msra.mxu0 0
      %728 = vmatprep.subr.bf16.mxu0 0
      %729 = vmatpush1.bf16.msra.mxu0 0
      %730 = vmatprep.subr.bf16.mxu0 0
      %731 = vmatpush1.bf16.msra.mxu0 0
      %732 = vmatprep.subr.bf16.mxu0 0
      %733 = vmatpush1.bf16.msra.mxu0 0
      %734 = vmatprep.subr.bf16.mxu0 0
      %735 = vmatpush1.bf16.msra.mxu0 0
      %736 = vmatprep.mubr.bf16.mxu0 0
      %737 = vmatmul.mubr.bf16.gmra.mrb[0].mxu0 %v698
      %v738 = vpop.f32.mrb[0].mxu0
      %v739 = vadd.f32 0.0, %v738
      %v740 = vpop.f32.mrb[0].mxu0
      %v741 = vpop.f32.mrb[0].mxu0
      %v742 = vpop.f32.mrb[0].mxu0
      %743 = vdwg.mxu0
      %v744 = vrcp.pop %v695
      %v745 = vmul.f32 %v739, %v744
      %v746 = vpack.c.bf16 %v745, %v745
      %748 = vrot.lane.b32.xlu0 %v637, 120
      %v749 = vpop.permute.xlu0 %748
      %751 = vrot.lane.b32.xlu0 %v638, 120
      %v752 = vpop.permute.xlu0 %751
      %v754 = vsel %vm640, %v749, 0
      %v757 = vsel %vm640, %v752, 0
      %759 = vmatprep.subr.bf16.mxu0 0
      %760 = vmatpush1.bf16.xpose.msra.mxu0 %v757
      %761 = vmatprep.subr.bf16.mxu0 0
      %762 = vmatpush1.bf16.xpose.msra.mxu0 0
      %763 = vmatprep.subr.bf16.mxu0 0
      %764 = vmatpush1.bf16.xpose.msra.mxu0 0
      %765 = vmatprep.subr.bf16.mxu0 0
      %766 = vmatpush1.bf16.xpose.msra.mxu0 0
      %767 = vmatprep.subr.bf16.mxu0 0
      %768 = vmatpush1.bf16.xpose.msra.mxu0 0
      %769 = vmatprep.subr.bf16.mxu0 0
      %770 = vmatpush1.bf16.xpose.msra.mxu0 0
      %771 = vmatprep.subr.bf16.mxu0 0
      %772 = vmatpush1.bf16.xpose.msra.mxu0 0
      %773 = vmatprep.subr.bf16.mxu0 0
      %774 = vmatpush1.bf16.xpose.msra.mxu0 0
      %775 = vmatprep.subr.bf16.mxu0 0
      %776 = vmatpush1.bf16.xpose.msra.mxu0 0
      %777 = vmatprep.subr.bf16.mxu0 0
      %778 = vmatpush1.bf16.xpose.msra.mxu0 0
      %779 = vmatprep.subr.bf16.mxu0 0
      %780 = vmatpush1.bf16.xpose.msra.mxu0 0
      %781 = vmatprep.subr.bf16.mxu0 0
      %782 = vmatpush1.bf16.xpose.msra.mxu0 0
      %783 = vmatprep.subr.bf16.mxu0 0
      %784 = vmatpush1.bf16.xpose.msra.mxu0 0
      %785 = vmatprep.subr.bf16.mxu0 0
      %786 = vmatpush1.bf16.xpose.msra.mxu0 0
      %787 = vmatprep.subr.bf16.mxu0 0
      %788 = vmatpush1.bf16.xpose.msra.mxu0 0
      %789 = vmatprep.subr.bf16.mxu0 0
      %790 = vmatpush1.bf16.xpose.msra.mxu0 0
      %791 = vmatprep.mubr.bf16.mxu0 0
      %792 = vmatmul.mubr.bf16.gmra.mrb[0].mxu0 %v754
      %v793 = vpop.f32.mrb[0].mxu0
      %v794 = vadd.f32 0.0, %v793
      %v795 = vpop.f32.mrb[0].mxu0
      %v796 = vpop.f32.mrb[0].mxu0
      %v797 = vpop.f32.mrb[0].mxu0
      %798 = vdwg.mxu0
      %v799 = vsel %vm640, %v794, -inf
      %800 = vmax.xlane.f32.xlu0 %v799
      %v801 = vpop.xlane.xlu0 %800
      %v802 = vsub.f32 %v794, %v801
      %v803 = vmul.f32 %v802, 1.442695
      %v804 = vpow.pop %v803
      %v805 = vsel %vm640, %v804, 0.0
      %806 = vadd.xlane.f32.xlu0 %v805
      %v807 = vpop.xlane.xlu0 %806
      %v808 = vpack.c.bf16 %v804, %v804
      %810 = vrot.lane.b32.xlu0 %v639, 120
      %v811 = vpop.permute.xlu0 %810
      %v813 = vsel %vm640, %v808, 0
      %v816 = vsel %vm700, %v811, 0
      %818 = vmatprep.subr.bf16.mxu0 0
      %819 = vmatpush1.bf16.msra.mxu0 %v816
      %820 = vmatprep.subr.bf16.mxu0 0
      %821 = vmatpush1.bf16.msra.mxu0 0
      %822 = vmatprep.subr.bf16.mxu0 0
      %823 = vmatpush1.bf16.msra.mxu0 0
      %824 = vmatprep.subr.bf16.mxu0 0
      %825 = vmatpush1.bf16.msra.mxu0 0
      %826 = vmatprep.subr.bf16.mxu0 0
      %827 = vmatpush1.bf16.msra.mxu0 0
      %828 = vmatprep.subr.bf16.mxu0 0
      %829 = vmatpush1.bf16.msra.mxu0 0
      %830 = vmatprep.subr.bf16.mxu0 0
      %831 = vmatpush1.bf16.msra.mxu0 0
      %832 = vmatprep.subr.bf16.mxu0 0
      %833 = vmatpush1.bf16.msra.mxu0 0
      %834 = vmatprep.subr.bf16.mxu0 0
      %835 = vmatpush1.bf16.msra.mxu0 0
      %836 = vmatprep.subr.bf16.mxu0 0
      %837 = vmatpush1.bf16.msra.mxu0 0
      %838 = vmatprep.subr.bf16.mxu0 0
      %839 = vmatpush1.bf16.msra.mxu0 0
      %840 = vmatprep.subr.bf16.mxu0 0
      %841 = vmatpush1.bf16.msra.mxu0 0
      %842 = vmatprep.subr.bf16.mxu0 0
      %843 = vmatpush1.bf16.msra.mxu0 0
      %844 = vmatprep.subr.bf16.mxu0 0
      %845 = vmatpush1.bf16.msra.mxu0 0
      %846 = vmatprep.subr.bf16.mxu0 0
      %847 = vmatpush1.bf16.msra.mxu0 0
      %848 = vmatprep.subr.bf16.mxu0 0
      %849 = vmatpush1.bf16.msra.mxu0 0
      %850 = vmatprep.mubr.bf16.mxu0 0
      %851 = vmatmul.mubr.bf16.gmra.mrb[0].mxu0 %v813
      %v852 = vpop.f32.mrb[0].mxu0
      %v853 = vadd.f32 0.0, %v852
      %v854 = vpop.f32.mrb[0].mxu0
      %v855 = vpop.f32.mrb[0].mxu0
      %v856 = vpop.f32.mrb[0].mxu0
      %857 = vdwg.mxu0
      %v858 = vrcp.pop %v807
      %v859 = vmul.f32 %v853, %v858
      %v860 = vpack.c.bf16 %v859, %v859
      %v862 = vsel %vm640, %v860, 0
      %v865 = vsel %vm700, %v635, 0
      %867 = vmatprep.subr.bf16.mxu0 0
      %868 = vmatpush1.bf16.msra.mxu0 %v865
      %869 = vmatprep.subr.bf16.mxu0 0
      %870 = vmatpush1.bf16.msra.mxu0 0
      %871 = vmatprep.subr.bf16.mxu0 0
      %872 = vmatpush1.bf16.msra.mxu0 0
      %873 = vmatprep.subr.bf16.mxu0 0
      %874 = vmatpush1.bf16.msra.mxu0 0
      %875 = vmatprep.subr.bf16.mxu0 0
      %876 = vmatpush1.bf16.msra.mxu0 0
      %877 = vmatprep.subr.bf16.mxu0 0
      %878 = vmatpush1.bf16.msra.mxu0 0
      %879 = vmatprep.subr.bf16.mxu0 0
      %880 = vmatpush1.bf16.msra.mxu0 0
      %881 = vmatprep.subr.bf16.mxu0 0
      %882 = vmatpush1.bf16.msra.mxu0 0
      %883 = vmatprep.subr.bf16.mxu0 0
      %884 = vmatpush1.bf16.msra.mxu0 0
      %885 = vmatprep.subr.bf16.mxu0 0
      %886 = vmatpush1.bf16.msra.mxu0 0
      %887 = vmatprep.subr.bf16.mxu0 0
      %888 = vmatpush1.bf16.msra.mxu0 0
      %889 = vmatprep.subr.bf16.mxu0 0
      %890 = vmatpush1.bf16.msra.mxu0 0
      %891 = vmatprep.subr.bf16.mxu0 0
      %892 = vmatpush1.bf16.msra.mxu0 0
      %893 = vmatprep.subr.bf16.mxu0 0
      %894 = vmatpush1.bf16.msra.mxu0 0
      %895 = vmatprep.subr.bf16.mxu0 0
      %896 = vmatpush1.bf16.msra.mxu0 0
      %897 = vmatprep.subr.bf16.mxu0 0
      %898 = vmatpush1.bf16.msra.mxu0 0
      %899 = vmatprep.mubr.bf16.mxu0 0
      %900 = vmatmul.mubr.bf16.gmra.mrb[0].mxu0 %v862
      %v901 = vpop.f32.mrb[0].mxu0
      %v902 = vadd.f32 0.0, %v901
      %v903 = vpop.f32.mrb[0].mxu0
      %v904 = vpop.f32.mrb[0].mxu0
      %v905 = vpop.f32.mrb[0].mxu0
      %906 = vdwg.mxu0
      %v908 = vsel %vm640, %v746, 0
      %v911 = vsel %vm700, %v634, 0
      %913 = vmatprep.subr.bf16.mxu0 0
      %914 = vmatpush1.bf16.msra.mxu0 %v911
      %915 = vmatprep.subr.bf16.mxu0 0
      %916 = vmatpush1.bf16.msra.mxu0 0
      %917 = vmatprep.subr.bf16.mxu0 0
      %918 = vmatpush1.bf16.msra.mxu0 0
      %919 = vmatprep.subr.bf16.mxu0 0
      %920 = vmatpush1.bf16.msra.mxu0 0
      %921 = vmatprep.subr.bf16.mxu0 0
      %922 = vmatpush1.bf16.msra.mxu0 0
      %923 = vmatprep.subr.bf16.mxu0 0
      %924 = vmatpush1.bf16.msra.mxu0 0
      %925 = vmatprep.subr.bf16.mxu0 0
      %926 = vmatpush1.bf16.msra.mxu0 0
      %927 = vmatprep.subr.bf16.mxu0 0
      %928 = vmatpush1.bf16.msra.mxu0 0
      %929 = vmatprep.subr.bf16.mxu0 0
      %930 = vmatpush1.bf16.msra.mxu0 0
      %931 = vmatprep.subr.bf16.mxu0 0
      %932 = vmatpush1.bf16.msra.mxu0 0
      %933 = vmatprep.subr.bf16.mxu0 0
      %934 = vmatpush1.bf16.msra.mxu0 0
      %935 = vmatprep.subr.bf16.mxu0 0
      %936 = vmatpush1.bf16.msra.mxu0 0
      %937 = vmatprep.subr.bf16.mxu0 0
      %938 = vmatpush1.bf16.msra.mxu0 0
      %939 = vmatprep.subr.bf16.mxu0 0
      %940 = vmatpush1.bf16.msra.mxu0 0
      %941 = vmatprep.subr.bf16.mxu0 0
      %942 = vmatpush1.bf16.msra.mxu0 0
      %943 = vmatprep.subr.bf16.mxu0 0
      %944 = vmatpush1.bf16.msra.mxu0 0
      %945 = vmatprep.mubr.bf16.mxu0 0
      %946 = vmatmul.mubr.bf16.gmra.mrb[0].mxu0 %v908
      %v947 = vpop.f32.mrb[0].mxu0
      %v948 = vadd.f32 %v902, %v947
      %v949 = vpop.f32.mrb[0].mxu0
      %v950 = vpop.f32.mrb[0].mxu0
      %v951 = vpop.f32.mrb[0].mxu0
      %952 = vdwg.mxu0
      %v954 = vlaneseq
      %v955 = vshrl.u32 %v954, 7
      %v956 = vsub.s32 0, %v955
      %v957 = vrot.slane %v636, %v956
      %v959 = vadd.f32 %v948, %v957
      %v960 = vunpack.c.l.bf16 %v457
      %v961 = vadd.f32 %v959, %v960
      %v962 = vld [vmem:[%s8] sm:$0x1]
      %v963 = vld [vmem:[%s9] sm:$0x1]
      %v964 = vsel %vm486, %v961, 0.0
      %965 = vadd.xlane.f32.xlu0 %v964
      %v966 = vpop.xlane.xlu0 %965
      %v967 = vrcp.pop 32.0
      %v968 = vmul.f32 %v966, %v967
      %v969 = vsub.f32 %v961, %v968
      %v970 = vmul.f32 %v969, %v969
      %v971 = vsel %vm486, %v970, 0.0
      %972 = vadd.xlane.f32.xlu0 %v971
      %v973 = vpop.xlane.xlu0 %972
      %v974 = vmul.f32 %v973, %v967
      %v975 = vadd.f32 %v974, 1e-05
      %v976 = vrsqrt.pop %v975
      %v977 = vmul.f32 %v969, %v976
      %v979 = vlaneseq
      %v980 = vshrl.u32 %v979, 7
      %v981 = vsub.s32 0, %v980
      %v982 = vrot.slane %v962, %v981
      %v984 = vmul.f32 %v977, %v982
      %v986 = vlaneseq
      %v987 = vshrl.u32 %v986, 7
      %v988 = vsub.s32 0, %v987
      %v989 = vrot.slane %v963, %v988
      %v991 = vadd.f32 %v984, %v989
      %v992 = vpack.c.bf16 %v991, %v991
      %vm993 = vcmask 257024
      %994 = vst.msk [vmem:[%s455] sm:$0xf] %vm993, %v992
      %p995 = scmp.lt.s32.totalorder %s25, 1
      %s996 = scalar_select %p995, %s25, 1
      %p997 = scmp.lt.s32.totalorder %s26, 1
      %s998 = scalar_select %p997, %s26, 1
      %s999 = smul.addr %s996, 2
      %s1000 = sadd.s32 %s998, %s999
      %s1001 = smul.addr %s1000, 4
      %s1002 = scalar_lea.vmem %s10, %s1001
      // Predicated region
      $region61: #{two_way_attention_block.3} parent=59 // pred_check
        %p1003 = pneg %p287
      $region62: #{two_way_attention_block.3} parent=59 // pred_check_branch
        %1005 = sbr.rel (%p1003) target = $region64
      $region63: #{two_way_attention_block.3} parent=59 // pred_region
        _
      $region64: #{two_way_attention_block.3} parent=59 // pred_fallthru
        _
    $region60: #{two_way_attention_block.3} parent=5 // pred_fallthru
      _
    %p1006 = scmp.le.s32.totalorder 2, %s16
    // Predicated region
    $region65: #{two_way_attention_block.3} parent=5 // pred_check
      %p1007 = pneg %p1006
    $region66: #{two_way_attention_block.3} parent=5 // pred_check_branch
      %1009 = sbr.rel (%p1007) target = $region68
    $region67: #{two_way_attention_block.3} parent=5 // pred_region
      %s1010 = ssub.s32 %s16, 2
      // Predicated region
      $region69: #{two_way_attention_block.3} parent=67 // pred_check
        %p1011 = pneg %p293
      $region70: #{two_way_attention_block.3} parent=67 // pred_check_branch
        %1013 = sbr.rel (%p1011) target = $region72
      $region71: #{two_way_attention_block.3} parent=67 // pred_region
        %p1014 = scmp.lt.s32.totalorder %s27, 1
        %s1015 = scalar_select %p1014, %s27, 1
        %p1016 = scmp.lt.s32.totalorder %s28, 1
        %s1017 = scalar_select %p1016, %s28, 1
        %s1018 = smul.addr %s1015, 2
        %s1019 = sadd.s32 %s1017, %s1018
        %s1020 = smul.addr %s1019, 4
        %s1021 = scalar_lea.vmem %s10, %s1020
      $region72: #{two_way_attention_block.3} parent=67 // pred_fallthru
        _
    $region68: #{two_way_attention_block.3} parent=5 // pred_fallthru
      _
  $region6: #{two_way_attention_block.3} parent=0 // loop_footer
    %s20 = sadd.s32 1, %s16
  $region7: #{two_way_attention_block.3} parent=0 // loop_footer_branch
    %15 = sbr.rel target = $region3
  $region8: #{two_way_attention_block.3} parent=0 // loop_exit
    _

// kernel: two_way_attention_block.2
$region0: #{two_way_attention_block.2}
  #allocation0 [shape = 'u32[]', space=smem, size = 0x4, offset = 0x4, fixed_abs, tag = 'smem constant byte address 0x4 - core index']
  #allocation1 [shape = 'u32[144,128]{1,0:T(1,128)}', space=vmem, size = 0x12000, scoped, tag = 'internal scratch']
  %s0 = inlined_call_operand.vmem [shape: bf16[2,8,32], index: 0, kind: input, shape index: {}]
  %s1 = inlined_call_operand.vmem [shape: bf16[2,8,32], index: 1, kind: input, shape index: {}]
  %s2 = inlined_call_operand.vmem [shape: bf16[2,16,32], index: 2, kind: input, shape index: {}]
  %s3 = inlined_call_operand.vmem [shape: bf16[2,16,32], index: 3, kind: input, shape index: {}]
  %s4 = inlined_call_operand.vmem [shape: bf16[32,96], index: 4, kind: input, shape index: {}]
  %s5 = inlined_call_operand.vmem [shape: f32[1,96], index: 5, kind: input, shape index: {}]
  %s6 = inlined_call_operand.vmem [shape: bf16[32,32], index: 6, kind: input, shape index: {}]
  %s7 = inlined_call_operand.vmem [shape: f32[1,32], index: 7, kind: input, shape index: {}]
  %s8 = inlined_call_operand.vmem [shape: f32[1,32], index: 8, kind: input, shape index: {}]
  %s9 = inlined_call_operand.vmem [shape: f32[1,32], index: 9, kind: input, shape index: {}]
  %s10 = inlined_call_operand.vmem [shape: bf16[32,48], index: 10, kind: input, shape index: {}]
  %s11 = inlined_call_operand.vmem [shape: f32[1,48], index: 11, kind: input, shape index: {}]
  %s12 = inlined_call_operand.vmem [shape: bf16[16,32], index: 12, kind: input, shape index: {}]
  %s13 = inlined_call_operand.vmem [shape: f32[1,32], index: 13, kind: input, shape index: {}]
  %s14 = inlined_call_operand.vmem [shape: f32[1,32], index: 14, kind: input, shape index: {}]
  %s15 = inlined_call_operand.vmem [shape: f32[1,32], index: 15, kind: input, shape index: {}]
  %s16 = inlined_call_operand.vmem [shape: bf16[32,64], index: 16, kind: input, shape index: {}]
  %s17 = inlined_call_operand.vmem [shape: f32[1,64], index: 17, kind: input, shape index: {}]
  %s18 = inlined_call_operand.vmem [shape: bf16[64,32], index: 18, kind: input, shape index: {}]
  %s19 = inlined_call_operand.vmem [shape: f32[1,32], index: 19, kind: input, shape index: {}]
  %s20 = inlined_call_operand.vmem [shape: f32[1,32], index: 20, kind: input, shape index: {}]
  %s21 = inlined_call_operand.vmem [shape: f32[1,32], index: 21, kind: input, shape index: {}]
  %s22 = inlined_call_operand.vmem [shape: bf16[2,8,32], index: 22, kind: output, shape index: {}]
  %s23 = sld [smem:[#allocation0]]
  $region121: #{two_way_attention_block.2} parent=0
    _
  %s25 = ssub.s32 1, %s23
  %s26 = scalar_select 0, %s25, %s23
  loop: start=0, step=1, limit=4
  $region2: #{two_way_attention_block.2} parent=0 // loop_pre_header
    _
  $region3: #{two_way_attention_block.2} parent=0 // loop_header
    %s28 = sphi 0, %s32
    %p29 = scmp.ge.s32.totalorder %s28, 4
    %s38 = sphi 0, %s40
    %s41 = sphi 0, %s38
    %s42 = sphi 0, %s41
    %s58 = sphi 0, %s42
    %s64 = sphi 0, %s66
    %s67 = sphi 0, %s64
    %s68 = sphi 0, %s67
    %s84 = sphi 0, %s68
    %s90 = sphi 0, %s92
    %s93 = sphi 0, %s90
    %s94 = sphi 0, %s93
    %s110 = sphi 0, %s94
    %s116 = sphi 0, %s118
    %s119 = sphi 0, %s116
    %s120 = sphi 0, %s119
    %s136 = sphi 0, %s120
    %s140 = sphi 0, %s140
    %s142 = sphi 0, %s140
    %s143 = sphi 0, %s142
    %s157 = sphi 0, %s143
    %s161 = sphi 0, %s161
    %s163 = sphi 0, %s161
    %s164 = sphi 0, %s163
    %s178 = sphi 0, %s164
    %s182 = sphi 0, %s182
    %s184 = sphi 0, %s182
    %s185 = sphi 0, %s184
    %s199 = sphi 0, %s185
    %s203 = sphi 0, %s203
    %s205 = sphi 0, %s203
    %s206 = sphi 0, %s205
    %s220 = sphi 0, %s206
    %s224 = sphi 0, %s224
    %s226 = sphi 0, %s224
    %s227 = sphi 0, %s226
    %s241 = sphi 0, %s227
    %s245 = sphi 0, %s245
    %s247 = sphi 0, %s245
    %s248 = sphi 0, %s247
    %s262 = sphi 0, %s248
    %s266 = sphi 0, %s266
    %s268 = sphi 0, %s266
    %s269 = sphi 0, %s268
    %s283 = sphi 0, %s269
    %s287 = sphi 0, %s287
    %s289 = sphi 0, %s287
    %s290 = sphi 0, %s289
    %s304 = sphi 0, %s290
    %s308 = sphi 0, %s308
    %s310 = sphi 0, %s308
    %s311 = sphi 0, %s310
    %s325 = sphi 0, %s311
    %s329 = sphi 0, %s329
    %s331 = sphi 0, %s329
    %s332 = sphi 0, %s331
    %s346 = sphi 0, %s332
    %s350 = sphi 0, %s350
    %s352 = sphi 0, %s350
    %s353 = sphi 0, %s352
    %s367 = sphi 0, %s353
    %s371 = sphi 0, %s371
    %s373 = sphi 0, %s371
    %s374 = sphi 0, %s373
    %s388 = sphi 0, %s374
    %s392 = sphi 0, %s392
    %s394 = sphi 0, %s392
    %s395 = sphi 0, %s394
    %s409 = sphi 0, %s395
    %s413 = sphi 0, %s413
    %s415 = sphi 0, %s413
    %s416 = sphi 0, %s415
    %s430 = sphi 0, %s416
    %s434 = sphi 0, %s434
    %s436 = sphi 0, %s434
    %s437 = sphi 0, %s436
    %s451 = sphi 0, %s437
    %s455 = sphi 0, %s455
    %s457 = sphi 0, %s455
    %s458 = sphi 0, %s457
    %s472 = sphi 0, %s458
    %s476 = sphi 0, %s476
    %s478 = sphi 0, %s476
    %s479 = sphi 0, %s478
    %s493 = sphi 0, %s479
    %s497 = sphi 0, %s497
    %s499 = sphi 0, %s497
    %s500 = sphi 0, %s499
    %s514 = sphi 0, %s500
    %s520 = sphi 0, %s522
    %s523 = sphi 0, %s520
    %s524 = sphi 0, %s523
    %s540 = sphi 0, %s524
  $region4: #{two_way_attention_block.2} parent=0 // loop_header_branch
    %31 = sbr.rel (%p29) target = $region8
  $region5: #{two_way_attention_block.2} parent=0 // loop_body
    %s33 = ssub.s32 %s28, 1
    %s34 = ssub.s32 %s28, 2
    %s35 = sadd.s32 %s28, 1
    %s36 = ssub.s32 %s28, %s35
    %p37 = scmp.eq.s32.totalorder %s36, 0
    %s39 = sadd.s32 %s38, 1
    %s40 = scalar_select %p37, %s38, %s39
    %p43 = pneg %p37
    %p44 = scmp.eq.s32.totalorder %s28, 1
    %p45 = por %p43, %p44
    %p46 = scmp.ne.s32.totalorder %s38, %s41
    %p47 = scmp.eq.s32.totalorder %s28, 0
    %p48 = por %p46, %p47
    %p49 = scmp.ne.s32.totalorder %s38, %s41
    %p50 = scmp.eq.s32.totalorder %s33, 1
    %p51 = por %p49, %p50
    %p52 = scmp.ne.s32.totalorder %s41, %s42
    %p53 = scmp.eq.s32.totalorder %s33, 0
    %p54 = por %p52, %p53
    %p55 = scmp.ne.s32.totalorder %s41, %s42
    %p56 = scmp.eq.s32.totalorder %s34, 1
    %p57 = por %p55, %p56
    %p59 = scmp.ne.s32.totalorder %s42, %s58
    %p60 = scmp.eq.s32.totalorder %s34, 0
    %p61 = por %p59, %p60
    %s62 = ssub.s32 %s28, %s35
    %p63 = scmp.eq.s32.totalorder %s62, 0
    %s65 = sadd.s32 %s64, 1
    %s66 = scalar_select %p63, %s64, %s65
    %p69 = pneg %p63
    %p70 = scmp.eq.s32.totalorder %s28, 1
    %p71 = por %p69, %p70
    %p72 = scmp.ne.s32.totalorder %s64, %s67
    %p73 = scmp.eq.s32.totalorder %s28, 0
    %p74 = por %p72, %p73
    %p75 = scmp.ne.s32.totalorder %s64, %s67
    %p76 = scmp.eq.s32.totalorder %s33, 1
    %p77 = por %p75, %p76
    %p78 = scmp.ne.s32.totalorder %s67, %s68
    %p79 = scmp.eq.s32.totalorder %s33, 0
    %p80 = por %p78, %p79
    %p81 = scmp.ne.s32.totalorder %s67, %s68
    %p82 = scmp.eq.s32.totalorder %s34, 1
    %p83 = por %p81, %p82
    %p85 = scmp.ne.s32.totalorder %s68, %s84
    %p86 = scmp.eq.s32.totalorder %s34, 0
    %p87 = por %p85, %p86
    %s88 = ssub.s32 %s28, %s35
    %p89 = scmp.eq.s32.totalorder %s88, 0
    %s91 = sadd.s32 %s90, 1
    %s92 = scalar_select %p89, %s90, %s91
    %p95 = pneg %p89
    %p96 = scmp.eq.s32.totalorder %s28, 1
    %p97 = por %p95, %p96
    %p98 = scmp.ne.s32.totalorder %s90, %s93
    %p99 = scmp.eq.s32.totalorder %s28, 0
    %p100 = por %p98, %p99
    %p101 = scmp.ne.s32.totalorder %s90, %s93
    %p102 = scmp.eq.s32.totalorder %s33, 1
    %p103 = por %p101, %p102
    %p104 = scmp.ne.s32.totalorder %s93, %s94
    %p105 = scmp.eq.s32.totalorder %s33, 0
    %p106 = por %p104, %p105
    %p107 = scmp.ne.s32.totalorder %s93, %s94
    %p108 = scmp.eq.s32.totalorder %s34, 1
    %p109 = por %p107, %p108
    %p111 = scmp.ne.s32.totalorder %s94, %s110
    %p112 = scmp.eq.s32.totalorder %s34, 0
    %p113 = por %p111, %p112
    %s114 = ssub.s32 %s28, %s35
    %p115 = scmp.eq.s32.totalorder %s114, 0
    %s117 = sadd.s32 %s116, 1
    %s118 = scalar_select %p115, %s116, %s117
    %p121 = pneg %p115
    %p122 = scmp.eq.s32.totalorder %s28, 1
    %p123 = por %p121, %p122
    %p124 = scmp.ne.s32.totalorder %s116, %s119
    %p125 = scmp.eq.s32.totalorder %s28, 0
    %p126 = por %p124, %p125
    %p127 = scmp.ne.s32.totalorder %s116, %s119
    %p128 = scmp.eq.s32.totalorder %s33, 1
    %p129 = por %p127, %p128
    %p130 = scmp.ne.s32.totalorder %s119, %s120
    %p131 = scmp.eq.s32.totalorder %s33, 0
    %p132 = por %p130, %p131
    %p133 = scmp.ne.s32.totalorder %s119, %s120
    %p134 = scmp.eq.s32.totalorder %s34, 1
    %p135 = por %p133, %p134
    %p137 = scmp.ne.s32.totalorder %s120, %s136
    %p138 = scmp.eq.s32.totalorder %s34, 0
    %p139 = por %p137, %p138
    %s141 = sadd.s32 %s140, 1
    %p144 = scmp.eq.s32.totalorder %s28, 1
    %p145 = scmp.ne.s32.totalorder %s140, %s142
    %p146 = scmp.eq.s32.totalorder %s28, 0
    %p147 = por %p145, %p146
    %p148 = scmp.ne.s32.totalorder %s140, %s142
    %p149 = scmp.eq.s32.totalorder %s33, 1
    %p150 = por %p148, %p149
    %p151 = scmp.ne.s32.totalorder %s142, %s143
    %p152 = scmp.eq.s32.totalorder %s33, 0
    %p153 = por %p151, %p152
    %p154 = scmp.ne.s32.totalorder %s142, %s143
    %p155 = scmp.eq.s32.totalorder %s34, 1
    %p156 = por %p154, %p155
    %p158 = scmp.ne.s32.totalorder %s143, %s157
    %p159 = scmp.eq.s32.totalorder %s34, 0
    %p160 = por %p158, %p159
    %s162 = sadd.s32 %s161, 1
    %p165 = scmp.eq.s32.totalorder %s28, 1
    %p166 = scmp.ne.s32.totalorder %s161, %s163
    %p167 = scmp.eq.s32.totalorder %s28, 0
    %p168 = por %p166, %p167
    %p169 = scmp.ne.s32.totalorder %s161, %s163
    %p170 = scmp.eq.s32.totalorder %s33, 1
    %p171 = por %p169, %p170
    %p172 = scmp.ne.s32.totalorder %s163, %s164
    %p173 = scmp.eq.s32.totalorder %s33, 0
    %p174 = por %p172, %p173
    %p175 = scmp.ne.s32.totalorder %s163, %s164
    %p176 = scmp.eq.s32.totalorder %s34, 1
    %p177 = por %p175, %p176
    %p179 = scmp.ne.s32.totalorder %s164, %s178
    %p180 = scmp.eq.s32.totalorder %s34, 0
    %p181 = por %p179, %p180
    %s183 = sadd.s32 %s182, 1
    %p186 = scmp.eq.s32.totalorder %s28, 1
    %p187 = scmp.ne.s32.totalorder %s182, %s184
    %p188 = scmp.eq.s32.totalorder %s28, 0
    %p189 = por %p187, %p188
    %p190 = scmp.ne.s32.totalorder %s182, %s184
    %p191 = scmp.eq.s32.totalorder %s33, 1
    %p192 = por %p190, %p191
    %p193 = scmp.ne.s32.totalorder %s184, %s185
    %p194 = scmp.eq.s32.totalorder %s33, 0
    %p195 = por %p193, %p194
    %p196 = scmp.ne.s32.totalorder %s184, %s185
    %p197 = scmp.eq.s32.totalorder %s34, 1
    %p198 = por %p196, %p197
    %p200 = scmp.ne.s32.totalorder %s185, %s199
    %p201 = scmp.eq.s32.totalorder %s34, 0
    %p202 = por %p200, %p201
    %s204 = sadd.s32 %s203, 1
    %p207 = scmp.eq.s32.totalorder %s28, 1
    %p208 = scmp.ne.s32.totalorder %s203, %s205
    %p209 = scmp.eq.s32.totalorder %s28, 0
    %p210 = por %p208, %p209
    %p211 = scmp.ne.s32.totalorder %s203, %s205
    %p212 = scmp.eq.s32.totalorder %s33, 1
    %p213 = por %p211, %p212
    %p214 = scmp.ne.s32.totalorder %s205, %s206
    %p215 = scmp.eq.s32.totalorder %s33, 0
    %p216 = por %p214, %p215
    %p217 = scmp.ne.s32.totalorder %s205, %s206
    %p218 = scmp.eq.s32.totalorder %s34, 1
    %p219 = por %p217, %p218
    %p221 = scmp.ne.s32.totalorder %s206, %s220
    %p222 = scmp.eq.s32.totalorder %s34, 0
    %p223 = por %p221, %p222
    %s225 = sadd.s32 %s224, 1
    %p228 = scmp.eq.s32.totalorder %s28, 1
    %p229 = scmp.ne.s32.totalorder %s224, %s226
    %p230 = scmp.eq.s32.totalorder %s28, 0
    %p231 = por %p229, %p230
    %p232 = scmp.ne.s32.totalorder %s224, %s226
    %p233 = scmp.eq.s32.totalorder %s33, 1
    %p234 = por %p232, %p233
    %p235 = scmp.ne.s32.totalorder %s226, %s227
    %p236 = scmp.eq.s32.totalorder %s33, 0
    %p237 = por %p235, %p236
    %p238 = scmp.ne.s32.totalorder %s226, %s227
    %p239 = scmp.eq.s32.totalorder %s34, 1
    %p240 = por %p238, %p239
    %p242 = scmp.ne.s32.totalorder %s227, %s241
    %p243 = scmp.eq.s32.totalorder %s34, 0
    %p244 = por %p242, %p243
    %s246 = sadd.s32 %s245, 1
    %p249 = scmp.eq.s32.totalorder %s28, 1
    %p250 = scmp.ne.s32.totalorder %s245, %s247
    %p251 = scmp.eq.s32.totalorder %s28, 0
    %p252 = por %p250, %p251
    %p253 = scmp.ne.s32.totalorder %s245, %s247
    %p254 = scmp.eq.s32.totalorder %s33, 1
    %p255 = por %p253, %p254
    %p256 = scmp.ne.s32.totalorder %s247, %s248
    %p257 = scmp.eq.s32.totalorder %s33, 0
    %p258 = por %p256, %p257
    %p259 = scmp.ne.s32.totalorder %s247, %s248
    %p260 = scmp.eq.s32.totalorder %s34, 1
    %p261 = por %p259, %p260
    %p263 = scmp.ne.s32.totalorder %s248, %s262
    %p264 = scmp.eq.s32.totalorder %s34, 0
    %p265 = por %p263, %p264
    %s267 = sadd.s32 %s266, 1
    %p270 = scmp.eq.s32.totalorder %s28, 1
    %p271 = scmp.ne.s32.totalorder %s266, %s268
    %p272 = scmp.eq.s32.totalorder %s28, 0
    %p273 = por %p271, %p272
    %p274 = scmp.ne.s32.totalorder %s266, %s268
    %p275 = scmp.eq.s32.totalorder %s33, 1
    %p276 = por %p274, %p275
    %p277 = scmp.ne.s32.totalorder %s268, %s269
    %p278 = scmp.eq.s32.totalorder %s33, 0
    %p279 = por %p277, %p278
    %p280 = scmp.ne.s32.totalorder %s268, %s269
    %p281 = scmp.eq.s32.totalorder %s34, 1
    %p282 = por %p280, %p281
    %p284 = scmp.ne.s32.totalorder %s269, %s283
    %p285 = scmp.eq.s32.totalorder %s34, 0
    %p286 = por %p284, %p285
    %s288 = sadd.s32 %s287, 1
    %p291 = scmp.eq.s32.totalorder %s28, 1
    %p292 = scmp.ne.s32.totalorder %s287, %s289
    %p293 = scmp.eq.s32.totalorder %s28, 0
    %p294 = por %p292, %p293
    %p295 = scmp.ne.s32.totalorder %s287, %s289
    %p296 = scmp.eq.s32.totalorder %s33, 1
    %p297 = por %p295, %p296
    %p298 = scmp.ne.s32.totalorder %s289, %s290
    %p299 = scmp.eq.s32.totalorder %s33, 0
    %p300 = por %p298, %p299
    %p301 = scmp.ne.s32.totalorder %s289, %s290
    %p302 = scmp.eq.s32.totalorder %s34, 1
    %p303 = por %p301, %p302
    %p305 = scmp.ne.s32.totalorder %s290, %s304
    %p306 = scmp.eq.s32.totalorder %s34, 0
    %p307 = por %p305, %p306
    %s309 = sadd.s32 %s308, 1
    %p312 = scmp.eq.s32.totalorder %s28, 1
    %p313 = scmp.ne.s32.totalorder %s308, %s310
    %p314 = scmp.eq.s32.totalorder %s28, 0
    %p315 = por %p313, %p314
    %p316 = scmp.ne.s32.totalorder %s308, %s310
    %p317 = scmp.eq.s32.totalorder %s33, 1
    %p318 = por %p316, %p317
    %p319 = scmp.ne.s32.totalorder %s310, %s311
    %p320 = scmp.eq.s32.totalorder %s33, 0
    %p321 = por %p319, %p320
    %p322 = scmp.ne.s32.totalorder %s310, %s311
    %p323 = scmp.eq.s32.totalorder %s34, 1
    %p324 = por %p322, %p323
    %p326 = scmp.ne.s32.totalorder %s311, %s325
    %p327 = scmp.eq.s32.totalorder %s34, 0
    %p328 = por %p326, %p327
    %s330 = sadd.s32 %s329, 1
    %p333 = scmp.eq.s32.totalorder %s28, 1
    %p334 = scmp.ne.s32.totalorder %s329, %s331
    %p335 = scmp.eq.s32.totalorder %s28, 0
    %p336 = por %p334, %p335
    %p337 = scmp.ne.s32.totalorder %s329, %s331
    %p338 = scmp.eq.s32.totalorder %s33, 1
    %p339 = por %p337, %p338
    %p340 = scmp.ne.s32.totalorder %s331, %s332
    %p341 = scmp.eq.s32.totalorder %s33, 0
    %p342 = por %p340, %p341
    %p343 = scmp.ne.s32.totalorder %s331, %s332
    %p344 = scmp.eq.s32.totalorder %s34, 1
    %p345 = por %p343, %p344
    %p347 = scmp.ne.s32.totalorder %s332, %s346
    %p348 = scmp.eq.s32.totalorder %s34, 0
    %p349 = por %p347, %p348
    %s351 = sadd.s32 %s350, 1
    %p354 = scmp.eq.s32.totalorder %s28, 1
    %p355 = scmp.ne.s32.totalorder %s350, %s352
    %p356 = scmp.eq.s32.totalorder %s28, 0
    %p357 = por %p355, %p356
    %p358 = scmp.ne.s32.totalorder %s350, %s352
    %p359 = scmp.eq.s32.totalorder %s33, 1
    %p360 = por %p358, %p359
    %p361 = scmp.ne.s32.totalorder %s352, %s353
    %p362 = scmp.eq.s32.totalorder %s33, 0
    %p363 = por %p361, %p362
    %p364 = scmp.ne.s32.totalorder %s352, %s353
    %p365 = scmp.eq.s32.totalorder %s34, 1
    %p366 = por %p364, %p365
    %p368 = scmp.ne.s32.totalorder %s353, %s367
    %p369 = scmp.eq.s32.totalorder %s34, 0
    %p370 = por %p368, %p369
    %s372 = sadd.s32 %s371, 1
    %p375 = scmp.eq.s32.totalorder %s28, 1
    %p376 = scmp.ne.s32.totalorder %s371, %s373
    %p377 = scmp.eq.s32.totalorder %s28, 0
    %p378 = por %p376, %p377
    %p379 = scmp.ne.s32.totalorder %s371, %s373
    %p380 = scmp.eq.s32.totalorder %s33, 1
    %p381 = por %p379, %p380
    %p382 = scmp.ne.s32.totalorder %s373, %s374
    %p383 = scmp.eq.s32.totalorder %s33, 0
    %p384 = por %p382, %p383
    %p385 = scmp.ne.s32.totalorder %s373, %s374
    %p386 = scmp.eq.s32.totalorder %s34, 1
    %p387 = por %p385, %p386
    %p389 = scmp.ne.s32.totalorder %s374, %s388
    %p390 = scmp.eq.s32.totalorder %s34, 0
    %p391 = por %p389, %p390
    %s393 = sadd.s32 %s392, 1
    %p396 = scmp.eq.s32.totalorder %s28, 1
    %p397 = scmp.ne.s32.totalorder %s392, %s394
    %p398 = scmp.eq.s32.totalorder %s28, 0
    %p399 = por %p397, %p398
    %p400 = scmp.ne.s32.totalorder %s392, %s394
    %p401 = scmp.eq.s32.totalorder %s33, 1
    %p402 = por %p400, %p401
    %p403 = scmp.ne.s32.totalorder %s394, %s395
    %p404 = scmp.eq.s32.totalorder %s33, 0
    %p405 = por %p403, %p404
    %p406 = scmp.ne.s32.totalorder %s394, %s395
    %p407 = scmp.eq.s32.totalorder %s34, 1
    %p408 = por %p406, %p407
    %p410 = scmp.ne.s32.totalorder %s395, %s409
    %p411 = scmp.eq.s32.totalorder %s34, 0
    %p412 = por %p410, %p411
    %s414 = sadd.s32 %s413, 1
    %p417 = scmp.eq.s32.totalorder %s28, 1
    %p418 = scmp.ne.s32.totalorder %s413, %s415
    %p419 = scmp.eq.s32.totalorder %s28, 0
    %p420 = por %p418, %p419
    %p421 = scmp.ne.s32.totalorder %s413, %s415
    %p422 = scmp.eq.s32.totalorder %s33, 1
    %p423 = por %p421, %p422
    %p424 = scmp.ne.s32.totalorder %s415, %s416
    %p425 = scmp.eq.s32.totalorder %s33, 0
    %p426 = por %p424, %p425
    %p427 = scmp.ne.s32.totalorder %s415, %s416
    %p428 = scmp.eq.s32.totalorder %s34, 1
    %p429 = por %p427, %p428
    %p431 = scmp.ne.s32.totalorder %s416, %s430
    %p432 = scmp.eq.s32.totalorder %s34, 0
    %p433 = por %p431, %p432
    %s435 = sadd.s32 %s434, 1
    %p438 = scmp.eq.s32.totalorder %s28, 1
    %p439 = scmp.ne.s32.totalorder %s434, %s436
    %p440 = scmp.eq.s32.totalorder %s28, 0
    %p441 = por %p439, %p440
    %p442 = scmp.ne.s32.totalorder %s434, %s436
    %p443 = scmp.eq.s32.totalorder %s33, 1
    %p444 = por %p442, %p443
    %p445 = scmp.ne.s32.totalorder %s436, %s437
    %p446 = scmp.eq.s32.totalorder %s33, 0
    %p447 = por %p445, %p446
    %p448 = scmp.ne.s32.totalorder %s436, %s437
    %p449 = scmp.eq.s32.totalorder %s34, 1
    %p450 = por %p448, %p449
    %p452 = scmp.ne.s32.totalorder %s437, %s451
    %p453 = scmp.eq.s32.totalorder %s34, 0
    %p454 = por %p452, %p453
    %s456 = sadd.s32 %s455, 1
    %p459 = scmp.eq.s32.totalorder %s28, 1
    %p460 = scmp.ne.s32.totalorder %s455, %s457
    %p461 = scmp.eq.s32.totalorder %s28, 0
    %p462 = por %p460, %p461
    %p463 = scmp.ne.s32.totalorder %s455, %s457
    %p464 = scmp.eq.s32.totalorder %s33, 1
    %p465 = por %p463, %p464
    %p466 = scmp.ne.s32.totalorder %s457, %s458
    %p467 = scmp.eq.s32.totalorder %s33, 0
    %p468 = por %p466, %p467
    %p469 = scmp.ne.s32.totalorder %s457, %s458
    %p470 = scmp.eq.s32.totalorder %s34, 1
    %p471 = por %p469, %p470
    %p473 = scmp.ne.s32.totalorder %s458, %s472
    %p474 = scmp.eq.s32.totalorder %s34, 0
    %p475 = por %p473, %p474
    %s477 = sadd.s32 %s476, 1
    %p480 = scmp.eq.s32.totalorder %s28, 1
    %p481 = scmp.ne.s32.totalorder %s476, %s478
    %p482 = scmp.eq.s32.totalorder %s28, 0
    %p483 = por %p481, %p482
    %p484 = scmp.ne.s32.totalorder %s476, %s478
    %p485 = scmp.eq.s32.totalorder %s33, 1
    %p486 = por %p484, %p485
    %p487 = scmp.ne.s32.totalorder %s478, %s479
    %p488 = scmp.eq.s32.totalorder %s33, 0
    %p489 = por %p487, %p488
    %p490 = scmp.ne.s32.totalorder %s478, %s479
    %p491 = scmp.eq.s32.totalorder %s34, 1
    %p492 = por %p490, %p491
    %p494 = scmp.ne.s32.totalorder %s479, %s493
    %p495 = scmp.eq.s32.totalorder %s34, 0
    %p496 = por %p494, %p495
    %s498 = sadd.s32 %s497, 1
    %p501 = scmp.eq.s32.totalorder %s28, 1
    %p502 = scmp.ne.s32.totalorder %s497, %s499
    %p503 = scmp.eq.s32.totalorder %s28, 0
    %p504 = por %p502, %p503
    %p505 = scmp.ne.s32.totalorder %s497, %s499
    %p506 = scmp.eq.s32.totalorder %s33, 1
    %p507 = por %p505, %p506
    %p508 = scmp.ne.s32.totalorder %s499, %s500
    %p509 = scmp.eq.s32.totalorder %s33, 0
    %p510 = por %p508, %p509
    %p511 = scmp.ne.s32.totalorder %s499, %s500
    %p512 = scmp.eq.s32.totalorder %s34, 1
    %p513 = por %p511, %p512
    %p515 = scmp.ne.s32.totalorder %s500, %s514
    %p516 = scmp.eq.s32.totalorder %s34, 0
    %p517 = por %p515, %p516
    %s518 = ssub.s32 %s28, %s35
    %p519 = scmp.eq.s32.totalorder %s518, 0
    %s521 = sadd.s32 %s520, 1
    %s522 = scalar_select %p519, %s520, %s521
    %p525 = pneg %p519
    %p526 = scmp.eq.s32.totalorder %s28, 1
    %p527 = por %p525, %p526
    %p528 = scmp.ne.s32.totalorder %s520, %s523
    %p529 = scmp.eq.s32.totalorder %s28, 0
    %p530 = por %p528, %p529
    %p531 = scmp.ne.s32.totalorder %s520, %s523
    %p532 = scmp.eq.s32.totalorder %s33, 1
    %p533 = por %p531, %p532
    %p534 = scmp.ne.s32.totalorder %s523, %s524
    %p535 = scmp.eq.s32.totalorder %s33, 0
    %p536 = por %p534, %p535
    %p537 = scmp.ne.s32.totalorder %s523, %s524
    %p538 = scmp.eq.s32.totalorder %s34, 1
    %p539 = por %p537, %p538
    %p541 = scmp.ne.s32.totalorder %s524, %s540
    %p542 = scmp.eq.s32.totalorder %s34, 0
    %p543 = por %p541, %p542
    %p544 = scmp.le.s32.totalorder 1, %s28
    %p545 = scmp.lt.s32.totalorder %s28, 3
    %p546 = pnand %p544, %p545
    %p547 = pneg %p546
    // Predicated region
    $region9: #{two_way_attention_block.2} parent=5 // pred_check
      _
    $region10: #{two_way_attention_block.2} parent=5 // pred_check_branch
      %549 = sbr.rel (%p546) target = $region12
    $region11: #{two_way_attention_block.2} parent=5 // pred_region
      %s550 = ssub.s32 %s28, 1
      // Predicated region
      $region13: #{two_way_attention_block.2} parent=11 // pred_check
        %p551 = pneg %p153
      $region14: #{two_way_attention_block.2} parent=11 // pred_check_branch
        %553 = sbr.rel (%p551) target = $region16
      $region15: #{two_way_attention_block.2} parent=11 // pred_region
        _
      $region16: #{two_way_attention_block.2} parent=11 // pred_fallthru
        _
      // Predicated region
      $region17: #{two_way_attention_block.2} parent=11 // pred_check
        %p554 = pneg %p174
      $region18: #{two_way_attention_block.2} parent=11 // pred_check_branch
        %556 = sbr.rel (%p554) target = $region20
      $region19: #{two_way_attention_block.2} parent=11 // pred_region
        _
      $region20: #{two_way_attention_block.2} parent=11 // pred_fallthru
        _
      // Predicated region
      $region21: #{two_way_attention_block.2} parent=11 // pred_check
        %p557 = pneg %p195
      $region22: #{two_way_attention_block.2} parent=11 // pred_check_branch
        %559 = sbr.rel (%p557) target = $region24
      $region23: #{two_way_attention_block.2} parent=11 // pred_region
        _
      $region24: #{two_way_attention_block.2} parent=11 // pred_fallthru
        _
      // Predicated region
      $region25: #{two_way_attention_block.2} parent=11 // pred_check
        %p560 = pneg %p216
      $region26: #{two_way_attention_block.2} parent=11 // pred_check_branch
        %562 = sbr.rel (%p560) target = $region28
      $region27: #{two_way_attention_block.2} parent=11 // pred_region
        _
      $region28: #{two_way_attention_block.2} parent=11 // pred_fallthru
        _
      // Predicated region
      $region29: #{two_way_attention_block.2} parent=11 // pred_check
        %p563 = pneg %p237
      $region30: #{two_way_attention_block.2} parent=11 // pred_check_branch
        %565 = sbr.rel (%p563) target = $region32
      $region31: #{two_way_attention_block.2} parent=11 // pred_region
        _
      $region32: #{two_way_attention_block.2} parent=11 // pred_fallthru
        _
      // Predicated region
      $region33: #{two_way_attention_block.2} parent=11 // pred_check
        %p566 = pneg %p258
      $region34: #{two_way_attention_block.2} parent=11 // pred_check_branch
        %568 = sbr.rel (%p566) target = $region36
      $region35: #{two_way_attention_block.2} parent=11 // pred_region
        _
      $region36: #{two_way_attention_block.2} parent=11 // pred_fallthru
        _
      // Predicated region
      $region37: #{two_way_attention_block.2} parent=11 // pred_check
        %p569 = pneg %p279
      $region38: #{two_way_attention_block.2} parent=11 // pred_check_branch
        %571 = sbr.rel (%p569) target = $region40
      $region39: #{two_way_attention_block.2} parent=11 // pred_region
        _
      $region40: #{two_way_attention_block.2} parent=11 // pred_fallthru
        _
      // Predicated region
      $region41: #{two_way_attention_block.2} parent=11 // pred_check
        %p572 = pneg %p300
      $region42: #{two_way_attention_block.2} parent=11 // pred_check_branch
        %574 = sbr.rel (%p572) target = $region44
      $region43: #{two_way_attention_block.2} parent=11 // pred_region
        _
      $region44: #{two_way_attention_block.2} parent=11 // pred_fallthru
        _
      // Predicated region
      $region45: #{two_way_attention_block.2} parent=11 // pred_check
        %p575 = pneg %p321
      $region46: #{two_way_attention_block.2} parent=11 // pred_check_branch
        %577 = sbr.rel (%p575) target = $region48
      $region47: #{two_way_attention_block.2} parent=11 // pred_region
        _
      $region48: #{two_way_attention_block.2} parent=11 // pred_fallthru
        _
      // Predicated region
      $region49: #{two_way_attention_block.2} parent=11 // pred_check
        %p578 = pneg %p342
      $region50: #{two_way_attention_block.2} parent=11 // pred_check_branch
        %580 = sbr.rel (%p578) target = $region52
      $region51: #{two_way_attention_block.2} parent=11 // pred_region
        _
      $region52: #{two_way_attention_block.2} parent=11 // pred_fallthru
        _
      // Predicated region
      $region53: #{two_way_attention_block.2} parent=11 // pred_check
        %p581 = pneg %p363
      $region54: #{two_way_attention_block.2} parent=11 // pred_check_branch
        %583 = sbr.rel (%p581) target = $region56
      $region55: #{two_way_attention_block.2} parent=11 // pred_region
        _
      $region56: #{two_way_attention_block.2} parent=11 // pred_fallthru
        _
      // Predicated region
      $region57: #{two_way_attention_block.2} parent=11 // pred_check
        %p584 = pneg %p384
      $region58: #{two_way_attention_block.2} parent=11 // pred_check_branch
        %586 = sbr.rel (%p584) target = $region60
      $region59: #{two_way_attention_block.2} parent=11 // pred_region
        _
      $region60: #{two_way_attention_block.2} parent=11 // pred_fallthru
        _
      // Predicated region
      $region61: #{two_way_attention_block.2} parent=11 // pred_check
        %p587 = pneg %p405
      $region62: #{two_way_attention_block.2} parent=11 // pred_check_branch
        %589 = sbr.rel (%p587) target = $region64
      $region63: #{two_way_attention_block.2} parent=11 // pred_region
        _
      $region64: #{two_way_attention_block.2} parent=11 // pred_fallthru
        _
      // Predicated region
      $region65: #{two_way_attention_block.2} parent=11 // pred_check
        %p590 = pneg %p426
      $region66: #{two_way_attention_block.2} parent=11 // pred_check_branch
        %592 = sbr.rel (%p590) target = $region68
      $region67: #{two_way_attention_block.2} parent=11 // pred_region
        _
      $region68: #{two_way_attention_block.2} parent=11 // pred_fallthru
        _
      // Predicated region
      $region69: #{two_way_attention_block.2} parent=11 // pred_check
        %p593 = pneg %p447
      $region70: #{two_way_attention_block.2} parent=11 // pred_check_branch
        %595 = sbr.rel (%p593) target = $region72
      $region71: #{two_way_attention_block.2} parent=11 // pred_region
        _
      $region72: #{two_way_attention_block.2} parent=11 // pred_fallthru
        _
      // Predicated region
      $region73: #{two_way_attention_block.2} parent=11 // pred_check
        %p596 = pneg %p468
      $region74: #{two_way_attention_block.2} parent=11 // pred_check_branch
        %598 = sbr.rel (%p596) target = $region76
      $region75: #{two_way_attention_block.2} parent=11 // pred_region
        _
      $region76: #{two_way_attention_block.2} parent=11 // pred_fallthru
        _
      // Predicated region
      $region77: #{two_way_attention_block.2} parent=11 // pred_check
        %p599 = pneg %p489
      $region78: #{two_way_attention_block.2} parent=11 // pred_check_branch
        %601 = sbr.rel (%p599) target = $region80
      $region79: #{two_way_attention_block.2} parent=11 // pred_region
        _
      $region80: #{two_way_attention_block.2} parent=11 // pred_fallthru
        _
      // Predicated region
      $region81: #{two_way_attention_block.2} parent=11 // pred_check
        %p602 = pneg %p510
      $region82: #{two_way_attention_block.2} parent=11 // pred_check_branch
        %604 = sbr.rel (%p602) target = $region84
      $region83: #{two_way_attention_block.2} parent=11 // pred_region
        _
      $region84: #{two_way_attention_block.2} parent=11 // pred_fallthru
        _
    $region12: #{two_way_attention_block.2} parent=5 // pred_fallthru
      _
    %p605 = scmp.lt.s32.totalorder %s28, 2
    // Predicated region
    $region85: #{two_way_attention_block.2} parent=5 // pred_check
      %p606 = pneg %p605
    $region86: #{two_way_attention_block.2} parent=5 // pred_check_branch
      %608 = sbr.rel (%p606) target = $region88
    $region87: #{two_way_attention_block.2} parent=5 // pred_region
      // Predicated region
      $region89: #{two_way_attention_block.2} parent=87 // pred_check
        %p609 = pneg %p48
      $region90: #{two_way_attention_block.2} parent=87 // pred_check_branch
        %611 = sbr.rel (%p609) target = $region92
      $region91: #{two_way_attention_block.2} parent=87 // pred_region
        %p612 = scmp.lt.s32.totalorder %s28, 1
        %s613 = scalar_select %p612, %s28, 1
        %s614 = smul.addr %s613, 4
        %s615 = scalar_lea.vmem %s0, %s614
      $region92: #{two_way_attention_block.2} parent=87 // pred_fallthru
        _
      // Predicated region
      $region93: #{two_way_attention_block.2} parent=87 // pred_check
        %p616 = pneg %p74
      $region94: #{two_way_attention_block.2} parent=87 // pred_check_branch
        %618 = sbr.rel (%p616) target = $region96
      $region95: #{two_way_attention_block.2} parent=87 // pred_region
        %p619 = scmp.lt.s32.totalorder %s28, 1
        %s620 = scalar_select %p619, %s28, 1
        %s621 = smul.addr %s620, 4
        %s622 = scalar_lea.vmem %s1, %s621
      $region96: #{two_way_attention_block.2} parent=87 // pred_fallthru
        _
      // Predicated region
      $region97: #{two_way_attention_block.2} parent=87 // pred_check
        %p623 = pneg %p100
      $region98: #{two_way_attention_block.2} parent=87 // pred_check_branch
        %625 = sbr.rel (%p623) target = $region100
      $region99: #{two_way_attention_block.2} parent=87 // pred_region
        %p626 = scmp.lt.s32.totalorder %s28, 1
        %s627 = scalar_select %p626, %s28, 1
        %s628 = smul.addr %s627, 2
        %s629 = smul.addr %s628, 4
        %s630 = scalar_lea.vmem %s2, %s629
      $region100: #{two_way_attention_block.2} parent=87 // pred_fallthru
        _
      // Predicated region
      $region101: #{two_way_attention_block.2} parent=87 // pred_check
        %p631 = pneg %p126
      $region102: #{two_way_attention_block.2} parent=87 // pred_check_branch
        %633 = sbr.rel (%p631) target = $region104
      $region103: #{two_way_attention_block.2} parent=87 // pred_region
        %p634 = scmp.lt.s32.totalorder %s28, 1
        %s635 = scalar_select %p634, %s28, 1
        %s636 = smul.addr %s635, 2
        %s637 = smul.addr %s636, 4
        %s638 = scalar_lea.vmem %s3, %s637
      $region104: #{two_way_attention_block.2} parent=87 // pred_fallthru
        _
    $region88: #{two_way_attention_block.2} parent=5 // pred_fallthru
      _
    %p639 = scmp.le.s32.totalorder 1, %s28
    %p640 = scmp.lt.s32.totalorder %s28, 3
    %p641 = pnand %p639, %p640
    %p642 = pneg %p641
    // Predicated region
    $region105: #{two_way_attention_block.2} parent=5 // pred_check
      _
    $region106: #{two_way_attention_block.2} parent=5 // pred_check_branch
      %644 = sbr.rel (%p641) target = $region108
    $region107: #{two_way_attention_block.2} parent=5 // pred_region
      %s645 = ssub.s32 %s28, 1
      %p646 = scmp.lt.s32.totalorder %s33, 1
      %s647 = scalar_select %p646, %s33, 1
      %s648 = smul.addr %s647, 4
      %s649 = scalar_lea.vmem %s0, %s648
      %p650 = pneg %p54
      %p651 = pneg %p51
      %p652 = scmp.lt.s32.totalorder %s33, 1
      %s653 = scalar_select %p652, %s33, 1
      %s654 = smul.addr %s653, 4
      %s655 = scalar_lea.vmem %s1, %s654
      %p656 = pneg %p80
      %p657 = pneg %p77
      %p658 = scmp.lt.s32.totalorder %s33, 1
      %s659 = scalar_select %p658, %s33, 1
      %s660 = smul.addr %s659, 2
      %s661 = smul.addr %s660, 4
      %s662 = scalar_lea.vmem %s2, %s661
      %p663 = pneg %p106
      %p664 = pneg %p103
      %p665 = scmp.lt.s32.totalorder %s33, 1
      %s666 = scalar_select %p665, %s33, 1
      %s667 = smul.addr %s666, 2
      %s668 = smul.addr %s667, 4
      %s669 = scalar_lea.vmem %s3, %s668
      %p670 = pneg %p132
      %p671 = pneg %p129
      %p672 = pneg %p153
      %p673 = pneg %p150
      %p674 = pneg %p174
      %p675 = pneg %p171
      %p676 = pneg %p195
      %p677 = pneg %p192
      %p678 = pneg %p216
      %p679 = pneg %p213
      %p680 = pneg %p237
      %p681 = pneg %p234
      %p682 = pneg %p258
      %p683 = pneg %p255
      %p684 = pneg %p279
      %p685 = pneg %p276
      %p686 = pneg %p300
      %p687 = pneg %p297
      %p688 = pneg %p321
      %p689 = pneg %p318
      %p690 = pneg %p342
      %p691 = pneg %p339
      %p692 = pneg %p363
      %p693 = pneg %p360
      %p694 = pneg %p384
      %p695 = pneg %p381
      %p696 = pneg %p405
      %p697 = pneg %p402
      %p698 = pneg %p426
      %p699 = pneg %p423
      %p700 = pneg %p447
      %p701 = pneg %p444
      %p702 = pneg %p468
      %p703 = pneg %p465
      %p704 = pneg %p489
      %p705 = pneg %p486
      %p706 = pneg %p510
      %p707 = pneg %p507
      %p708 = pneg %p536
      %p709 = pneg %p533
      %p710 = scmp.lt.s32.totalorder %s33, 1
      %s711 = scalar_select %p710, %s33, 1
      %s712 = smul.addr %s711, 4
      %s713 = scalar_lea.vmem %s22, %s712
      %p714 = scmp.lt.s32.totalorder %s33, 1
      %s715 = scalar_select %p714, %s33, 1
      %s716 = smul.addr %s715, 4
      %s717 = scalar_lea.vmem %s0, %s716
      %p718 = scmp.lt.s32.totalorder %s33, 1
      %s719 = scalar_select %p718, %s33, 1
      %s720 = smul.addr %s719, 4
      %s721 = scalar_lea.vmem %s1, %s720
      %p722 = scmp.lt.s32.totalorder %s33, 1
      %s723 = scalar_select %p722, %s33, 1
      %s724 = smul.addr %s723, 2
      %s725 = smul.addr %s724, 4
      %s726 = scalar_lea.vmem %s2, %s725
      %p727 = scmp.lt.s32.totalorder %s33, 1
      %s728 = scalar_select %p727, %s33, 1
      %s729 = smul.addr %s728, 2
      %s730 = smul.addr %s729, 4
      %s731 = scalar_lea.vmem %s3, %s730
      %p732 = scmp.lt.s32.totalorder %s33, 1
      %s733 = scalar_select %p732, %s33, 1
      %s734 = smul.addr %s733, 4
      %s735 = scalar_lea.vmem %s22, %s734
      %v737 = vld [vmem:[%s717] sm:$0xf]
      %v738 = vld [vmem:[%s721] sm:$0xf]
      %v739 = vld [vmem:[%s726] sm:$0xf]
      %v740 = vld [vmem:[%s726 + $0x4] sm:$0xf]
      %v741 = vld [vmem:[%s731] sm:$0xf]
      %v742 = vld [vmem:[%s731 + $0x4] sm:$0xf]
      %v743 = vld [vmem:[%s4] sm:$0xf]
      %v744 = vld [vmem:[%s4 + $0x4] sm:$0xf]
      %v745 = vld [vmem:[%s4 + $0x8] sm:$0xf]
      %v746 = vld [vmem:[%s4 + $0xc] sm:$0xf]
      %v747 = vld [vmem:[%s5] sm:$0x1]
      %v748 = vadd.bf16 %v737, %v738
      %v750 = vlaneseq
      %v751 = vshrl.u32 %v750, 7
      %v752 = vsub.s32 0, %v751
      %v753 = vrot.slane %v747, %v752
      %v759 = vunpack.c.l.b16 %v743
      %v760 = vunpack.c.l.b16 %v744
      %v761 = vunpack.c.l.b16 %v745
      %v762 = vunpack.c.l.b16 %v746
      %v763 = vpack.c.b16 %v760, %v759
      %v764 = vpack.c.b16 %v762, %v761
      %vm767 = vcmask 261120
      %v769 = vsel %vm767, %v748, 0
      %771 = vmatprep.subr.bf16.mxu0 0
      %772 = vmatpush1.bf16.msra.mxu0 %v763
      %773 = vmatprep.subr.bf16.mxu0 0
      %774 = vmatpush1.bf16.msra.mxu0 %v764
      %775 = vmatprep.subr.bf16.mxu0 0
      %776 = vmatpush1.bf16.msra.mxu0 0
      %777 = vmatprep.subr.bf16.mxu0 0
      %778 = vmatpush1.bf16.msra.mxu0 0
      %779 = vmatprep.subr.bf16.mxu0 0
      %780 = vmatpush1.bf16.msra.mxu0 0
      %781 = vmatprep.subr.bf16.mxu0 0
      %782 = vmatpush1.bf16.msra.mxu0 0
      %783 = vmatprep.subr.bf16.mxu0 0
      %784 = vmatpush1.bf16.msra.mxu0 0
      %785 = vmatprep.subr.bf16.mxu0 0
      %786 = vmatpush1.bf16.msra.mxu0 0
      %787 = vmatprep.subr.bf16.mxu0 0
      %788 = vmatpush1.bf16.msra.mxu0 0
      %789 = vmatprep.subr.bf16.mxu0 0
      %790 = vmatpush1.bf16.msra.mxu0 0
      %791 = vmatprep.subr.bf16.mxu0 0
      %792 = vmatpush1.bf16.msra.mxu0 0
      %793 = vmatprep.subr.bf16.mxu0 0
      %794 = vmatpush1.bf16.msra.mxu0 0
      %795 = vmatprep.subr.bf16.mxu0 0
      %796 = vmatpush1.bf16.msra.mxu0 0
      %797 = vmatprep.subr.bf16.mxu0 0
      %798 = vmatpush1.bf16.msra.mxu0 0
      %799 = vmatprep.subr.bf16.mxu0 0
      %800 = vmatpush1.bf16.msra.mxu0 0
      %801 = vmatprep.subr.bf16.mxu0 0
      %802 = vmatpush1.bf16.msra.mxu0 0
      %803 = vmatprep.mubr.bf16.mxu0 0
      %804 = vmatmul.mubr.bf16.gmra.mrb[0].mxu0 %v769
      %v805 = vpop.f32.mrb[0].mxu0
      %v806 = vadd.f32 %v753, %v805
      %v807 = vpop.f32.mrb[0].mxu0
      %v808 = vpop.f32.mrb[0].mxu0
      %v809 = vpop.f32.mrb[0].mxu0
      %810 = vdwg.mxu0
      %811 = vrot.lane.b32.xlu0 %v763, 64
      %v812 = vpop.permute.xlu0 %811
      %813 = vrot.lane.b32.xlu0 %v764, 64
      %v814 = vpop.permute.xlu0 %813
      %817 = vrot.lane.b32.xlu0 %v753, 64
      %v818 = vpop.permute.xlu0 %817
      %v821 = vsel %vm767, %v737, 0
      %823 = vmatprep.subr.bf16.mxu0 0
      %824 = vmatpush1.bf16.msra.mxu0 %v812
      %825 = vmatprep.subr.bf16.mxu0 0
      %826 = vmatpush1.bf16.msra.mxu0 %v814
      %827 = vmatprep.subr.bf16.mxu0 0
      %828 = vmatpush1.bf16.msra.mxu0 0
      %829 = vmatprep.subr.bf16.mxu0 0
      %830 = vmatpush1.bf16.msra.mxu0 0
      %831 = vmatprep.subr.bf16.mxu0 0
      %832 = vmatpush1.bf16.msra.mxu0 0
      %833 = vmatprep.subr.bf16.mxu0 0
      %834 = vmatpush1.bf16.msra.mxu0 0
      %835 = vmatprep.subr.bf16.mxu0 0
      %836 = vmatpush1.bf16.msra.mxu0 0
      %837 = vmatprep.subr.bf16.mxu0 0
      %838 = vmatpush1.bf16.msra.mxu0 0
      %839 = vmatprep.subr.bf16.mxu0 0
      %840 = vmatpush1.bf16.msra.mxu0 0
      %841 = vmatprep.subr.bf16.mxu0 0
      %842 = vmatpush1.bf16.msra.mxu0 0
      %843 = vmatprep.subr.bf16.mxu0 0
      %844 = vmatpush1.bf16.msra.mxu0 0
      %845 = vmatprep.subr.bf16.mxu0 0
      %846 = vmatpush1.bf16.msra.mxu0 0
      %847 = vmatprep.subr.bf16.mxu0 0
      %848 = vmatpush1.bf16.msra.mxu0 0
      %849 = vmatprep.subr.bf16.mxu0 0
      %850 = vmatpush1.bf16.msra.mxu0 0
      %851 = vmatprep.subr.bf16.mxu0 0
      %852 = vmatpush1.bf16.msra.mxu0 0
      %853 = vmatprep.subr.bf16.mxu0 0
      %854 = vmatpush1.bf16.msra.mxu0 0
      %855 = vmatprep.mubr.bf16.mxu0 0
      %856 = vmatmul.mubr.bf16.gmra.mrb[0].mxu0 %v821
      %v857 = vpop.f32.mrb[0].mxu0
      %v858 = vadd.f32 %v818, %v857
      %v859 = vpop.f32.mrb[0].mxu0
      %v860 = vpop.f32.mrb[0].mxu0
      %v861 = vpop.f32.mrb[0].mxu0
      %862 = vdwg.mxu0
      %v863 = vld [vmem:[%s6] sm:$0xf]
      %v864 = vld [vmem:[%s6 + $0x4] sm:$0xf]
      %v865 = vld [vmem:[%s6 + $0x8] sm:$0xf]
      %v866 = vld [vmem:[%s6 + $0xc] sm:$0xf]
      %v867 = vld [vmem:[%s7] sm:$0x1]
      %v868 = vpack.c.bf16 %v806, %v806
      %v869 = vpack.c.bf16 %v858, %v858
      %871 = vrot.lane.b32.xlu0 %v868, 96
      %v872 = vpop.permute.xlu0 %871
      %vm873 = vcmask 130048
      %v875 = vsel %vm873, %v868, 0
      %v878 = vsel %vm873, %v872, 0
      %880 = vmatprep.subr.bf16.mxu0 0
      %881 = vmatpush1.bf16.xpose.msra.mxu0 %v878
      %882 = vmatprep.subr.bf16.mxu0 0
      %883 = vmatpush1.bf16.xpose.msra.mxu0 0
      %884 = vmatprep.subr.bf16.mxu0 0
      %885 = vmatpush1.bf16.xpose.msra.mxu0 0
      %886 = vmatprep.subr.bf16.mxu0 0
      %887 = vmatpush1.bf16.xpose.msra.mxu0 0
      %888 = vmatprep.subr.bf16.mxu0 0
      %889 = vmatpush1.bf16.xpose.msra.mxu0 0
      %890 = vmatprep.subr.bf16.mxu0 0
      %891 = vmatpush1.bf16.xpose.msra.mxu0 0
      %892 = vmatprep.subr.bf16.mxu0 0
      %893 = vmatpush1.bf16.xpose.msra.mxu0 0
      %894 = vmatprep.subr.bf16.mxu0 0
      %895 = vmatpush1.bf16.xpose.msra.mxu0 0
      %896 = vmatprep.subr.bf16.mxu0 0
      %897 = vmatpush1.bf16.xpose.msra.mxu0 0
      %898 = vmatprep.subr.bf16.mxu0 0
      %899 = vmatpush1.bf16.xpose.msra.mxu0 0
      %900 = vmatprep.subr.bf16.mxu0 0
      %901 = vmatpush1.bf16.xpose.msra.mxu0 0
      %902 = vmatprep.subr.bf16.mxu0 0
      %903 = vmatpush1.bf16.xpose.msra.mxu0 0
      %904 = vmatprep.subr.bf16.mxu0 0
      %905 = vmatpush1.bf16.xpose.msra.mxu0 0
      %906 = vmatprep.subr.bf16.mxu0 0
      %907 = vmatpush1.bf16.xpose.msra.mxu0 0
      %908 = vmatprep.subr.bf16.mxu0 0
      %909 = vmatpush1.bf16.xpose.msra.mxu0 0
      %910 = vmatprep.subr.bf16.mxu0 0
      %911 = vmatpush1.bf16.xpose.msra.mxu0 0
      %912 = vmatprep.mubr.bf16.mxu0 0
      %913 = vmatmul.mubr.bf16.gmra.mrb[0].mxu0 %v875
      %v914 = vpop.f32.mrb[0].mxu0
      %v915 = vadd.f32 0.0, %v914
      %v916 = vpop.f32.mrb[0].mxu0
      %v917 = vpop.f32.mrb[0].mxu0
      %v918 = vpop.f32.mrb[0].mxu0
      %919 = vdwg.mxu0
      %vm920 = vcmask 64512
      %v921 = vsel %vm920, %v915, -inf
      %922 = vmax.xlane.f32.xlu0 %v921
      %v923 = vpop.xlane.xlu0 %922
      %v924 = vsub.f32 %v915, %v923
      %v925 = vmul.f32 %v924, 1.442695
      %v926 = vpow.pop %v925
      %v927 = vsel %vm920, %v926, 0.0
      %928 = vadd.xlane.f32.xlu0 %v927
      %v929 = vpop.xlane.xlu0 %928
      %v930 = vpack.c.bf16 %v926, %v926
      %v932 = vsel %vm920, %v930, 0
      %vm934 = vcmask 1043456
      %v936 = vsel %vm934, %v869, 0
      %938 = vmatprep.subr.bf16.mxu0 0
      %939 = vmatpush1.bf16.msra.mxu0 %v936
      %940 = vmatprep.subr.bf16.mxu0 0
      %941 = vmatpush1.bf16.msra.mxu0 0
      %942 = vmatprep.subr.bf16.mxu0 0
      %943 = vmatpush1.bf16.msra.mxu0 0
      %944 = vmatprep.subr.bf16.mxu0 0
      %945 = vmatpush1.bf16.msra.mxu0 0
      %946 = vmatprep.subr.bf16.mxu0 0
      %947 = vmatpush1.bf16.msra.mxu0 0
      %948 = vmatprep.subr.bf16.mxu0 0
      %949 = vmatpush1.bf16.msra.mxu0 0
      %950 = vmatprep.subr.bf16.mxu0 0
      %951 = vmatpush1.bf16.msra.mxu0 0
      %952 = vmatprep.subr.bf16.mxu0 0
      %953 = vmatpush1.bf16.msra.mxu0 0
      %954 = vmatprep.subr.bf16.mxu0 0
      %955 = vmatpush1.bf16.msra.mxu0 0
      %956 = vmatprep.subr.bf16.mxu0 0
      %957 = vmatpush1.bf16.msra.mxu0 0
      %958 = vmatprep.subr.bf16.mxu0 0
      %959 = vmatpush1.bf16.msra.mxu0 0
      %960 = vmatprep.subr.bf16.mxu0 0
      %961 = vmatpush1.bf16.msra.mxu0 0
      %962 = vmatprep.subr.bf16.mxu0 0
      %963 = vmatpush1.bf16.msra.mxu0 0
      %964 = vmatprep.subr.bf16.mxu0 0
      %965 = vmatpush1.bf16.msra.mxu0 0
      %966 = vmatprep.subr.bf16.mxu0 0
      %967 = vmatpush1.bf16.msra.mxu0 0
      %968 = vmatprep.subr.bf16.mxu0 0
      %969 = vmatpush1.bf16.msra.mxu0 0
      %970 = vmatprep.mubr.bf16.mxu0 0
      %971 = vmatmul.mubr.bf16.gmra.mrb[0].mxu0 %v932
      %v972 = vpop.f32.mrb[0].mxu0
      %v973 = vadd.f32 0.0, %v972
      %v974 = vpop.f32.mrb[0].mxu0
      %v975 = vpop.f32.mrb[0].mxu0
      %v976 = vpop.f32.mrb[0].mxu0
      %977 = vdwg.mxu0
      %v978 = vrcp.pop %v929
      %v979 = vmul.f32 %v973, %v978
      %v980 = vpack.c.bf16 %v979, %v979
      %981 = vrot.lane.b32.xlu0 %v868, 112
      %v982 = vpop.permute.xlu0 %981
      %983 = vrot.lane.b32.xlu0 %v868, 80
      %v984 = vpop.permute.xlu0 %983
      %v986 = vsel %vm873, %v982, 0
      %v989 = vsel %vm873, %v984, 0
      %991 = vmatprep.subr.bf16.mxu0 0
      %992 = vmatpush1.bf16.xpose.msra.mxu0 %v989
      %993 = vmatprep.subr.bf16.mxu0 0
      %994 = vmatpush1.bf16.xpose.msra.mxu0 0
      %995 = vmatprep.subr.bf16.mxu0 0
      %996 = vmatpush1.bf16.xpose.msra.mxu0 0
      %997 = vmatprep.subr.bf16.mxu0 0
      %998 = vmatpush1.bf16.xpose.msra.mxu0 0
      %999 = vmatprep.subr.bf16.mxu0 0
      %1000 = vmatpush1.bf16.xpose.msra.mxu0 0
      %1001 = vmatprep.subr.bf16.mxu0 0
      %1002 = vmatpush1.bf16.xpose.msra.mxu0 0
      %1003 = vmatprep.subr.bf16.mxu0 0
      %1004 = vmatpush1.bf16.xpose.msra.mxu0 0
      %1005 = vmatprep.subr.bf16.mxu0 0
      %1006 = vmatpush1.bf16.xpose.msra.mxu0 0
      %1007 = vmatprep.subr.bf16.mxu0 0
      %1008 = vmatpush1.bf16.xpose.msra.mxu0 0
      %1009 = vmatprep.subr.bf16.mxu0 0
      %1010 = vmatpush1.bf16.xpose.msra.mxu0 0
      %1011 = vmatprep.subr.bf16.mxu0 0
      %1012 = vmatpush1.bf16.xpose.msra.mxu0 0
      %1013 = vmatprep.subr.bf16.mxu0 0
      %1014 = vmatpush1.bf16.xpose.msra.mxu0 0
      %1015 = vmatprep.subr.bf16.mxu0 0
      %1016 = vmatpush1.bf16.xpose.msra.mxu0 0
      %1017 = vmatprep.subr.bf16.mxu0 0
      %1018 = vmatpush1.bf16.xpose.msra.mxu0 0
      %1019 = vmatprep.subr.bf16.mxu0 0
      %1020 = vmatpush1.bf16.xpose.msra.mxu0 0
      %1021 = vmatprep.subr.bf16.mxu0 0
      %1022 = vmatpush1.bf16.xpose.msra.mxu0 0
      %1023 = vmatprep.mubr.bf16.mxu0 0
      %1024 = vmatmul.mubr.bf16.gmra.mrb[0].mxu0 %v986
      %v1025 = vpop.f32.mrb[0].mxu0
      %v1026 = vadd.f32 0.0, %v1025
      %v1027 = vpop.f32.mrb[0].mxu0
      %v1028 = vpop.f32.mrb[0].mxu0
      %v1029 = vpop.f32.mrb[0].mxu0
      %1030 = vdwg.mxu0
      %v1031 = vsel %vm920, %v1026, -inf
      %1032 = vmax.xlane.f32.xlu0 %v1031
      %v1033 = vpop.xlane.xlu0 %1032
      %v1034 = vsub.f32 %v1026, %v1033
      %v1035 = vmul.f32 %v1034, 1.442695
      %v1036 = vpow.pop %v1035
      %v1037 = vsel %vm920, %v1036, 0.0
      %1038 = vadd.xlane.f32.xlu0 %v1037
      %v1039 = vpop.xlane.xlu0 %1038
      %v1040 = vpack.c.bf16 %v1036, %v1036
      %1042 = vrot.lane.b32.xlu0 %v869, 112
      %v1043 = vpop.permute.xlu0 %1042
      %v1045 = vsel %vm920, %v1040, 0
      %v1048 = vsel %vm934, %v1043, 0
      %1050 = vmatprep.subr.bf16.mxu0 0
      %1051 = vmatpush1.bf16.msra.mxu0 %v1048
      %1052 = vmatprep.subr.bf16.mxu0 0
      %1053 = vmatpush1.bf16.msra.mxu0 0
      %1054 = vmatprep.subr.bf16.mxu0 0
      %1055 = vmatpush1.bf16.msra.mxu0 0
      %1056 = vmatprep.subr.bf16.mxu0 0
      %1057 = vmatpush1.bf16.msra.mxu0 0
      %1058 = vmatprep.subr.bf16.mxu0 0
      %1059 = vmatpush1.bf16.msra.mxu0 0
      %1060 = vmatprep.subr.bf16.mxu0 0
      %1061 = vmatpush1.bf16.msra.mxu0 0
      %1062 = vmatprep.subr.bf16.mxu0 0
      %1063 = vmatpush1.bf16.msra.mxu0 0
      %1064 = vmatprep.subr.bf16.mxu0 0
      %1065 = vmatpush1.bf16.msra.mxu0 0
      %1066 = vmatprep.subr.bf16.mxu0 0
      %1067 = vmatpush1.bf16.msra.mxu0 0
      %1068 = vmatprep.subr.bf16.mxu0 0
      %1069 = vmatpush1.bf16.msra.mxu0 0
      %1070 = vmatprep.subr.bf16.mxu0 0
      %1071 = vmatpush1.bf16.msra.mxu0 0
      %1072 = vmatprep.subr.bf16.mxu0 0
      %1073 = vmatpush1.bf16.msra.mxu0 0
      %1074 = vmatprep.subr.bf16.mxu0 0
      %1075 = vmatpush1.bf16.msra.mxu0 0
      %1076 = vmatprep.subr.bf16.mxu0 0
      %1077 = vmatpush1.bf16.msra.mxu0 0
      %1078 = vmatprep.subr.bf16.mxu0 0
      %1079 = vmatpush1.bf16.msra.mxu0 0
      %1080 = vmatprep.subr.bf16.mxu0 0
      %1081 = vmatpush1.bf16.msra.mxu0 0
      %1082 = vmatprep.mubr.bf16.mxu0 0
      %1083 = vmatmul.mubr.bf16.gmra.mrb[0].mxu0 %v1045
      %v1084 = vpop.f32.mrb[0].mxu0
      %v1085 = vadd.f32 0.0, %v1084
      %v1086 = vpop.f32.mrb[0].mxu0
      %v1087 = vpop.f32.mrb[0].mxu0
      %v1088 = vpop.f32.mrb[0].mxu0
      %1089 = vdwg.mxu0
      %v1090 = vrcp.pop %v1039
      %v1091 = vmul.f32 %v1085, %v1090
      %v1092 = vpack.c.bf16 %v1091, %v1091
      %v1095 = vunpack.c.l.b16 %v865
      %v1096 = vunpack.c.l.b16 %v866
      %v1097 = vpack.c.b16 %v1096, %v1095
      %v1100 = vsel %vm873, %v1092, 0
      %1102 = vmatprep.subr.bf16.mxu0 0
      %1103 = vmatpush1.bf16.msra.mxu0 %v1097
      %1104 = vmatprep.subr.bf16.mxu0 0
      %1105 = vmatpush1.bf16.msra.mxu0 0
      %1106 = vmatprep.subr.bf16.mxu0 0
      %1107 = vmatpush1.bf16.msra.mxu0 0
      %1108 = vmatprep.subr.bf16.mxu0 0
      %1109 = vmatpush1.bf16.msra.mxu0 0
      %1110 = vmatprep.subr.bf16.mxu0 0
      %1111 = vmatpush1.bf16.msra.mxu0 0
      %1112 = vmatprep.subr.bf16.mxu0 0
      %1113 = vmatpush1.bf16.msra.mxu0 0
      %1114 = vmatprep.subr.bf16.mxu0 0
      %1115 = vmatpush1.bf16.msra.mxu0 0
      %1116 = vmatprep.subr.bf16.mxu0 0
      %1117 = vmatpush1.bf16.msra.mxu0 0
      %1118 = vmatprep.subr.bf16.mxu0 0
      %1119 = vmatpush1.bf16.msra.mxu0 0
      %1120 = vmatprep.subr.bf16.mxu0 0
      %1121 = vmatpush1.bf16.msra.mxu0 0
      %1122 = vmatprep.subr.bf16.mxu0 0
      %1123 = vmatpush1.bf16.msra.mxu0 0
      %1124 = vmatprep.subr.bf16.mxu0 0
      %1125 = vmatpush1.bf16.msra.mxu0 0
      %1126 = vmatprep.subr.bf16.mxu0 0
      %1127 = vmatpush1.bf16.msra.mxu0 0
      %1128 = vmatprep.subr.bf16.mxu0 0
      %1129 = vmatpush1.bf16.msra.mxu0 0
      %1130 = vmatprep.subr.bf16.mxu0 0
      %1131 = vmatpush1.bf16.msra.mxu0 0
      %1132 = vmatprep.subr.bf16.mxu0 0
      %1133 = vmatpush1.bf16.msra.mxu0 0
      %1134 = vmatprep.mubr.bf16.mxu0 0
      %1135 = vmatmul.mubr.bf16.gmra.mrb[0].mxu0 %v1100
      %v1136 = vpop.f32.mrb[0].mxu0
      %v1137 = vadd.f32 0.0, %v1136
      %v1138 = vpop.f32.mrb[0].mxu0
      %v1139 = vpop.f32.mrb[0].mxu0
      %v1140 = vpop.f32.mrb[0].mxu0
      %1141 = vdwg.mxu0
      %v1144 = vunpack.c.l.b16 %v863
      %v1145 = vunpack.c.l.b16 %v864
      %v1146 = vpack.c.b16 %v1145, %v1144
      %v1149 = vsel %vm873, %v980, 0
      %1151 = vmatprep.subr.bf16.mxu0 0
      %1152 = vmatpush1.bf16.msra.mxu0 %v1146
      %1153 = vmatprep.subr.bf16.mxu0 0
      %1154 = vmatpush1.bf16.msra.mxu0 0
      %1155 = vmatprep.subr.bf16.mxu0 0
      %1156 = vmatpush1.bf16.msra.mxu0 0
      %1157 = vmatprep.subr.bf16.mxu0 0
      %1158 = vmatpush1.bf16.msra.mxu0 0
      %1159 = vmatprep.subr.bf16.mxu0 0
      %1160 = vmatpush1.bf16.msra.mxu0 0
      %1161 = vmatprep.subr.bf16.mxu0 0
      %1162 = vmatpush1.bf16.msra.mxu0 0
      %1163 = vmatprep.subr.bf16.mxu0 0
      %1164 = vmatpush1.bf16.msra.mxu0 0
      %1165 = vmatprep.subr.bf16.mxu0 0
      %1166 = vmatpush1.bf16.msra.mxu0 0
      %1167 = vmatprep.subr.bf16.mxu0 0
      %1168 = vmatpush1.bf16.msra.mxu0 0
      %1169 = vmatprep.subr.bf16.mxu0 0
      %1170 = vmatpush1.bf16.msra.mxu0 0
      %1171 = vmatprep.subr.bf16.mxu0 0
      %1172 = vmatpush1.bf16.msra.mxu0 0
      %1173 = vmatprep.subr.bf16.mxu0 0
      %1174 = vmatpush1.bf16.msra.mxu0 0
      %1175 = vmatprep.subr.bf16.mxu0 0
      %1176 = vmatpush1.bf16.msra.mxu0 0
      %1177 = vmatprep.subr.bf16.mxu0 0
      %1178 = vmatpush1.bf16.msra.mxu0 0
      %1179 = vmatprep.subr.bf16.mxu0 0
      %1180 = vmatpush1.bf16.msra.mxu0 0
      %1181 = vmatprep.subr.bf16.mxu0 0
      %1182 = vmatpush1.bf16.msra.mxu0 0
      %1183 = vmatprep.mubr.bf16.mxu0 0
      %1184 = vmatmul.mubr.bf16.gmra.mrb[0].mxu0 %v1149
      %v1185 = vpop.f32.mrb[0].mxu0
      %v1186 = vadd.f32 %v1137, %v1185
      %v1187 = vpop.f32.mrb[0].mxu0
      %v1188 = vpop.f32.mrb[0].mxu0
      %v1189 = vpop.f32.mrb[0].mxu0
      %1190 = vdwg.mxu0
      %v1192 = vlaneseq
      %v1193 = vshrl.u32 %v1192, 7
      %v1194 = vsub.s32 0, %v1193
      %v1195 = vrot.slane %v867, %v1194
      %v1197 = vadd.f32 %v1186, %v1195
      %v1198 = vunpack.c.l.bf16 %v737
      %v1199 = vadd.f32 %v1197, %v1198
      %v1200 = vld [vmem:[%s8] sm:$0x1]
      %v1201 = vld [vmem:[%s9] sm:$0x1]
      %v1202 = vsel %vm767, %v1199, 0.0
      %1203 = vadd.xlane.f32.xlu0 %v1202
      %v1204 = vpop.xlane.xlu0 %1203
      %v1205 = vrcp.pop 32.0
      %v1206 = vmul.f32 %v1204, %v1205
      %v1207 = vsub.f32 %v1199, %v1206
      %v1208 = vmul.f32 %v1207, %v1207
      %v1209 = vsel %vm767, %v1208, 0.0
      %1210 = vadd.xlane.f32.xlu0 %v1209
      %v1211 = vpop.xlane.xlu0 %1210
      %v1212 = vmul.f32 %v1211, %v1205
      %v1213 = vadd.f32 %v1212, 1e-05
      %v1214 = vrsqrt.pop %v1213
      %v1215 = vmul.f32 %v1207, %v1214
      %v1217 = vlaneseq
      %v1218 = vshrl.u32 %v1217, 7
      %v1219 = vsub.s32 0, %v1218
      %v1220 = vrot.slane %v1200, %v1219
      %v1222 = vmul.f32 %v1215, %v1220
      %v1224 = vlaneseq
      %v1225 = vshrl.u32 %v1224, 7
      %v1226 = vsub.s32 0, %v1225
      %v1227 = vrot.slane %v1201, %v1226
      %v1229 = vadd.f32 %v1222, %v1227
      %v1230 = vld [vmem:[%s10] sm:$0xf]
      %v1231 = vld [vmem:[%s10 + $0x4] sm:$0xf]
      %v1232 = vld [vmem:[%s10 + $0x8] sm:$0xf]
      %v1233 = vld [vmem:[%s10 + $0xc] sm:$0xf]
      %v1234 = vld [vmem:[%s11] sm:$0x1]
      %v1235 = vunpack.c.l.bf16 %v738
      %v1236 = vadd.f32 %v1229, %v1235
      %v1237 = vpack.c.bf16 %v1236, %v1236
      %v1238 = vadd.bf16 %v739, %v741
      %v1239 = vadd.bf16 %v740, %v742
      %v1241 = vlaneseq
      %v1242 = vshrl.u32 %v1241, 7
      %v1243 = vsub.s32 0, %v1242
      %v1244 = vrot.slane %v1234, %v1243
      %v1250 = vunpack.c.l.b16 %v1230
      %v1251 = vunpack.c.l.b16 %v1231
      %v1252 = vunpack.c.l.b16 %v1232
      %v1253 = vunpack.c.l.b16 %v1233
      %v1254 = vpack.c.b16 %v1251, %v1250
      %v1255 = vpack.c.b16 %v1253, %v1252
      %v1259 = vsel %vm767, %v1237, 0
      %1261 = vmatprep.subr.bf16.mxu0 0
      %1262 = vmatpush1.bf16.msra.mxu0 %v1254
      %1263 = vmatprep.subr.bf16.mxu0 0
      %1264 = vmatpush1.bf16.msra.mxu0 %v1255
      %1265 = vmatprep.subr.bf16.mxu0 0
      %1266 = vmatpush1.bf16.msra.mxu0 0
      %1267 = vmatprep.subr.bf16.mxu0 0
      %1268 = vmatpush1.bf16.msra.mxu0 0
      %1269 = vmatprep.subr.bf16.mxu0 0
      %1270 = vmatpush1.bf16.msra.mxu0 0
      %1271 = vmatprep.subr.bf16.mxu0 0
      %1272 = vmatpush1.bf16.msra.mxu0 0
      %1273 = vmatprep.subr.bf16.mxu0 0
      %1274 = vmatpush1.bf16.msra.mxu0 0
      %1275 = vmatprep.subr.bf16.mxu0 0
      %1276 = vmatpush1.bf16.msra.mxu0 0
      %1277 = vmatprep.subr.bf16.mxu0 0
      %1278 = vmatpush1.bf16.msra.mxu0 0
      %1279 = vmatprep.subr.bf16.mxu0 0
      %1280 = vmatpush1.bf16.msra.mxu0 0
      %1281 = vmatprep.subr.bf16.mxu0 0
      %1282 = vmatpush1.bf16.msra.mxu0 0
      %1283 = vmatprep.subr.bf16.mxu0 0
      %1284 = vmatpush1.bf16.msra.mxu0 0
      %1285 = vmatprep.subr.bf16.mxu0 0
      %1286 = vmatpush1.bf16.msra.mxu0 0
      %1287 = vmatprep.subr.bf16.mxu0 0
      %1288 = vmatpush1.bf16.msra.mxu0 0
      %1289 = vmatprep.subr.bf16.mxu0 0
      %1290 = vmatpush1.bf16.msra.mxu0 0
      %1291 = vmatprep.subr.bf16.mxu0 0
      %1292 = vmatpush1.bf16.msra.mxu0 0
      %1293 = vmatprep.mubr.bf16.mxu0 0
      %1294 = vmatmul.mubr.bf16.gmra.mrb[0].mxu0 %v1259
      %v1295 = vpop.f32.mrb[0].mxu0
      %v1296 = vadd.f32 %v1244, %v1295
      %v1297 = vpop.f32.mrb[0].mxu0
      %v1298 = vpop.f32.mrb[0].mxu0
      %v1299 = vpop.f32.mrb[0].mxu0
      %1300 = vdwg.mxu0
      %v1303 = vunpack.c.l.b16 %v1238
      %v1304 = vunpack.c.l.b16 %v1239
      %v1305 = vpack.c.b16 %v1304, %v1303
      %1306 = vrot.lane.b32.xlu0 %v1254, 112
      %v1307 = vpop.permute.xlu0 %1306
      %1308 = vrot.lane.b32.xlu0 %v1255, 112
      %v1309 = vpop.permute.xlu0 %1308
      %1312 = vrot.lane.b32.xlu0 %v1244, 112
      %v1313 = vpop.permute.xlu0 %1312
      %v1316 = vsel %vm767, %v1305, 0
      %1318 = vmatprep.subr.bf16.mxu0 0
      %1319 = vmatpush1.bf16.msra.mxu0 %v1307
      %1320 = vmatprep.subr.bf16.mxu0 0
      %1321 = vmatpush1.bf16.msra.mxu0 %v1309
      %1322 = vmatprep.subr.bf16.mxu0 0
      %1323 = vmatpush1.bf16.msra.mxu0 0
      %1324 = vmatprep.subr.bf16.mxu0 0
      %1325 = vmatpush1.bf16.msra.mxu0 0
      %1326 = vmatprep.subr.bf16.mxu0 0
      %1327 = vmatpush1.bf16.msra.mxu0 0
      %1328 = vmatprep.subr.bf16.mxu0 0
      %1329 = vmatpush1.bf16.msra.mxu0 0
      %1330 = vmatprep.subr.bf16.mxu0 0
      %1331 = vmatpush1.bf16.msra.mxu0 0
      %1332 = vmatprep.subr.bf16.mxu0 0
      %1333 = vmatpush1.bf16.msra.mxu0 0
      %1334 = vmatprep.subr.bf16.mxu0 0
      %1335 = vmatpush1.bf16.msra.mxu0 0
      %1336 = vmatprep.subr.bf16.mxu0 0
      %1337 = vmatpush1.bf16.msra.mxu0 0
      %1338 = vmatprep.subr.bf16.mxu0 0
      %1339 = vmatpush1.bf16.msra.mxu0 0
      %1340 = vmatprep.subr.bf16.mxu0 0
      %1341 = vmatpush1.bf16.msra.mxu0 0
      %1342 = vmatprep.subr.bf16.mxu0 0
      %1343 = vmatpush1.bf16.msra.mxu0 0
      %1344 = vmatprep.subr.bf16.mxu0 0
      %1345 = vmatpush1.bf16.msra.mxu0 0
      %1346 = vmatprep.subr.bf16.mxu0 0
      %1347 = vmatpush1.bf16.msra.mxu0 0
      %1348 = vmatprep.subr.bf16.mxu0 0
      %1349 = vmatpush1.bf16.msra.mxu0 0
      %1350 = vmatprep.mubr.bf16.mxu0 0
      %1351 = vmatmul.mubr.bf16.gmra.mrb[0].mxu0 %v1316
      %v1352 = vpop.f32.mrb[0].mxu0
      %v1353 = vadd.f32 %v1313, %v1352
      %v1354 = vpop.f32.mrb[0].mxu0
      %v1355 = vpop.f32.mrb[0].mxu0
      %v1356 = vadd.f32 %v1313, %v1355
      %v1357 = vpop.f32.mrb[0].mxu0
      %1358 = vdwg.mxu0
      %v1361 = vunpack.c.l.b16 %v739
      %v1362 = vunpack.c.l.b16 %v740
      %v1363 = vpack.c.b16 %v1362, %v1361
      %1364 = vrot.lane.b32.xlu0 %v1254, 96
      %v1365 = vpop.permute.xlu0 %1364
      %1366 = vrot.lane.b32.xlu0 %v1255, 96
      %v1367 = vpop.permute.xlu0 %1366
      %1370 = vrot.lane.b32.xlu0 %v1244, 96
      %v1371 = vpop.permute.xlu0 %1370
      %v1374 = vsel %vm767, %v1363, 0
      %1376 = vmatprep.subr.bf16.mxu0 0
      %1377 = vmatpush1.bf16.msra.mxu0 %v1365
      %1378 = vmatprep.subr.bf16.mxu0 0
      %1379 = vmatpush1.bf16.msra.mxu0 %v1367
      %1380 = vmatprep.subr.bf16.mxu0 0
      %1381 = vmatpush1.bf16.msra.mxu0 0
      %1382 = vmatprep.subr.bf16.mxu0 0
      %1383 = vmatpush1.bf16.msra.mxu0 0
      %1384 = vmatprep.subr.bf16.mxu0 0
      %1385 = vmatpush1.bf16.msra.mxu0 0
      %1386 = vmatprep.subr.bf16.mxu0 0
      %1387 = vmatpush1.bf16.msra.mxu0 0
      %1388 = vmatprep.subr.bf16.mxu0 0
      %1389 = vmatpush1.bf16.msra.mxu0 0
      %1390 = vmatprep.subr.bf16.mxu0 0
      %1391 = vmatpush1.bf16.msra.mxu0 0
      %1392 = vmatprep.subr.bf16.mxu0 0
      %1393 = vmatpush1.bf16.msra.mxu0 0
      %1394 = vmatprep.subr.bf16.mxu0 0
      %1395 = vmatpush1.bf16.msra.mxu0 0
      %1396 = vmatprep.subr.bf16.mxu0 0
      %1397 = vmatpush1.bf16.msra.mxu0 0
      %1398 = vmatprep.subr.bf16.mxu0 0
      %1399 = vmatpush1.bf16.msra.mxu0 0
      %1400 = vmatprep.subr.bf16.mxu0 0
      %1401 = vmatpush1.bf16.msra.mxu0 0
      %1402 = vmatprep.subr.bf16.mxu0 0
      %1403 = vmatpush1.bf16.msra.mxu0 0
      %1404 = vmatprep.subr.bf16.mxu0 0
      %1405 = vmatpush1.bf16.msra.mxu0 0
      %1406 = vmatprep.subr.bf16.mxu0 0
      %1407 = vmatpush1.bf16.msra.mxu0 0
      %1408 = vmatprep.mubr.bf16.mxu0 0
      %1409 = vmatmul.mubr.bf16.gmra.mrb[0].mxu0 %v1374
      %v1410 = vpop.f32.mrb[0].mxu0
      %v1411 = vadd.f32 %v1371, %v1410
      %v1412 = vpop.f32.mrb[0].mxu0
      %v1413 = vpop.f32.mrb[0].mxu0
      %v1414 = vadd.f32 %v1371, %v1413
      %v1415 = vpop.f32.mrb[0].mxu0
      %1416 = vdwg.mxu0
      %v1417 = vld [vmem:[%s12] sm:$0xf]
      %v1418 = vld [vmem:[%s12 + $0x4] sm:$0xf]
      %v1419 = vld [vmem:[%s13] sm:$0x1]
      %v1420 = vpack.c.bf16 %v1296, %v1296
      %v1421 = vpack.c.bf16 %v1356, %v1353
      %v1422 = vpack.c.bf16 %v1414, %v1411
      %v1424 = vsel %vm920, %v1420, 0
      %v1427 = vsel %vm920, %v1421, 0
      %1429 = vmatprep.subr.bf16.mxu0 0
      %1430 = vmatpush1.bf16.xpose.msra.mxu0 %v1427
      %1431 = vmatprep.subr.bf16.mxu0 0
      %1432 = vmatpush1.bf16.xpose.msra.mxu0 0
      %1433 = vmatprep.subr.bf16.mxu0 0
      %1434 = vmatpush1.bf16.xpose.msra.mxu0 0
      %1435 = vmatprep.subr.bf16.mxu0 0
      %1436 = vmatpush1.bf16.xpose.msra.mxu0 0
      %1437 = vmatprep.subr.bf16.mxu0 0
      %1438 = vmatpush1.bf16.xpose.msra.mxu0 0
      %1439 = vmatprep.subr.bf16.mxu0 0
      %1440 = vmatpush1.bf16.xpose.msra.mxu0 0
      %1441 = vmatprep.subr.bf16.mxu0 0
      %1442 = vmatpush1.bf16.xpose.msra.mxu0 0
      %1443 = vmatprep.subr.bf16.mxu0 0
      %1444 = vmatpush1.bf16.xpose.msra.mxu0 0
      %1445 = vmatprep.subr.bf16.mxu0 0
      %1446 = vmatpush1.bf16.xpose.msra.mxu0 0
      %1447 = vmatprep.subr.bf16.mxu0 0
      %1448 = vmatpush1.bf16.xpose.msra.mxu0 0
      %1449 = vmatprep.subr.bf16.mxu0 0
      %1450 = vmatpush1.bf16.xpose.msra.mxu0 0
      %1451 = vmatprep.subr.bf16.mxu0 0
      %1452 = vmatpush1.bf16.xpose.msra.mxu0 0
      %1453 = vmatprep.subr.bf16.mxu0 0
      %1454 = vmatpush1.bf16.xpose.msra.mxu0 0
      %1455 = vmatprep.subr.bf16.mxu0 0
      %1456 = vmatpush1.bf16.xpose.msra.mxu0 0
      %1457 = vmatprep.subr.bf16.mxu0 0
      %1458 = vmatpush1.bf16.xpose.msra.mxu0 0
      %1459 = vmatprep.subr.bf16.mxu0 0
      %1460 = vmatpush1.bf16.xpose.msra.mxu0 0
      %1461 = vmatprep.mubr.bf16.mxu0 0
      %1462 = vmatmul.mubr.bf16.gmra.mrb[0].mxu0 %v1424
      %v1463 = vpop.f32.mrb[0].mxu0
      %v1464 = vadd.f32 0.0, %v1463
      %v1465 = vpop.f32.mrb[0].mxu0
      %v1466 = vpop.f32.mrb[0].mxu0
      %v1467 = vpop.f32.mrb[0].mxu0
      %1468 = vdwg.mxu0
      %v1469 = vsel %vm873, %v1464, -inf
      %1470 = vmax.xlane.f32.xlu0 %v1469
      %v1471 = vpop.xlane.xlu0 %1470
      %v1472 = vsub.f32 %v1464, %v1471
      %v1473 = vmul.f32 %v1472, 1.442695
      %v1474 = vpow.pop %v1473
      %v1475 = vsel %vm873, %v1474, 0.0
      %1476 = vadd.xlane.f32.xlu0 %v1475
      %v1477 = vpop.xlane.xlu0 %1476
      %v1478 = vpack.c.bf16 %v1474, %v1474
      %v1480 = vsel %vm873, %v1478, 0
      %1482 = vmatprep.subr.bf16.mxu0 0
      %1483 = vmatpush1.bf16.msra.mxu0 %v1422
      %1484 = vmatprep.subr.bf16.mxu0 0
      %1485 = vmatpush1.bf16.msra.mxu0 0
      %1486 = vmatprep.subr.bf16.mxu0 0
      %1487 = vmatpush1.bf16.msra.mxu0 0
      %1488 = vmatprep.subr.bf16.mxu0 0
      %1489 = vmatpush1.bf16.msra.mxu0 0
      %1490 = vmatprep.subr.bf16.mxu0 0
      %1491 = vmatpush1.bf16.msra.mxu0 0
      %1492 = vmatprep.subr.bf16.mxu0 0
      %1493 = vmatpush1.bf16.msra.mxu0 0
      %1494 = vmatprep.subr.bf16.mxu0 0
      %1495 = vmatpush1.bf16.msra.mxu0 0
      %1496 = vmatprep.subr.bf16.mxu0 0
      %1497 = vmatpush1.bf16.msra.mxu0 0
      %1498 = vmatprep.subr.bf16.mxu0 0
      %1499 = vmatpush1.bf16.msra.mxu0 0
      %1500 = vmatprep.subr.bf16.mxu0 0
      %1501 = vmatpush1.bf16.msra.mxu0 0
      %1502 = vmatprep.subr.bf16.mxu0 0
      %1503 = vmatpush1.bf16.msra.mxu0 0
      %1504 = vmatprep.subr.bf16.mxu0 0
      %1505 = vmatpush1.bf16.msra.mxu0 0
      %1506 = vmatprep.subr.bf16.mxu0 0
      %1507 = vmatpush1.bf16.msra.mxu0 0
      %1508 = vmatprep.subr.bf16.mxu0 0
      %1509 = vmatpush1.bf16.msra.mxu0 0
      %1510 = vmatprep.subr.bf16.mxu0 0
      %1511 = vmatpush1.bf16.msra.mxu0 0
      %1512 = vmatprep.subr.bf16.mxu0 0
      %1513 = vmatpush1.bf16.msra.mxu0 0
      %1514 = vmatprep.mubr.bf16.mxu0 0
      %1515 = vmatmul.mubr.bf16.gmra.mrb[0].mxu0 %v1480
      %v1516 = vpop.f32.mrb[0].mxu0
      %v1517 = vadd.f32 0.0, %v1516
      %v1518 = vpop.f32.mrb[0].mxu0
      %v1519 = vpop.f32.mrb[0].mxu0
      %v1520 = vpop.f32.mrb[0].mxu0
      %1521 = vdwg.mxu0
      %v1522 = vrcp.pop %v1477
      %v1523 = vmul.f32 %v1517, %v1522
      %v1524 = vpack.c.bf16 %v1523, %v1523
      %1526 = vrot.lane.b32.xlu0 %v1420, 120
      %v1527 = vpop.permute.xlu0 %1526
      %1529 = vrot.lane.b32.xlu0 %v1421, 120
      %v1530 = vpop.permute.xlu0 %1529
      %v1532 = vsel %vm920, %v1527, 0
      %v1535 = vsel %vm920, %v1530, 0
      %1537 = vmatprep.subr.bf16.mxu0 0
      %1538 = vmatpush1.bf16.xpose.msra.mxu0 %v1535
      %1539 = vmatprep.subr.bf16.mxu0 0
      %1540 = vmatpush1.bf16.xpose.msra.mxu0 0
      %1541 = vmatprep.subr.bf16.mxu0 0
      %1542 = vmatpush1.bf16.xpose.msra.mxu0 0
      %1543 = vmatprep.subr.bf16.mxu0 0
      %1544 = vmatpush1.bf16.xpose.msra.mxu0 0
      %1545 = vmatprep.subr.bf16.mxu0 0
      %1546 = vmatpush1.bf16.xpose.msra.mxu0 0
      %1547 = vmatprep.subr.bf16.mxu0 0
      %1548 = vmatpush1.bf16.xpose.msra.mxu0 0
      %1549 = vmatprep.subr.bf16.mxu0 0
      %1550 = vmatpush1.bf16.xpose.msra.mxu0 0
      %1551 = vmatprep.subr.bf16.mxu0 0
      %1552 = vmatpush1.bf16.xpose.msra.mxu0 0
      %1553 = vmatprep.subr.bf16.mxu0 0
      %1554 = vmatpush1.bf16.xpose.msra.mxu0 0
      %1555 = vmatprep.subr.bf16.mxu0 0
      %1556 = vmatpush1.bf16.xpose.msra.mxu0 0
      %1557 = vmatprep.subr.bf16.mxu0 0
      %1558 = vmatpush1.bf16.xpose.msra.mxu0 0
      %1559 = vmatprep.subr.bf16.mxu0 0
      %1560 = vmatpush1.bf16.xpose.msra.mxu0 0
      %1561 = vmatprep.subr.bf16.mxu0 0
      %1562 = vmatpush1.bf16.xpose.msra.mxu0 0
      %1563 = vmatprep.subr.bf16.mxu0 0
      %1564 = vmatpush1.bf16.xpose.msra.mxu0 0
      %1565 = vmatprep.subr.bf16.mxu0 0
      %1566 = vmatpush1.bf16.xpose.msra.mxu0 0
      %1567 = vmatprep.subr.bf16.mxu0 0
      %1568 = vmatpush1.bf16.xpose.msra.mxu0 0
      %1569 = vmatprep.mubr.bf16.mxu0 0
      %1570 = vmatmul.mubr.bf16.gmra.mrb[0].mxu0 %v1532
      %v1571 = vpop.f32.mrb[0].mxu0
      %v1572 = vadd.f32 0.0, %v1571
      %v1573 = vpop.f32.mrb[0].mxu0
      %v1574 = vpop.f32.mrb[0].mxu0
      %v1575 = vpop.f32.mrb[0].mxu0
      %1576 = vdwg.mxu0
      %v1577 = vsel %vm873, %v1572, -inf
      %1578 = vmax.xlane.f32.xlu0 %v1577
      %v1579 = vpop.xlane.xlu0 %1578
      %v1580 = vsub.f32 %v1572, %v1579
      %v1581 = vmul.f32 %v1580, 1.442695
      %v1582 = vpow.pop %v1581
      %v1583 = vsel %vm873, %v1582, 0.0
      %1584 = vadd.xlane.f32.xlu0 %v1583
      %v1585 = vpop.xlane.xlu0 %1584
      %v1586 = vpack.c.bf16 %v1582, %v1582
      %1588 = vrot.lane.b32.xlu0 %v1422, 120
      %v1589 = vpop.permute.xlu0 %1588
      %v1592 = vsel %vm873, %v1586, 0
      %1594 = vmatprep.subr.bf16.mxu0 0
      %1595 = vmatpush1.bf16.msra.mxu0 %v1589
      %1596 = vmatprep.subr.bf16.mxu0 0
      %1597 = vmatpush1.bf16.msra.mxu0 0
      %1598 = vmatprep.subr.bf16.mxu0 0
      %1599 = vmatpush1.bf16.msra.mxu0 0
      %1600 = vmatprep.subr.bf16.mxu0 0
      %1601 = vmatpush1.bf16.msra.mxu0 0
      %1602 = vmatprep.subr.bf16.mxu0 0
      %1603 = vmatpush1.bf16.msra.mxu0 0
      %1604 = vmatprep.subr.bf16.mxu0 0
      %1605 = vmatpush1.bf16.msra.mxu0 0
      %1606 = vmatprep.subr.bf16.mxu0 0
      %1607 = vmatpush1.bf16.msra.mxu0 0
      %1608 = vmatprep.subr.bf16.mxu0 0
      %1609 = vmatpush1.bf16.msra.mxu0 0
      %1610 = vmatprep.subr.bf16.mxu0 0
      %1611 = vmatpush1.bf16.msra.mxu0 0
      %1612 = vmatprep.subr.bf16.mxu0 0
      %1613 = vmatpush1.bf16.msra.mxu0 0
      %1614 = vmatprep.subr.bf16.mxu0 0
      %1615 = vmatpush1.bf16.msra.mxu0 0
      %1616 = vmatprep.subr.bf16.mxu0 0
      %1617 = vmatpush1.bf16.msra.mxu0 0
      %1618 = vmatprep.subr.bf16.mxu0 0
      %1619 = vmatpush1.bf16.msra.mxu0 0
      %1620 = vmatprep.subr.bf16.mxu0 0
      %1621 = vmatpush1.bf16.msra.mxu0 0
      %1622 = vmatprep.subr.bf16.mxu0 0
      %1623 = vmatpush1.bf16.msra.mxu0 0
      %1624 = vmatprep.subr.bf16.mxu0 0
      %1625 = vmatpush1.bf16.msra.mxu0 0
      %1626 = vmatprep.mubr.bf16.mxu0 0
      %1627 = vmatmul.mubr.bf16.gmra.mrb[0].mxu0 %v1592
      %v1628 = vpop.f32.mrb[0].mxu0
      %v1629 = vadd.f32 0.0, %v1628
      %v1630 = vpop.f32.mrb[0].mxu0
      %v1631 = vpop.f32.mrb[0].mxu0
      %v1632 = vpop.f32.mrb[0].mxu0
      %1633 = vdwg.mxu0
      %v1634 = vrcp.pop %v1585
      %v1635 = vmul.f32 %v1629, %v1634
      %v1636 = vpack.c.bf16 %v1635, %v1635
      %v1638 = vsel %vm920, %v1636, 0
      %v1641 = vsel %vm934, %v1418, 0
      %1643 = vmatprep.subr.bf16.mxu0 0
      %1644 = vmatpush1.bf16.msra.mxu0 %v1641
      %1645 = vmatprep.subr.bf16.mxu0 0
      %1646 = vmatpush1.bf16.msra.mxu0 0
      %1647 = vmatprep.subr.bf16.mxu0 0
      %1648 = vmatpush1.bf16.msra.mxu0 0
      %1649 = vmatprep.subr.bf16.mxu0 0
      %1650 = vmatpush1.bf16.msra.mxu0 0
      %1651 = vmatprep.subr.bf16.mxu0 0
      %1652 = vmatpush1.bf16.msra.mxu0 0
      %1653 = vmatprep.subr.bf16.mxu0 0
      %1654 = vmatpush1.bf16.msra.mxu0 0
      %1655 = vmatprep.subr.bf16.mxu0 0
      %1656 = vmatpush1.bf16.msra.mxu0 0
      %1657 = vmatprep.subr.bf16.mxu0 0
      %1658 = vmatpush1.bf16.msra.mxu0 0
      %1659 = vmatprep.subr.bf16.mxu0 0
      %1660 = vmatpush1.bf16.msra.mxu0 0
      %1661 = vmatprep.subr.bf16.mxu0 0
      %1662 = vmatpush1.bf16.msra.mxu0 0
      %1663 = vmatprep.subr.bf16.mxu0 0
      %1664 = vmatpush1.bf16.msra.mxu0 0
      %1665 = vmatprep.subr.bf16.mxu0 0
      %1666 = vmatpush1.bf16.msra.mxu0 0
      %1667 = vmatprep.subr.bf16.mxu0 0
      %1668 = vmatpush1.bf16.msra.mxu0 0
      %1669 = vmatprep.subr.bf16.mxu0 0
      %1670 = vmatpush1.bf16.msra.mxu0 0
      %1671 = vmatprep.subr.bf16.mxu0 0
      %1672 = vmatpush1.bf16.msra.mxu0 0
      %1673 = vmatprep.subr.bf16.mxu0 0
      %1674 = vmatpush1.bf16.msra.mxu0 0
      %1675 = vmatprep.mubr.bf16.mxu0 0
      %1676 = vmatmul.mubr.bf16.gmra.mrb[0].mxu0 %v1638
      %v1677 = vpop.f32.mrb[0].mxu0
      %v1678 = vadd.f32 0.0, %v1677
      %v1679 = vpop.f32.mrb[0].mxu0
      %v1680 = vpop.f32.mrb[0].mxu0
      %v1681 = vpop.f32.mrb[0].mxu0
      %1682 = vdwg.mxu0
      %v1684 = vsel %vm920, %v1524, 0
      %v1687 = vsel %vm934, %v1417, 0
      %1689 = vmatprep.subr.bf16.mxu0 0
      %1690 = vmatpush1.bf16.msra.mxu0 %v1687
      %1691 = vmatprep.subr.bf16.mxu0 0
      %1692 = vmatpush1.bf16.msra.mxu0 0
      %1693 = vmatprep.subr.bf16.mxu0 0
      %1694 = vmatpush1.bf16.msra.mxu0 0
      %1695 = vmatprep.subr.bf16.mxu0 0
      %1696 = vmatpush1.bf16.msra.mxu0 0
      %1697 = vmatprep.subr.bf16.mxu0 0
      %1698 = vmatpush1.bf16.msra.mxu0 0
      %1699 = vmatprep.subr.bf16.mxu0 0
      %1700 = vmatpush1.bf16.msra.mxu0 0
      %1701 = vmatprep.subr.bf16.mxu0 0
      %1702 = vmatpush1.bf16.msra.mxu0 0
      %1703 = vmatprep.subr.bf16.mxu0 0
      %1704 = vmatpush1.bf16.msra.mxu0 0
      %1705 = vmatprep.subr.bf16.mxu0 0
      %1706 = vmatpush1.bf16.msra.mxu0 0
      %1707 = vmatprep.subr.bf16.mxu0 0
      %1708 = vmatpush1.bf16.msra.mxu0 0
      %1709 = vmatprep.subr.bf16.mxu0 0
      %1710 = vmatpush1.bf16.msra.mxu0 0
      %1711 = vmatprep.subr.bf16.mxu0 0
      %1712 = vmatpush1.bf16.msra.mxu0 0
      %1713 = vmatprep.subr.bf16.mxu0 0
      %1714 = vmatpush1.bf16.msra.mxu0 0
      %1715 = vmatprep.subr.bf16.mxu0 0
      %1716 = vmatpush1.bf16.msra.mxu0 0
      %1717 = vmatprep.subr.bf16.mxu0 0
      %1718 = vmatpush1.bf16.msra.mxu0 0
      %1719 = vmatprep.subr.bf16.mxu0 0
      %1720 = vmatpush1.bf16.msra.mxu0 0
      %1721 = vmatprep.mubr.bf16.mxu0 0
      %1722 = vmatmul.mubr.bf16.gmra.mrb[0].mxu0 %v1684
      %v1723 = vpop.f32.mrb[0].mxu0
      %v1724 = vadd.f32 %v1678, %v1723
      %v1725 = vpop.f32.mrb[0].mxu0
      %v1726 = vpop.f32.mrb[0].mxu0
      %v1727 = vpop.f32.mrb[0].mxu0
      %1728 = vdwg.mxu0
      %v1730 = vlaneseq
      %v1731 = vshrl.u32 %v1730, 7
      %v1732 = vsub.s32 0, %v1731
      %v1733 = vrot.slane %v1419, %v1732
      %v1735 = vadd.f32 %v1724, %v1733
      %v1736 = vadd.f32 %v1735, %v1229
      %v1737 = vld [vmem:[%s14] sm:$0x1]
      %v1738 = vld [vmem:[%s15] sm:$0x1]
      %v1739 = vsel %vm767, %v1736, 0.0
      %1740 = vadd.xlane.f32.xlu0 %v1739
      %v1741 = vpop.xlane.xlu0 %1740
      %v1742 = vmul.f32 %v1741, %v1205
      %v1743 = vsub.f32 %v1736, %v1742
      %v1744 = vmul.f32 %v1743, %v1743
      %v1745 = vsel %vm767, %v1744, 0.0
      %1746 = vadd.xlane.f32.xlu0 %v1745
      %v1747 = vpop.xlane.xlu0 %1746
      %v1748 = vmul.f32 %v1747, %v1205
      %v1749 = vadd.f32 %v1748, 1e-05
      %v1750 = vrsqrt.pop %v1749
      %v1751 = vmul.f32 %v1743, %v1750
      %v1753 = vlaneseq
      %v1754 = vshrl.u32 %v1753, 7
      %v1755 = vsub.s32 0, %v1754
      %v1756 = vrot.slane %v1737, %v1755
      %v1758 = vmul.f32 %v1751, %v1756
      %v1760 = vlaneseq
      %v1761 = vshrl.u32 %v1760, 7
      %v1762 = vsub.s32 0, %v1761
      %v1763 = vrot.slane %v1738, %v1762
      %v1765 = vadd.f32 %v1758, %v1763
      %v1766 = vpack.c.bf16 %v1765, %v1765
      %v1767 = vld [vmem:[%s16] sm:$0xf]
      %v1768 = vld [vmem:[%s16 + $0x4] sm:$0xf]
      %v1769 = vld [vmem:[%s16 + $0x8] sm:$0xf]
      %v1770 = vld [vmem:[%s16 + $0xc] sm:$0xf]
      %v1771 = vld [vmem:[%s17] sm:$0x1]
      %v1773 = vlaneseq
      %v1774 = vshrl.u32 %v1773, 7
      %v1775 = vsub.s32 0, %v1774
      %v1776 = vrot.slane %v1771, %v1775
      %v1782 = vunpack.c.l.b16 %v1767
      %v1783 = vunpack.c.l.b16 %v1768
      %v1784 = vunpack.c.l.b16 %v1769
      %v1785 = vunpack.c.l.b16 %v1770
      %v1786 = vpack.c.b16 %v1783, %v1782
      %v1787 = vpack.c.b16 %v1785, %v1784
      %v1791 = vsel %vm767, %v1766, 0
      %1793 = vmatprep.subr.bf16.mxu0 0
      %1794 = vmatpush1.bf16.msra.mxu0 %v1786
      %1795 = vmatprep.subr.bf16.mxu0 0
      %1796 = vmatpush1.bf16.msra.mxu0 %v1787
      %1797 = vmatprep.subr.bf16.mxu0 0
      %1798 = vmatpush1.bf16.msra.mxu0 0
      %1799 = vmatprep.subr.bf16.mxu0 0
      %1800 = vmatpush1.bf16.msra.mxu0 0
      %1801 = vmatprep.subr.bf16.mxu0 0
      %1802 = vmatpush1.bf16.msra.mxu0 0
      %1803 = vmatprep.subr.bf16.mxu0 0
      %1804 = vmatpush1.bf16.msra.mxu0 0
      %1805 = vmatprep.subr.bf16.mxu0 0
      %1806 = vmatpush1.bf16.msra.mxu0 0
      %1807 = vmatprep.subr.bf16.mxu0 0
      %1808 = vmatpush1.bf16.msra.mxu0 0
      %1809 = vmatprep.subr.bf16.mxu0 0
      %1810 = vmatpush1.bf16.msra.mxu0 0
      %1811 = vmatprep.subr.bf16.mxu0 0
      %1812 = vmatpush1.bf16.msra.mxu0 0
      %1813 = vmatprep.subr.bf16.mxu0 0
      %1814 = vmatpush1.bf16.msra.mxu0 0
      %1815 = vmatprep.subr.bf16.mxu0 0
      %1816 = vmatpush1.bf16.msra.mxu0 0
      %1817 = vmatprep.subr.bf16.mxu0 0
      %1818 = vmatpush1.bf16.msra.mxu0 0
      %1819 = vmatprep.subr.bf16.mxu0 0
      %1820 = vmatpush1.bf16.msra.mxu0 0
      %1821 = vmatprep.subr.bf16.mxu0 0
      %1822 = vmatpush1.bf16.msra.mxu0 0
      %1823 = vmatprep.subr.bf16.mxu0 0
      %1824 = vmatpush1.bf16.msra.mxu0 0
      %1825 = vmatprep.mubr.bf16.mxu0 0
      %1826 = vmatmul.mubr.bf16.gmra.mrb[0].mxu0 %v1791
      %v1827 = vpop.f32.mrb[0].mxu0
      %v1828 = vadd.f32 %v1776, %v1827
      %v1829 = vpop.f32.mrb[0].mxu0
      %v1830 = vpop.f32.mrb[0].mxu0
      %v1831 = vpop.f32.mrb[0].mxu0
      %1832 = vdwg.mxu0
      %v1833 = vmax.f32 %v1828, 0.0
      %v1834 = vpack.c.bf16 %v1833, %v1833
      %v1835 = vld [vmem:[%s18] sm:$0xf]
      %v1836 = vld [vmem:[%s18 + $0x4] sm:$0xf]
      %v1837 = vld [vmem:[%s18 + $0x8] sm:$0xf]
      %v1838 = vld [vmem:[%s18 + $0xc] sm:$0xf]
      %v1839 = vld [vmem:[%s18 + $0x10] sm:$0xf]
      %v1840 = vld [vmem:[%s18 + $0x14] sm:$0xf]
      %v1841 = vld [vmem:[%s18 + $0x18] sm:$0xf]
      %v1842 = vld [vmem:[%s18 + $0x1c] sm:$0xf]
      %v1843 = vld [vmem:[%s19] sm:$0x1]
      %v1845 = vlaneseq
      %v1846 = vshrl.u32 %v1845, 7
      %v1847 = vsub.s32 0, %v1846
      %v1848 = vrot.slane %v1843, %v1847
      %v1858 = vunpack.c.l.b16 %v1835
      %v1859 = vunpack.c.l.b16 %v1836
      %v1860 = vunpack.c.l.b16 %v1837
      %v1861 = vunpack.c.l.b16 %v1838
      %v1862 = vunpack.c.l.b16 %v1839
      %v1863 = vunpack.c.l.b16 %v1840
      %v1864 = vunpack.c.l.b16 %v1841
      %v1865 = vunpack.c.l.b16 %v1842
      %v1866 = vpack.c.b16 %v1859, %v1858
      %v1867 = vpack.c.b16 %v1861, %v1860
      %v1868 = vpack.c.b16 %v1863, %v1862
      %v1869 = vpack.c.b16 %v1865, %v1864
      %vm1874 = vcmask 523264
      %v1876 = vsel %vm1874, %v1834, 0
      %1878 = vmatprep.subr.bf16.mxu0 0
      %1879 = vmatpush1.bf16.msra.mxu0 %v1866
      %1880 = vmatprep.subr.bf16.mxu0 0
      %1881 = vmatpush1.bf16.msra.mxu0 %v1867
      %1882 = vmatprep.subr.bf16.mxu0 0
      %1883 = vmatpush1.bf16.msra.mxu0 %v1868
      %1884 = vmatprep.subr.bf16.mxu0 0
      %1885 = vmatpush1.bf16.msra.mxu0 %v1869
      %1886 = vmatprep.subr.bf16.mxu0 0
      %1887 = vmatpush1.bf16.msra.mxu0 0
      %1888 = vmatprep.subr.bf16.mxu0 0
      %1889 = vmatpush1.bf16.msra.mxu0 0
      %1890 = vmatprep.subr.bf16.mxu0 0
      %1891 = vmatpush1.bf16.msra.mxu0 0
      %1892 = vmatprep.subr.bf16.mxu0 0
      %1893 = vmatpush1.bf16.msra.mxu0 0
      %1894 = vmatprep.subr.bf16.mxu0 0
      %1895 = vmatpush1.bf16.msra.mxu0 0
      %1896 = vmatprep.subr.bf16.mxu0 0
      %1897 = vmatpush1.bf16.msra.mxu0 0
      %1898 = vmatprep.subr.bf16.mxu0 0
      %1899 = vmatpush1.bf16.msra.mxu0 0
      %1900 = vmatprep.subr.bf16.mxu0 0
      %1901 = vmatpush1.bf16.msra.mxu0 0
      %1902 = vmatprep.subr.bf16.mxu0 0
      %1903 = vmatpush1.bf16.msra.mxu0 0
      %1904 = vmatprep.subr.bf16.mxu0 0
      %1905 = vmatpush1.bf16.msra.mxu0 0
      %1906 = vmatprep.subr.bf16.mxu0 0
      %1907 = vmatpush1.bf16.msra.mxu0 0
      %1908 = vmatprep.subr.bf16.mxu0 0
      %1909 = vmatpush1.bf16.msra.mxu0 0
      %1910 = vmatprep.mubr.bf16.mxu0 0
      %1911 = vmatmul.mubr.bf16.gmra.mrb[0].mxu0 %v1876
      %v1912 = vpop.f32.mrb[0].mxu0
      %v1913 = vadd.f32 %v1848, %v1912
      %v1914 = vpop.f32.mrb[0].mxu0
      %v1915 = vpop.f32.mrb[0].mxu0
      %v1916 = vpop.f32.mrb[0].mxu0
      %1917 = vdwg.mxu0
      %v1918 = vadd.f32 %v1913, %v1765
      %v1919 = vld [vmem:[%s20] sm:$0x1]
      %v1920 = vld [vmem:[%s21] sm:$0x1]
      %v1921 = vsel %vm767, %v1918, 0.0
      %1922 = vadd.xlane.f32.xlu0 %v1921
      %v1923 = vpop.xlane.xlu0 %1922
      %v1924 = vmul.f32 %v1923, %v1205
      %v1925 = vsub.f32 %v1918, %v1924
      %v1926 = vmul.f32 %v1925, %v1925
      %v1927 = vsel %vm767, %v1926, 0.0
      %1928 = vadd.xlane.f32.xlu0 %v1927
      %v1929 = vpop.xlane.xlu0 %1928
      %v1930 = vmul.f32 %v1929, %v1205
      %v1931 = vadd.f32 %v1930, 1e-05
      %v1932 = vrsqrt.pop %v1931
      %v1933 = vmul.f32 %v1925, %v1932
      %v1935 = vlaneseq
      %v1936 = vshrl.u32 %v1935, 7
      %v1937 = vsub.s32 0, %v1936
      %v1938 = vrot.slane %v1919, %v1937
      %v1940 = vmul.f32 %v1933, %v1938
      %v1942 = vlaneseq
      %v1943 = vshrl.u32 %v1942, 7
      %v1944 = vsub.s32 0, %v1943
      %v1945 = vrot.slane %v1920, %v1944
      %v1947 = vadd.f32 %v1940, %v1945
      %v1948 = vpack.c.bf16 %v1947, %v1947
      %vm1949 = vcmask 257024
      %1950 = vst.msk [vmem:[%s735] sm:$0xf] %vm1949, %v1948
      %p1951 = scmp.lt.s32.totalorder %s33, 1
      %s1952 = scalar_select %p1951, %s33, 1
      %s1953 = smul.addr %s1952, 4
      %s1954 = scalar_lea.vmem %s22, %s1953
      // Predicated region
      $region109: #{two_way_attention_block.2} parent=107 // pred_check
        %p1955 = pneg %p533
      $region110: #{two_way_attention_block.2} parent=107 // pred_check_branch
        %1957 = sbr.rel (%p1955) target = $region112
      $region111: #{two_way_attention_block.2} parent=107 // pred_region
        _
      $region112: #{two_way_attention_block.2} parent=107 // pred_fallthru
        _
    $region108: #{two_way_attention_block.2} parent=5 // pred_fallthru
      _
    %p1958 = scmp.le.s32.totalorder 2, %s28
    // Predicated region
    $region113: #{two_way_attention_block.2} parent=5 // pred_check
      %p1959 = pneg %p1958
    $region114: #{two_way_attention_block.2} parent=5 // pred_check_branch
      %1961 = sbr.rel (%p1959) target = $region116
    $region115: #{two_way_attention_block.2} parent=5 // pred_region
      %s1962 = ssub.s32 %s28, 2
      // Predicated region
      $region117: #{two_way_attention_block.2} parent=115 // pred_check
        %p1963 = pneg %p539
      $region118: #{two_way_attention_block.2} parent=115 // pred_check_branch
        %1965 = sbr.rel (%p1963) target = $region120
      $region119: #{two_way_attention_block.2} parent=115 // pred_region
        %p1966 = scmp.lt.s32.totalorder %s34, 1
        %s1967 = scalar_select %p1966, %s34, 1
        %s1968 = smul.addr %s1967, 4
        %s1969 = scalar_lea.vmem %s22, %s1968
      $region120: #{two_way_attention_block.2} parent=115 // pred_fallthru
        _
    $region116: #{two_way_attention_block.2} parent=5 // pred_fallthru
      _
  $region6: #{two_way_attention_block.2} parent=0 // loop_footer
    %s32 = sadd.s32 1, %s28
  $region7: #{two_way_attention_block.2} parent=0 // loop_footer_branch
    %27 = sbr.rel target = $region3
  $region8: #{two_way_attention_block.2} parent=0 // loop_exit
    _

</llo_original>
